<compile_context>
chip_gen: v5e
topology: v5e:2x2
jax: 0.10.0
libtpu: 0.0.40
codegen_flags: <defaults>
</compile_context>

<pallas_src>
import jax
import jax.numpy as jnp
from jax import lax
from jax.experimental import pallas as pl
from jax.experimental.pallas import tpu as pltpu

# ---- config (synthetic, consistent with the module's __init__) ----
NUM_MB = 4             # micro-batches streamed per pallas_call (grid size)
B = 16                 # per-micro-batch batch (acts as the attention "sequence" — see note)
IMG_DIM = 128          # config.img_dimension
EMR_DIM = 128          # config.emr_dimension (emrs is unused by forward; kept for signature parity)
FUSION = 512           # config.fusion_hidden_dimension (must be 512: classifier is Linear(512,256))
NUM_HEADS = 4          # config.num_heads
HEAD_DIM = FUSION // NUM_HEADS
MID = 256              # hidden of classifier
NUM_LABELS = 3         # config.num_labels
PAD_LABELS = 128       # classifier head lane-padded to one full vreg lane width


def imgwithkg_kernel(
    # per-step activations (micro-batch dim squeezed by BlockSpec)
    tensors_ref, kgs_ref,
    # modality projection (in, out) bf16 + bias (1, out) f32
    wimg_ref, bimg_ref,
    # attention: q (scale folded), fused kv, out projection
    wq_ref, bq_ref, wkv_ref, bkv_ref, wo_ref, bo_ref,
    # classifier: Linear(512,256) -> Tanh -> Linear(256, 128-padded) -> LeakyReLU(0.01)
    wc1_ref, bc1_ref, wc2_ref, bc2_ref,
    # output: lane-dense (B, 128) prob_logits
    probs_ref,
):
    f32 = jnp.float32
    bf16 = jnp.bfloat16
    b = kgs_ref.shape[0]  # per-step batch / attention sequence length

    x_img = tensors_ref[...].astype(bf16)                                 # (b, IMG_DIM)
    kgs = kgs_ref[...].astype(bf16)                                       # (b, FUSION)

    # modality projection
    aligned_img = (jnp.dot(x_img, wimg_ref[...], preferred_element_type=f32)
                   + bimg_ref[...]).astype(bf16)                          # (b, FUSION)

    # fuse_attention_img(query=kgs, key=aligned_img, value=aligned_img)
    # 1/sqrt(head_dim) is pre-folded into wq / bq at prepare_params time.
    # Cast to bf16 so the per-head scores matmuls run as native bf16 MXU ops.
    q = (jnp.dot(kgs, wq_ref[...], preferred_element_type=f32)
         + bq_ref[...]).astype(bf16)                                      # (b, FUSION)
    kv = (jnp.dot(aligned_img, wkv_ref[...], preferred_element_type=f32)
          + bkv_ref[...]).astype(bf16)                                    # (b, 2*FUSION)
    k = kv[:, :FUSION]
    v = kv[:, FUSION:]

    # per-head scores from lane-aligned 128-slices, stacked along sublanes -> ONE softmax
    scores = jnp.concatenate(
        [lax.dot_general(q[:, h * HEAD_DIM:(h + 1) * HEAD_DIM],
                         k[:, h * HEAD_DIM:(h + 1) * HEAD_DIM],
                         (((1,), (1,)), ((), ())),
                         preferred_element_type=f32)
         for h in range(NUM_HEADS)],
        axis=0)                                                           # (NUM_HEADS*b, b)
    scores = scores - jnp.max(scores, axis=-1, keepdims=True)
    e = jnp.exp(scores)
    inv_denom = pl.reciprocal(jnp.sum(e, axis=-1, keepdims=True), approx=True)
    p = (e * inv_denom).astype(bf16)                                      # (NUM_HEADS*b, b)

    # per-head context, lane-concat -> single full-K (512) output projection matmul
    ctx = jnp.concatenate(
        [jnp.dot(p[h * b:(h + 1) * b, :],
                 v[:, h * HEAD_DIM:(h + 1) * HEAD_DIM],
                 preferred_element_type=f32)
         for h in range(NUM_HEADS)],
        axis=-1).astype(bf16)                                             # (b, FUSION)
    focused_img = (jnp.dot(ctx, wo_ref[...], preferred_element_type=f32)
                   + bo_ref[...]).astype(bf16)                            # (b, FUSION)

    # classifier (dropout == identity at inference)
    h1 = jnp.tanh(jnp.dot(focused_img, wc1_ref[...], preferred_element_type=f32)
                  + bc1_ref[...])                                         # (b, MID)
    logits = jnp.dot(h1.astype(bf16), wc2_ref[...],
                     preferred_element_type=f32) + bc2_ref[...]           # (b, PAD_LABELS)
    probs_ref[...] = jnp.where(logits > 0, logits, 0.01 * logits)         # LeakyReLU(0.01)


def init_params(key):
    """Deterministic parameter init in PyTorch (out, in) convention, f32."""
    ks = jax.random.split(key, 10)
    s = 0.02
    return {
        "w_img": jax.random.normal(ks[0], (FUSION, IMG_DIM), jnp.float32) * s,
        "b_img": jax.random.normal(ks[1], (FUSION,), jnp.float32) * s,
        # nn.MultiheadAttention packed in_proj (3E, E) / (3E,), out_proj (E, E) / (E,)
        "in_proj_w": jax.random.normal(ks[2], (3 * FUSION, FUSION), jnp.float32) * s,
        "in_proj_b": jax.random.normal(ks[3], (3 * FUSION,), jnp.float32) * s,
        "out_proj_w": jax.random.normal(ks[4], (FUSION, FUSION), jnp.float32) * s,
        "out_proj_b": jax.random.normal(ks[5], (FUSION,), jnp.float32) * s,
        # classifier: Linear(512,256), Linear(256, NUM_LABELS)
        "c_w1": jax.random.normal(ks[6], (MID, FUSION), jnp.float32) * s,
        "c_b1": jax.random.normal(ks[7], (MID,), jnp.float32) * s,
        "c_w2": jax.random.normal(ks[8], (NUM_LABELS, MID), jnp.float32) * s,
        "c_b2": jax.random.normal(ks[9], (NUM_LABELS,), jnp.float32) * s,
    }


def prepare_params(p):
    """ONE-TIME conversion to kernel-ready layout.

    (in, out) transposes, bf16 weights, fused K/V projection, attention scale folded into
    Wq/bq, classifier head padded to 128 lanes. Done once, outside the per-call jit.
    """
    f32 = jnp.float32
    bf16 = jnp.bfloat16
    scale = 1.0 / (HEAD_DIM ** 0.5)

    wq = p["in_proj_w"][0 * FUSION:1 * FUSION]
    wk = p["in_proj_w"][1 * FUSION:2 * FUSION]
    wv = p["in_proj_w"][2 * FUSION:3 * FUSION]
    bq = p["in_proj_b"][0 * FUSION:1 * FUSION]
    bk = p["in_proj_b"][1 * FUSION:2 * FUSION]
    bv = p["in_proj_b"][2 * FUSION:3 * FUSION]

    wc2_t = p["c_w2"].T                                                   # (MID, NUM_LABELS)
    wc2_pad = jnp.zeros((MID, PAD_LABELS), f32).at[:, :NUM_LABELS].set(wc2_t)
    bc2_pad = jnp.zeros((PAD_LABELS,), f32).at[:NUM_LABELS].set(p["c_b2"])

    return {
        "w_img": p["w_img"].T.astype(bf16),
        "b_img": p["b_img"][None, :].astype(f32),
        "w_q": (wq.T * scale).astype(bf16),
        "b_q": (bq * scale)[None, :].astype(f32),
        "w_kv": jnp.concatenate([wk.T, wv.T], axis=1).astype(bf16),       # (FUSION, 2*FUSION)
        "b_kv": jnp.concatenate([bk, bv])[None, :].astype(f32),
        "w_o": p["out_proj_w"].T.astype(bf16),
        "b_o": p["out_proj_b"][None, :].astype(f32),
        "w_c1": p["c_w1"].T.astype(bf16),
        "b_c1": p["c_b1"][None, :].astype(f32),
        "w_c2": wc2_pad.astype(bf16),
        "b_c2": bc2_pad[None, :].astype(f32),
    }


_WEIGHT_KEYS = ("w_img", "b_img", "w_q", "b_q", "w_kv", "b_kv",
                "w_o", "b_o", "w_c1", "b_c1", "w_c2", "b_c2")


def _weight_spec(shape):
    n = len(shape)
    return pl.BlockSpec(shape, lambda i, _n=n: (0,) * _n)   # constant index -> VMEM-resident


def _cost_estimate(num_mb, b):
    per_row_macs = (IMG_DIM * FUSION + FUSION * FUSION + FUSION * 2 * FUSION
                    + 2 * NUM_HEADS * b * HEAD_DIM + FUSION * FUSION
                    + FUSION * MID + MID * PAD_LABELS)
    flops = 2 * num_mb * b * per_row_macs
    transcendentals = num_mb * (NUM_HEADS * b * b + b * MID)   # exp + tanh
    weight_bytes = 2 * (IMG_DIM * FUSION + FUSION * FUSION + FUSION * 2 * FUSION
                        + FUSION * FUSION + FUSION * MID + MID * PAD_LABELS)
    act_bytes = num_mb * b * (IMG_DIM + FUSION + PAD_LABELS) * 4
    return pl.CostEstimate(flops=flops, transcendentals=transcendentals,
                           bytes_accessed=weight_bytes + act_bytes)


@jax.jit
def imgwithkg_forward(kp, tensors, emrs, kgs):
    """Batched inference: each micro-batch [i] is one independent ImgwithKG.forward call.

    tensors: (num_mb, B, IMG_DIM), kgs: (num_mb, B, FUSION). Returns
    (pred_labels (num_mb, B) int32, prob_logits[:, :, 1] (num_mb, B) f32).
    """
    del emrs  # emrs is an argument of ImgwithKG.forward but unused by its body

    num_mb, b, _ = tensors.shape
    weights = [kp[k] for k in _WEIGHT_KEYS]

    in_specs = (
        [pl.BlockSpec((None, b, IMG_DIM), lambda i: (i, 0, 0)),   # stream activations
         pl.BlockSpec((None, b, FUSION), lambda i: (i, 0, 0))]
        + [_weight_spec(w.shape) for w in weights]                 # weights resident in VMEM
    )
    out_spec = pl.BlockSpec((None, b, PAD_LABELS), lambda i: (i, 0, 0))

    probs = pl.pallas_call(
        imgwithkg_kernel,
        out_shape=jax.ShapeDtypeStruct((num_mb, b, PAD_LABELS), jnp.float32),
        grid_spec=pltpu.PrefetchScalarGridSpec(
            num_scalar_prefetch=0,
            grid=(num_mb,),
            in_specs=in_specs,
            out_specs=out_spec,
        ),
        compiler_params=pltpu.CompilerParams(
            dimension_semantics=("parallel",),      # v7x: shard micro-batches over both TCs
            vmem_limit_bytes=16 << 20,              # footprint ~5 MB incl. double buffers
        ),
        cost_estimate=_cost_estimate(num_mb, b),
    )(tensors, kgs, *weights)

    # argmax over the real label lanes in the wrapper (padded lanes never touched)
    pred_labels = jnp.argmax(probs[..., :NUM_LABELS], axis=-1).astype(jnp.int32)
    return pred_labels, probs[..., 1]


def reference_forward(p, tensors, kgs):
    """Pure-JAX f32 reference of one ImgwithKG.forward call (labels=None)."""
    scale = 1.0 / (HEAD_DIM ** 0.5)
    aligned = tensors @ p["w_img"].T + p["b_img"]
    wq, wk, wv = jnp.split(p["in_proj_w"], 3, axis=0)
    bq, bk, bv = jnp.split(p["in_proj_b"], 3)
    q = kgs @ wq.T + bq
    k = aligned @ wk.T + bk
    v = aligned @ wv.T + bv
    bsz = tensors.shape[0]
    qh = q.reshape(bsz, NUM_HEADS, HEAD_DIM).transpose(1, 0, 2) * scale
    kh = k.reshape(bsz, NUM_HEADS, HEAD_DIM).transpose(1, 0, 2)
    vh = v.reshape(bsz, NUM_HEADS, HEAD_DIM).transpose(1, 0, 2)
    s = jnp.einsum("hqd,hkd->hqk", qh, kh)
    a = jax.nn.softmax(s, axis=-1)
    ctx = jnp.einsum("hqk,hkd->hqd", a, vh).transpose(1, 0, 2).reshape(bsz, FUSION)
    focused = ctx @ p["out_proj_w"].T + p["out_proj_b"]
    h1 = jnp.tanh(focused @ p["c_w1"].T + p["c_b1"])
    logits = h1 @ p["c_w2"].T + p["c_b2"]
    logits = jnp.where(logits > 0, logits, 0.01 * logits)
    return jnp.argmax(logits, axis=1), logits[:, 1]


if __name__ == "__main__":
    key = jax.random.PRNGKey(0)
    k_param, k_img, k_emr, k_kg = jax.random.split(key, 4)

    params = init_params(k_param)          # PyTorch-layout f32
    kparams = prepare_params(params)       # one-time kernel layout (bf16, fused, padded)

    tensors = jax.random.normal(k_img, (NUM_MB, B, IMG_DIM), jnp.float32)
    emrs = jax.random.normal(k_emr, (NUM_MB, B, EMR_DIM), jnp.float32)   # unused by forward
    kgs = jax.random.normal(k_kg, (NUM_MB, B, FUSION), jnp.float32)      # MHA query, dim = embed

    pred_labels, prob_class1 = imgwithkg_forward(kparams, tensors, emrs, kgs)
    jax.block_until_ready((pred_labels, prob_class1))
    assert pred_labels.shape == (NUM_MB, B) and prob_class1.shape == (NUM_MB, B)

    # loose numeric check vs f32 reference (bf16 weights/activations + approx reciprocal drift)
    _, ref_p1 = jax.vmap(lambda t, g: reference_forward(params, t, g))(tensors, kgs)
    assert jnp.allclose(prob_class1, ref_p1, atol=3e-2), float(jnp.max(jnp.abs(prob_class1 - ref_p1)))

    print("KERNEL_OK")
</pallas_src>

<mosaic_0001>
module attributes {stable_mosaic.version = 11 : i64} {
  func.func @imgwithkg_kernel(%arg0: i32, %arg1: memref<1x16x128xf32, #tpu.memory_space<vmem>>, %arg2: memref<1x16x512xf32, #tpu.memory_space<vmem>>, %arg3: memref<128x512xbf16, #tpu.memory_space<vmem>>, %arg4: memref<1x512xf32, #tpu.memory_space<vmem>>, %arg5: memref<512x512xbf16, #tpu.memory_space<vmem>>, %arg6: memref<1x512xf32, #tpu.memory_space<vmem>>, %arg7: memref<512x1024xbf16, #tpu.memory_space<vmem>>, %arg8: memref<1x1024xf32, #tpu.memory_space<vmem>>, %arg9: memref<512x512xbf16, #tpu.memory_space<vmem>>, %arg10: memref<1x512xf32, #tpu.memory_space<vmem>>, %arg11: memref<512x256xbf16, #tpu.memory_space<vmem>>, %arg12: memref<1x256xf32, #tpu.memory_space<vmem>>, %arg13: memref<256x128xbf16, #tpu.memory_space<vmem>>, %arg14: memref<1x128xf32, #tpu.memory_space<vmem>>, %arg15: memref<1x16x128xf32, #tpu.memory_space<vmem>>) attributes {dimension_semantics = [#tpu.dimension_semantics<parallel>], iteration_bounds = array<i64: 4>, scalar_prefetch = 0 : i64, scratch_operands = 0 : i64, tpu.core_type = #tpu.core_type<tc>, window_params = [{transform_indices = @transform_0, window_bounds = array<i64: 1, 16, 128>}, {transform_indices = @transform_1, window_bounds = array<i64: 1, 16, 512>}, {pipeline_mode = #tpu.pipeline_mode<synchronous>, transform_indices = @transform_2, window_bounds = array<i64: 128, 512>}, {pipeline_mode = #tpu.pipeline_mode<synchronous>, transform_indices = @transform_3, window_bounds = array<i64: 1, 512>}, {pipeline_mode = #tpu.pipeline_mode<synchronous>, transform_indices = @transform_4, window_bounds = array<i64: 512, 512>}, {pipeline_mode = #tpu.pipeline_mode<synchronous>, transform_indices = @transform_5, window_bounds = array<i64: 1, 512>}, {pipeline_mode = #tpu.pipeline_mode<synchronous>, transform_indices = @transform_6, window_bounds = array<i64: 512, 1024>}, {pipeline_mode = #tpu.pipeline_mode<synchronous>, transform_indices = @transform_7, window_bounds = array<i64: 1, 1024>}, {pipeline_mode = #tpu.pipeline_mode<synchronous>, transform_indices = @transform_8, window_bounds = array<i64: 512, 512>}, {pipeline_mode = #tpu.pipeline_mode<synchronous>, transform_indices = @transform_9, window_bounds = array<i64: 1, 512>}, {pipeline_mode = #tpu.pipeline_mode<synchronous>, transform_indices = @transform_10, window_bounds = array<i64: 512, 256>}, {pipeline_mode = #tpu.pipeline_mode<synchronous>, transform_indices = @transform_11, window_bounds = array<i64: 1, 256>}, {pipeline_mode = #tpu.pipeline_mode<synchronous>, transform_indices = @transform_12, window_bounds = array<i64: 256, 128>}, {pipeline_mode = #tpu.pipeline_mode<synchronous>, transform_indices = @transform_13, window_bounds = array<i64: 1, 128>}, {transform_indices = @transform_14, window_bounds = array<i64: 1, 16, 128>}]} {
    %c0 = arith.constant 0 : index
    %c0_0 = arith.constant 0 : index
    %c0_1 = arith.constant 0 : index
    %0 = vector.load %arg1[%c0, %c0_0, %c0_1] : memref<1x16x128xf32, #tpu.memory_space<vmem>>, vector<1x16x128xf32>
    %1 = vector.shape_cast %0 : vector<1x16x128xf32> to vector<16x128xf32>
    %2 = arith.truncf %1 : vector<16x128xf32> to vector<16x128xbf16>
    %c0_2 = arith.constant 0 : index
    %c0_3 = arith.constant 0 : index
    %c0_4 = arith.constant 0 : index
    %3 = vector.load %arg2[%c0_2, %c0_3, %c0_4] : memref<1x16x512xf32, #tpu.memory_space<vmem>>, vector<1x16x512xf32>
    %4 = vector.shape_cast %3 : vector<1x16x512xf32> to vector<16x512xf32>
    %5 = arith.truncf %4 : vector<16x512xf32> to vector<16x512xbf16>
    %c0_5 = arith.constant 0 : index
    %c0_6 = arith.constant 0 : index
    %6 = vector.load %arg3[%c0_5, %c0_6] : memref<128x512xbf16, #tpu.memory_space<vmem>>, vector<128x512xbf16>
    %cst = arith.constant dense<0.000000e+00> : vector<16x512xf32>
    %7 = tpu.matmul %2, %6, %cst {dimension_numbers = #tpu.dot_dimension_numbers<[1], [0], [0], [1], [0, 0, 1, 1], [], []>} : vector<16x128xbf16>, vector<128x512xbf16>, vector<16x512xf32> -> vector<16x512xf32>
    %c0_7 = arith.constant 0 : index
    %c0_8 = arith.constant 0 : index
    %8 = vector.load %arg4[%c0_7, %c0_8] : memref<1x512xf32, #tpu.memory_space<vmem>>, vector<1x512xf32>
    %9 = vector.broadcast %8 : vector<1x512xf32> to vector<16x512xf32>
    %10 = arith.addf %7, %9 : vector<16x512xf32>
    %11 = arith.truncf %10 : vector<16x512xf32> to vector<16x512xbf16>
    %c0_9 = arith.constant 0 : index
    %c0_10 = arith.constant 0 : index
    %12 = vector.load %arg5[%c0_9, %c0_10] : memref<512x512xbf16, #tpu.memory_space<vmem>>, vector<512x512xbf16>
    %cst_11 = arith.constant dense<0.000000e+00> : vector<16x512xf32>
    %13 = tpu.matmul %5, %12, %cst_11 {dimension_numbers = #tpu.dot_dimension_numbers<[1], [0], [0], [1], [0, 0, 1, 1], [], []>} : vector<16x512xbf16>, vector<512x512xbf16>, vector<16x512xf32> -> vector<16x512xf32>
    %c0_12 = arith.constant 0 : index
    %c0_13 = arith.constant 0 : index
    %14 = vector.load %arg6[%c0_12, %c0_13] : memref<1x512xf32, #tpu.memory_space<vmem>>, vector<1x512xf32>
    %15 = vector.broadcast %14 : vector<1x512xf32> to vector<16x512xf32>
    %16 = arith.addf %13, %15 : vector<16x512xf32>
    %17 = arith.truncf %16 : vector<16x512xf32> to vector<16x512xbf16>
    %c0_14 = arith.constant 0 : index
    %c0_15 = arith.constant 0 : index
    %18 = vector.load %arg7[%c0_14, %c0_15] : memref<512x1024xbf16, #tpu.memory_space<vmem>>, vector<512x1024xbf16>
    %cst_16 = arith.constant dense<0.000000e+00> : vector<16x1024xf32>
    %19 = tpu.matmul %11, %18, %cst_16 {dimension_numbers = #tpu.dot_dimension_numbers<[1], [0], [0], [1], [0, 0, 1, 1], [], []>} : vector<16x512xbf16>, vector<512x1024xbf16>, vector<16x1024xf32> -> vector<16x1024xf32>
    %c0_17 = arith.constant 0 : index
    %c0_18 = arith.constant 0 : index
    %20 = vector.load %arg8[%c0_17, %c0_18] : memref<1x1024xf32, #tpu.memory_space<vmem>>, vector<1x1024xf32>
    %21 = vector.broadcast %20 : vector<1x1024xf32> to vector<16x1024xf32>
    %22 = arith.addf %19, %21 : vector<16x1024xf32>
    %23 = arith.truncf %22 : vector<16x1024xf32> to vector<16x1024xbf16>
    %24 = vector.extract_strided_slice %23 {offsets = [0, 0], sizes = [16, 512], strides = [1, 1]} : vector<16x1024xbf16> to vector<16x512xbf16>
    %25 = vector.extract_strided_slice %23 {offsets = [0, 512], sizes = [16, 512], strides = [1, 1]} : vector<16x1024xbf16> to vector<16x512xbf16>
    %26 = vector.extract_strided_slice %17 {offsets = [0, 0], sizes = [16, 128], strides = [1, 1]} : vector<16x512xbf16> to vector<16x128xbf16>
    %27 = vector.extract_strided_slice %24 {offsets = [0, 0], sizes = [16, 128], strides = [1, 1]} : vector<16x512xbf16> to vector<16x128xbf16>
    %cst_19 = arith.constant dense<0.000000e+00> : vector<16x16xf32>
    %28 = tpu.matmul %26, %27, %cst_19 {dimension_numbers = #tpu.dot_dimension_numbers<[1], [1], [0], [0], [0, 0, 1, 0], [], []>} : vector<16x128xbf16>, vector<16x128xbf16>, vector<16x16xf32> -> vector<16x16xf32>
    %29 = vector.extract_strided_slice %17 {offsets = [0, 128], sizes = [16, 128], strides = [1, 1]} : vector<16x512xbf16> to vector<16x128xbf16>
    %30 = vector.extract_strided_slice %24 {offsets = [0, 128], sizes = [16, 128], strides = [1, 1]} : vector<16x512xbf16> to vector<16x128xbf16>
    %cst_20 = arith.constant dense<0.000000e+00> : vector<16x16xf32>
    %31 = tpu.matmul %29, %30, %cst_20 {dimension_numbers = #tpu.dot_dimension_numbers<[1], [1], [0], [0], [0, 0, 1, 0], [], []>} : vector<16x128xbf16>, vector<16x128xbf16>, vector<16x16xf32> -> vector<16x16xf32>
    %32 = vector.extract_strided_slice %17 {offsets = [0, 256], sizes = [16, 128], strides = [1, 1]} : vector<16x512xbf16> to vector<16x128xbf16>
    %33 = vector.extract_strided_slice %24 {offsets = [0, 256], sizes = [16, 128], strides = [1, 1]} : vector<16x512xbf16> to vector<16x128xbf16>
    %cst_21 = arith.constant dense<0.000000e+00> : vector<16x16xf32>
    %34 = tpu.matmul %32, %33, %cst_21 {dimension_numbers = #tpu.dot_dimension_numbers<[1], [1], [0], [0], [0, 0, 1, 0], [], []>} : vector<16x128xbf16>, vector<16x128xbf16>, vector<16x16xf32> -> vector<16x16xf32>
    %35 = vector.extract_strided_slice %17 {offsets = [0, 384], sizes = [16, 128], strides = [1, 1]} : vector<16x512xbf16> to vector<16x128xbf16>
    %36 = vector.extract_strided_slice %24 {offsets = [0, 384], sizes = [16, 128], strides = [1, 1]} : vector<16x512xbf16> to vector<16x128xbf16>
    %cst_22 = arith.constant dense<0.000000e+00> : vector<16x16xf32>
    %37 = tpu.matmul %35, %36, %cst_22 {dimension_numbers = #tpu.dot_dimension_numbers<[1], [1], [0], [0], [0, 0, 1, 0], [], []>} : vector<16x128xbf16>, vector<16x128xbf16>, vector<16x16xf32> -> vector<16x16xf32>
    %38 = tpu.concatenate %28, %31, %34, %37 in 0 : vector<16x16xf32>, vector<16x16xf32>, vector<16x16xf32>, vector<16x16xf32> -> vector<64x16xf32>
    %cst_23 = arith.constant dense<0xFF800000> : vector<64xf32>
    %39 = vector.multi_reduction <maximumf>, %38, %cst_23 [1] : vector<64x16xf32> to vector<64xf32>
    %40 = vector.shape_cast %39 : vector<64xf32> to vector<64x1xf32>
    %41 = vector.broadcast %40 : vector<64x1xf32> to vector<64x16xf32>
    %42 = arith.subf %38, %41 : vector<64x16xf32>
    %43 = math.exp %42 : vector<64x16xf32>
    %cst_24 = arith.constant dense<0.000000e+00> : vector<64xf32>
    %44 = vector.multi_reduction <add>, %43, %cst_24 [1] : vector<64x16xf32> to vector<64xf32>
    %45 = vector.shape_cast %44 : vector<64xf32> to vector<64x1xf32>
    %46 = tpu.reciprocal %45 {approx = true} : vector<64x1xf32> -> vector<64x1xf32>
    %47 = vector.broadcast %46 : vector<64x1xf32> to vector<64x16xf32>
    %48 = arith.mulf %43, %47 : vector<64x16xf32>
    %49 = arith.truncf %48 : vector<64x16xf32> to vector<64x16xbf16>
    %50 = vector.extract_strided_slice %49 {offsets = [0, 0], sizes = [16, 16], strides = [1, 1]} : vector<64x16xbf16> to vector<16x16xbf16>
    %51 = vector.extract_strided_slice %25 {offsets = [0, 0], sizes = [16, 128], strides = [1, 1]} : vector<16x512xbf16> to vector<16x128xbf16>
    %cst_25 = arith.constant dense<0.000000e+00> : vector<16x128xf32>
    %52 = tpu.matmul %50, %51, %cst_25 {dimension_numbers = #tpu.dot_dimension_numbers<[1], [0], [0], [1], [0, 0, 1, 1], [], []>} : vector<16x16xbf16>, vector<16x128xbf16>, vector<16x128xf32> -> vector<16x128xf32>
    %53 = vector.extract_strided_slice %49 {offsets = [16, 0], sizes = [16, 16], strides = [1, 1]} : vector<64x16xbf16> to vector<16x16xbf16>
    %54 = vector.extract_strided_slice %25 {offsets = [0, 128], sizes = [16, 128], strides = [1, 1]} : vector<16x512xbf16> to vector<16x128xbf16>
    %cst_26 = arith.constant dense<0.000000e+00> : vector<16x128xf32>
    %55 = tpu.matmul %53, %54, %cst_26 {dimension_numbers = #tpu.dot_dimension_numbers<[1], [0], [0], [1], [0, 0, 1, 1], [], []>} : vector<16x16xbf16>, vector<16x128xbf16>, vector<16x128xf32> -> vector<16x128xf32>
    %56 = vector.extract_strided_slice %49 {offsets = [32, 0], sizes = [16, 16], strides = [1, 1]} : vector<64x16xbf16> to vector<16x16xbf16>
    %57 = vector.extract_strided_slice %25 {offsets = [0, 256], sizes = [16, 128], strides = [1, 1]} : vector<16x512xbf16> to vector<16x128xbf16>
    %cst_27 = arith.constant dense<0.000000e+00> : vector<16x128xf32>
    %58 = tpu.matmul %56, %57, %cst_27 {dimension_numbers = #tpu.dot_dimension_numbers<[1], [0], [0], [1], [0, 0, 1, 1], [], []>} : vector<16x16xbf16>, vector<16x128xbf16>, vector<16x128xf32> -> vector<16x128xf32>
    %59 = vector.extract_strided_slice %49 {offsets = [48, 0], sizes = [16, 16], strides = [1, 1]} : vector<64x16xbf16> to vector<16x16xbf16>
    %60 = vector.extract_strided_slice %25 {offsets = [0, 384], sizes = [16, 128], strides = [1, 1]} : vector<16x512xbf16> to vector<16x128xbf16>
    %cst_28 = arith.constant dense<0.000000e+00> : vector<16x128xf32>
    %61 = tpu.matmul %59, %60, %cst_28 {dimension_numbers = #tpu.dot_dimension_numbers<[1], [0], [0], [1], [0, 0, 1, 1], [], []>} : vector<16x16xbf16>, vector<16x128xbf16>, vector<16x128xf32> -> vector<16x128xf32>
    %62 = tpu.concatenate %52, %55, %58, %61 in 1 : vector<16x128xf32>, vector<16x128xf32>, vector<16x128xf32>, vector<16x128xf32> -> vector<16x512xf32>
    %63 = arith.truncf %62 : vector<16x512xf32> to vector<16x512xbf16>
    %c0_29 = arith.constant 0 : index
    %c0_30 = arith.constant 0 : index
    %64 = vector.load %arg9[%c0_29, %c0_30] : memref<512x512xbf16, #tpu.memory_space<vmem>>, vector<512x512xbf16>
    %cst_31 = arith.constant dense<0.000000e+00> : vector<16x512xf32>
    %65 = tpu.matmul %63, %64, %cst_31 {dimension_numbers = #tpu.dot_dimension_numbers<[1], [0], [0], [1], [0, 0, 1, 1], [], []>} : vector<16x512xbf16>, vector<512x512xbf16>, vector<16x512xf32> -> vector<16x512xf32>
    %c0_32 = arith.constant 0 : index
    %c0_33 = arith.constant 0 : index
    %66 = vector.load %arg10[%c0_32, %c0_33] : memref<1x512xf32, #tpu.memory_space<vmem>>, vector<1x512xf32>
    %67 = vector.broadcast %66 : vector<1x512xf32> to vector<16x512xf32>
    %68 = arith.addf %65, %67 : vector<16x512xf32>
    %69 = arith.truncf %68 : vector<16x512xf32> to vector<16x512xbf16>
    %c0_34 = arith.constant 0 : index
    %c0_35 = arith.constant 0 : index
    %70 = vector.load %arg11[%c0_34, %c0_35] : memref<512x256xbf16, #tpu.memory_space<vmem>>, vector<512x256xbf16>
    %cst_36 = arith.constant dense<0.000000e+00> : vector<16x256xf32>
    %71 = tpu.matmul %69, %70, %cst_36 {dimension_numbers = #tpu.dot_dimension_numbers<[1], [0], [0], [1], [0, 0, 1, 1], [], []>} : vector<16x512xbf16>, vector<512x256xbf16>, vector<16x256xf32> -> vector<16x256xf32>
    %c0_37 = arith.constant 0 : index
    %c0_38 = arith.constant 0 : index
    %72 = vector.load %arg12[%c0_37, %c0_38] : memref<1x256xf32, #tpu.memory_space<vmem>>, vector<1x256xf32>
    %73 = vector.broadcast %72 : vector<1x256xf32> to vector<16x256xf32>
    %74 = arith.addf %71, %73 : vector<16x256xf32>
    %75 = math.tanh %74 : vector<16x256xf32>
    %76 = arith.truncf %75 : vector<16x256xf32> to vector<16x256xbf16>
    %c0_39 = arith.constant 0 : index
    %c0_40 = arith.constant 0 : index
    %77 = vector.load %arg13[%c0_39, %c0_40] : memref<256x128xbf16, #tpu.memory_space<vmem>>, vector<256x128xbf16>
    %cst_41 = arith.constant dense<0.000000e+00> : vector<16x128xf32>
    %78 = tpu.matmul %76, %77, %cst_41 {dimension_numbers = #tpu.dot_dimension_numbers<[1], [0], [0], [1], [0, 0, 1, 1], [], []>} : vector<16x256xbf16>, vector<256x128xbf16>, vector<16x128xf32> -> vector<16x128xf32>
    %c0_42 = arith.constant 0 : index
    %c0_43 = arith.constant 0 : index
    %79 = vector.load %arg14[%c0_42, %c0_43] : memref<1x128xf32, #tpu.memory_space<vmem>>, vector<1x128xf32>
    %80 = vector.broadcast %79 : vector<1x128xf32> to vector<16x128xf32>
    %81 = arith.addf %78, %80 : vector<16x128xf32>
    %cst_44 = arith.constant 0.000000e+00 : f32
    %82 = vector.broadcast %cst_44 : f32 to vector<16x128xf32>
    %83 = arith.cmpf ogt, %81, %82 : vector<16x128xf32>
    %cst_45 = arith.constant 0.00999999977 : f32
    %84 = vector.broadcast %cst_45 : f32 to vector<16x128xf32>
    %85 = arith.mulf %84, %81 : vector<16x128xf32>
    %86 = arith.select %83, %81, %85 : vector<16x128xi1>, vector<16x128xf32>
    %c0_46 = arith.constant 0 : index
    %c0_47 = arith.constant 0 : index
    %c0_48 = arith.constant 0 : index
    %87 = vector.load %arg15[%c0_46, %c0_47, %c0_48] : memref<1x16x128xf32, #tpu.memory_space<vmem>>, vector<1x16x128xf32>
    %88 = vector.shape_cast %87 : vector<1x16x128xf32> to vector<16x128xf32>
    %89 = vector.shape_cast %86 : vector<16x128xf32> to vector<1x16x128xf32>
    tpu.vector_store %arg15[%c0_46, %c0_47, %c0_48], %89 {strides = array<i32>} : memref<1x16x128xf32, #tpu.memory_space<vmem>>, vector<1x16x128xf32>,
    return
  }
  func.func @transform_0(%arg0: i32) -> (i32, i32, i32) {
    %c0_i32 = arith.constant 0 : i32
    %c0_i32_0 = arith.constant 0 : i32
    %c0_i32_1 = arith.constant 0 : i32
    return %arg0, %c0_i32, %c0_i32_0 : i32, i32, i32
  }
  func.func @transform_1(%arg0: i32) -> (i32, i32, i32) {
    %c0_i32 = arith.constant 0 : i32
    %c0_i32_0 = arith.constant 0 : i32
    %c0_i32_1 = arith.constant 0 : i32
    return %arg0, %c0_i32, %c0_i32_0 : i32, i32, i32
  }
  func.func @transform_2(%arg0: i32) -> (i32, i32) {
    %c0_i32 = arith.constant 0 : i32
    %c0_i32_0 = arith.constant 0 : i32
    %c0_i32_1 = arith.constant 0 : i32
    return %c0_i32, %c0_i32_0 : i32, i32
  }
  func.func @transform_3(%arg0: i32) -> (i32, i32) {
    %c0_i32 = arith.constant 0 : i32
    %c0_i32_0 = arith.constant 0 : i32
    %c0_i32_1 = arith.constant 0 : i32
    return %c0_i32, %c0_i32_0 : i32, i32
  }
  func.func @transform_4(%arg0: i32) -> (i32, i32) {
    %c0_i32 = arith.constant 0 : i32
    %c0_i32_0 = arith.constant 0 : i32
    %c0_i32_1 = arith.constant 0 : i32
    return %c0_i32, %c0_i32_0 : i32, i32
  }
  func.func @transform_5(%arg0: i32) -> (i32, i32) {
    %c0_i32 = arith.constant 0 : i32
    %c0_i32_0 = arith.constant 0 : i32
    %c0_i32_1 = arith.constant 0 : i32
    return %c0_i32, %c0_i32_0 : i32, i32
  }
  func.func @transform_6(%arg0: i32) -> (i32, i32) {
    %c0_i32 = arith.constant 0 : i32
    %c0_i32_0 = arith.constant 0 : i32
    %c0_i32_1 = arith.constant 0 : i32
    return %c0_i32, %c0_i32_0 : i32, i32
  }
  func.func @transform_7(%arg0: i32) -> (i32, i32) {
    %c0_i32 = arith.constant 0 : i32
    %c0_i32_0 = arith.constant 0 : i32
    %c0_i32_1 = arith.constant 0 : i32
    return %c0_i32, %c0_i32_0 : i32, i32
  }
  func.func @transform_8(%arg0: i32) -> (i32, i32) {
    %c0_i32 = arith.constant 0 : i32
    %c0_i32_0 = arith.constant 0 : i32
    %c0_i32_1 = arith.constant 0 : i32
    return %c0_i32, %c0_i32_0 : i32, i32
  }
  func.func @transform_9(%arg0: i32) -> (i32, i32) {
    %c0_i32 = arith.constant 0 : i32
    %c0_i32_0 = arith.constant 0 : i32
    %c0_i32_1 = arith.constant 0 : i32
    return %c0_i32, %c0_i32_0 : i32, i32
  }
  func.func @transform_10(%arg0: i32) -> (i32, i32) {
    %c0_i32 = arith.constant 0 : i32
    %c0_i32_0 = arith.constant 0 : i32
    %c0_i32_1 = arith.constant 0 : i32
    return %c0_i32, %c0_i32_0 : i32, i32
  }
  func.func @transform_11(%arg0: i32) -> (i32, i32) {
    %c0_i32 = arith.constant 0 : i32
    %c0_i32_0 = arith.constant 0 : i32
    %c0_i32_1 = arith.constant 0 : i32
    return %c0_i32, %c0_i32_0 : i32, i32
  }
  func.func @transform_12(%arg0: i32) -> (i32, i32) {
    %c0_i32 = arith.constant 0 : i32
    %c0_i32_0 = arith.constant 0 : i32
    %c0_i32_1 = arith.constant 0 : i32
    return %c0_i32, %c0_i32_0 : i32, i32
  }
  func.func @transform_13(%arg0: i32) -> (i32, i32) {
    %c0_i32 = arith.constant 0 : i32
    %c0_i32_0 = arith.constant 0 : i32
    %c0_i32_1 = arith.constant 0 : i32
    return %c0_i32, %c0_i32_0 : i32, i32
  }
  func.func @transform_14(%arg0: i32) -> (i32, i32, i32) {
    %c0_i32 = arith.constant 0 : i32
    %c0_i32_0 = arith.constant 0 : i32
    %c0_i32_1 = arith.constant 0 : i32
    return %arg0, %c0_i32, %c0_i32_0 : i32, i32, i32
  }
}

</mosaic_0001>

<llo_original>
// kernel: imgwithkg_forward.1
$region0: #{imgwithkg_forward.1}
  #allocation0 [shape = 'u32[]', space=smem, size = 0x4, offset = 0x4, fixed_abs, tag = 'smem constant byte address 0x4 - core index']
  #allocation1 [shape = 'u32[72,128]{1,0:T(1,128)}', space=vmem, size = 0x9000, scoped, tag = 'internal scratch']
  %s0 = inlined_call_operand.hbm [shape: f32[4,16,128], index: 0, kind: input, shape index: {}]
  %s1 = inlined_call_operand.hbm [shape: f32[4,16,512], index: 1, kind: input, shape index: {}]
  %s2 = inlined_call_operand.hbm [shape: bf16[128,512], index: 2, kind: input, shape index: {}]
  %s3 = inlined_call_operand.hbm [shape: f32[1,512], index: 3, kind: input, shape index: {}]
  %s4 = inlined_call_operand.hbm [shape: bf16[512,512], index: 4, kind: input, shape index: {}]
  %s5 = inlined_call_operand.hbm [shape: f32[1,512], index: 5, kind: input, shape index: {}]
  %s6 = inlined_call_operand.hbm [shape: bf16[512,1024], index: 6, kind: input, shape index: {}]
  %s7 = inlined_call_operand.vmem [shape: f32[1,1024], index: 7, kind: input, shape index: {}]
  %s8 = inlined_call_operand.hbm [shape: bf16[512,512], index: 8, kind: input, shape index: {}]
  %s9 = inlined_call_operand.hbm [shape: f32[1,512], index: 9, kind: input, shape index: {}]
  %s10 = inlined_call_operand.hbm [shape: bf16[512,256], index: 10, kind: input, shape index: {}]
  %s11 = inlined_call_operand.vmem [shape: f32[1,256], index: 11, kind: input, shape index: {}]
  %s12 = inlined_call_operand.hbm [shape: bf16[256,128], index: 12, kind: input, shape index: {}]
  %s13 = inlined_call_operand.hbm [shape: f32[1,128], index: 13, kind: input, shape index: {}]
  %s14 = inlined_call_operand.vmem [shape: f32[4,16,128], index: 14, kind: output, shape index: {}]
  %s15 = sld [smem:[#allocation0]]
  $region137: #{imgwithkg_forward.1} parent=0
    _
  %s17 = ssub.s32 1, %s15
  %s18 = scalar_select 0, %s17, %s15
  $region1: #{imgwithkg_forward.1} parent=0
    #allocation2 [shape = 'u8[16384]{0}', space=vmem, size = 0x4000, scoped, tag = 'input window, operand 0']
    #allocation3 [shape = 's32[2]{0}', space=sflag, size = 0x8, scoped, tag = 'scoped memory for imgwithkg_forward.1']
    #allocation4 [shape = 'u8[65536]{0}', space=vmem, size = 0x10000, scoped, tag = 'input window, operand 1']
    #allocation5 [shape = 's32[2]{0}', space=sflag, size = 0x8, scoped, tag = 'scoped memory for imgwithkg_forward.1']
    #allocation6 [shape = 'u8[131072]{0}', space=vmem, size = 0x20000, scoped, tag = 'input window, operand 2, single buffered']
    #allocation7 [shape = 'u8[2048]{0}', space=vmem, size = 0x800, scoped, tag = 'input window, operand 3, single buffered']
    #allocation8 [shape = 's32[1]{0}', space=sflag, size = 0x4, scoped, tag = 'scoped memory for imgwithkg_forward.1']
    #allocation9 [shape = 'u8[524288]{0}', space=vmem, size = 0x80000, scoped, tag = 'input window, operand 4, single buffered']
    #allocation10 [shape = 'u8[2048]{0}', space=vmem, size = 0x800, scoped, tag = 'input window, operand 5, single buffered']
    #allocation11 [shape = 's32[1]{0}', space=sflag, size = 0x4, scoped, tag = 'scoped memory for imgwithkg_forward.1']
    #allocation12 [shape = 'u8[1048576]{0}', space=vmem, size = 0x100000, scoped, tag = 'input window, operand 6, single buffered']
    #allocation13 [shape = 'u8[524288]{0}', space=vmem, size = 0x80000, scoped, tag = 'input window, operand 8, single buffered']
    #allocation14 [shape = 's32[1]{0}', space=sflag, size = 0x4, scoped, tag = 'scoped memory for imgwithkg_forward.1']
    #allocation15 [shape = 'u8[2048]{0}', space=vmem, size = 0x800, scoped, tag = 'input window, operand 9, single buffered']
    #allocation16 [shape = 'u8[262144]{0}', space=vmem, size = 0x40000, scoped, tag = 'input window, operand 10, single buffered']
    #allocation17 [shape = 's32[1]{0}', space=sflag, size = 0x4, scoped, tag = 'scoped memory for imgwithkg_forward.1']
    #allocation18 [shape = 'u8[65536]{0}', space=vmem, size = 0x10000, scoped, tag = 'input window, operand 12, single buffered']
    #allocation19 [shape = 'u8[512]{0}', space=vmem, size = 0x400, scoped, tag = 'input window, operand 13, single buffered']
    #allocation20 [shape = 's32[1]{0}', space=sflag, size = 0x4, scoped, tag = 'scoped memory for imgwithkg_forward.1']
    %19 = vsyncpa [#allocation3], 0
    %s20 = scalar_lea.sflag [#allocation3], 1
    %21 = vsyncpa %s20, 0
    %22 = vsyncpa [#allocation5], 0
    %s23 = scalar_lea.sflag [#allocation5], 1
    %24 = vsyncpa %s23, 0
    %25 = vsyncpa [#allocation8], 0
    %26 = vsyncpa [#allocation11], 0
    %27 = vsyncpa [#allocation14], 0
    %28 = vsyncpa [#allocation17], 0
    %29 = vsyncpa [#allocation20], 0
    loop: start=0, step=1, limit=6
    $region2: #{imgwithkg_forward.1} parent=1 // loop_pre_header
      _
    $region3: #{imgwithkg_forward.1} parent=1 // loop_header
      %s31 = sphi 0, %s35
      %p32 = scmp.ge.s32.totalorder %s31, 6
      %s41 = sphi 0, %s43
      %s44 = sphi 0, %s41
      %s45 = sphi 0, %s44
      %s61 = sphi 0, %s45
      %s67 = sphi 0, %s69
      %s70 = sphi 0, %s67
      %s71 = sphi 0, %s70
      %s87 = sphi 0, %s71
      %s91 = sphi 0, %s91
      %s93 = sphi 0, %s91
      %s94 = sphi 0, %s93
      %s108 = sphi 0, %s94
      %s112 = sphi 0, %s112
      %s114 = sphi 0, %s112
      %s115 = sphi 0, %s114
      %s129 = sphi 0, %s115
      %s133 = sphi 0, %s133
      %s135 = sphi 0, %s133
      %s136 = sphi 0, %s135
      %s150 = sphi 0, %s136
      %s154 = sphi 0, %s154
      %s156 = sphi 0, %s154
      %s157 = sphi 0, %s156
      %s171 = sphi 0, %s157
      %s175 = sphi 0, %s175
      %s177 = sphi 0, %s175
      %s178 = sphi 0, %s177
      %s192 = sphi 0, %s178
      %s196 = sphi 0, %s196
      %s198 = sphi 0, %s196
      %s199 = sphi 0, %s198
      %s213 = sphi 0, %s199
      %s217 = sphi 0, %s217
      %s219 = sphi 0, %s217
      %s220 = sphi 0, %s219
      %s234 = sphi 0, %s220
      %s238 = sphi 0, %s238
      %s240 = sphi 0, %s238
      %s241 = sphi 0, %s240
      %s255 = sphi 0, %s241
      %s259 = sphi 0, %s259
      %s261 = sphi 0, %s259
      %s262 = sphi 0, %s261
      %s276 = sphi 0, %s262
      %s280 = sphi 0, %s280
      %s282 = sphi 0, %s280
      %s283 = sphi 0, %s282
      %s297 = sphi 0, %s283
      %s301 = sphi 0, %s301
      %s303 = sphi 0, %s301
      %s304 = sphi 0, %s303
      %s318 = sphi 0, %s304
      %s322 = sphi 0, %s322
      %s324 = sphi 0, %s322
      %s325 = sphi 0, %s324
      %s339 = sphi 0, %s325
      %s345 = sphi 0, %s347
      %s348 = sphi 0, %s345
      %s349 = sphi 0, %s348
      %s365 = sphi 0, %s349
    $region4: #{imgwithkg_forward.1} parent=1 // loop_header_branch
      %34 = sbr.rel (%p32) target = $region8
    $region5: #{imgwithkg_forward.1} parent=1 // loop_body
      %s36 = ssub.s32 %s31, 1
      %s37 = ssub.s32 %s31, 2
      %s38 = sadd.s32 %s31, 1
      %s39 = ssub.s32 %s31, %s38
      %p40 = scmp.eq.s32.totalorder %s39, 0
      %s42 = sadd.s32 %s41, 1
      %s43 = scalar_select %p40, %s41, %s42
      %p46 = pneg %p40
      %p47 = scmp.eq.s32.totalorder %s31, 3
      %p48 = por %p46, %p47
      %p49 = scmp.ne.s32.totalorder %s41, %s44
      %p50 = scmp.eq.s32.totalorder %s31, 0
      %p51 = por %p49, %p50
      %p52 = scmp.ne.s32.totalorder %s41, %s44
      %p53 = scmp.eq.s32.totalorder %s36, 3
      %p54 = por %p52, %p53
      %p55 = scmp.ne.s32.totalorder %s44, %s45
      %p56 = scmp.eq.s32.totalorder %s36, 0
      %p57 = por %p55, %p56
      %p58 = scmp.ne.s32.totalorder %s44, %s45
      %p59 = scmp.eq.s32.totalorder %s37, 3
      %p60 = por %p58, %p59
      %p62 = scmp.ne.s32.totalorder %s45, %s61
      %p63 = scmp.eq.s32.totalorder %s37, 0
      %p64 = por %p62, %p63
      %s65 = ssub.s32 %s31, %s38
      %p66 = scmp.eq.s32.totalorder %s65, 0
      %s68 = sadd.s32 %s67, 1
      %s69 = scalar_select %p66, %s67, %s68
      %p72 = pneg %p66
      %p73 = scmp.eq.s32.totalorder %s31, 3
      %p74 = por %p72, %p73
      %p75 = scmp.ne.s32.totalorder %s67, %s70
      %p76 = scmp.eq.s32.totalorder %s31, 0
      %p77 = por %p75, %p76
      %p78 = scmp.ne.s32.totalorder %s67, %s70
      %p79 = scmp.eq.s32.totalorder %s36, 3
      %p80 = por %p78, %p79
      %p81 = scmp.ne.s32.totalorder %s70, %s71
      %p82 = scmp.eq.s32.totalorder %s36, 0
      %p83 = por %p81, %p82
      %p84 = scmp.ne.s32.totalorder %s70, %s71
      %p85 = scmp.eq.s32.totalorder %s37, 3
      %p86 = por %p84, %p85
      %p88 = scmp.ne.s32.totalorder %s71, %s87
      %p89 = scmp.eq.s32.totalorder %s37, 0
      %p90 = por %p88, %p89
      %s92 = sadd.s32 %s91, 1
      %p95 = scmp.eq.s32.totalorder %s31, 3
      %p96 = scmp.ne.s32.totalorder %s91, %s93
      %p97 = scmp.eq.s32.totalorder %s31, 0
      %p98 = por %p96, %p97
      %p99 = scmp.ne.s32.totalorder %s91, %s93
      %p100 = scmp.eq.s32.totalorder %s36, 3
      %p101 = por %p99, %p100
      %p102 = scmp.ne.s32.totalorder %s93, %s94
      %p103 = scmp.eq.s32.totalorder %s36, 0
      %p104 = por %p102, %p103
      %p105 = scmp.ne.s32.totalorder %s93, %s94
      %p106 = scmp.eq.s32.totalorder %s37, 3
      %p107 = por %p105, %p106
      %p109 = scmp.ne.s32.totalorder %s94, %s108
      %p110 = scmp.eq.s32.totalorder %s37, 0
      %p111 = por %p109, %p110
      %s113 = sadd.s32 %s112, 1
      %p116 = scmp.eq.s32.totalorder %s31, 3
      %p117 = scmp.ne.s32.totalorder %s112, %s114
      %p118 = scmp.eq.s32.totalorder %s31, 0
      %p119 = por %p117, %p118
      %p120 = scmp.ne.s32.totalorder %s112, %s114
      %p121 = scmp.eq.s32.totalorder %s36, 3
      %p122 = por %p120, %p121
      %p123 = scmp.ne.s32.totalorder %s114, %s115
      %p124 = scmp.eq.s32.totalorder %s36, 0
      %p125 = por %p123, %p124
      %p126 = scmp.ne.s32.totalorder %s114, %s115
      %p127 = scmp.eq.s32.totalorder %s37, 3
      %p128 = por %p126, %p127
      %p130 = scmp.ne.s32.totalorder %s115, %s129
      %p131 = scmp.eq.s32.totalorder %s37, 0
      %p132 = por %p130, %p131
      %s134 = sadd.s32 %s133, 1
      %p137 = scmp.eq.s32.totalorder %s31, 3
      %p138 = scmp.ne.s32.totalorder %s133, %s135
      %p139 = scmp.eq.s32.totalorder %s31, 0
      %p140 = por %p138, %p139
      %p141 = scmp.ne.s32.totalorder %s133, %s135
      %p142 = scmp.eq.s32.totalorder %s36, 3
      %p143 = por %p141, %p142
      %p144 = scmp.ne.s32.totalorder %s135, %s136
      %p145 = scmp.eq.s32.totalorder %s36, 0
      %p146 = por %p144, %p145
      %p147 = scmp.ne.s32.totalorder %s135, %s136
      %p148 = scmp.eq.s32.totalorder %s37, 3
      %p149 = por %p147, %p148
      %p151 = scmp.ne.s32.totalorder %s136, %s150
      %p152 = scmp.eq.s32.totalorder %s37, 0
      %p153 = por %p151, %p152
      %s155 = sadd.s32 %s154, 1
      %p158 = scmp.eq.s32.totalorder %s31, 3
      %p159 = scmp.ne.s32.totalorder %s154, %s156
      %p160 = scmp.eq.s32.totalorder %s31, 0
      %p161 = por %p159, %p160
      %p162 = scmp.ne.s32.totalorder %s154, %s156
      %p163 = scmp.eq.s32.totalorder %s36, 3
      %p164 = por %p162, %p163
      %p165 = scmp.ne.s32.totalorder %s156, %s157
      %p166 = scmp.eq.s32.totalorder %s36, 0
      %p167 = por %p165, %p166
      %p168 = scmp.ne.s32.totalorder %s156, %s157
      %p169 = scmp.eq.s32.totalorder %s37, 3
      %p170 = por %p168, %p169
      %p172 = scmp.ne.s32.totalorder %s157, %s171
      %p173 = scmp.eq.s32.totalorder %s37, 0
      %p174 = por %p172, %p173
      %s176 = sadd.s32 %s175, 1
      %p179 = scmp.eq.s32.totalorder %s31, 3
      %p180 = scmp.ne.s32.totalorder %s175, %s177
      %p181 = scmp.eq.s32.totalorder %s31, 0
      %p182 = por %p180, %p181
      %p183 = scmp.ne.s32.totalorder %s175, %s177
      %p184 = scmp.eq.s32.totalorder %s36, 3
      %p185 = por %p183, %p184
      %p186 = scmp.ne.s32.totalorder %s177, %s178
      %p187 = scmp.eq.s32.totalorder %s36, 0
      %p188 = por %p186, %p187
      %p189 = scmp.ne.s32.totalorder %s177, %s178
      %p190 = scmp.eq.s32.totalorder %s37, 3
      %p191 = por %p189, %p190
      %p193 = scmp.ne.s32.totalorder %s178, %s192
      %p194 = scmp.eq.s32.totalorder %s37, 0
      %p195 = por %p193, %p194
      %s197 = sadd.s32 %s196, 1
      %p200 = scmp.eq.s32.totalorder %s31, 3
      %p201 = scmp.ne.s32.totalorder %s196, %s198
      %p202 = scmp.eq.s32.totalorder %s31, 0
      %p203 = por %p201, %p202
      %p204 = scmp.ne.s32.totalorder %s196, %s198
      %p205 = scmp.eq.s32.totalorder %s36, 3
      %p206 = por %p204, %p205
      %p207 = scmp.ne.s32.totalorder %s198, %s199
      %p208 = scmp.eq.s32.totalorder %s36, 0
      %p209 = por %p207, %p208
      %p210 = scmp.ne.s32.totalorder %s198, %s199
      %p211 = scmp.eq.s32.totalorder %s37, 3
      %p212 = por %p210, %p211
      %p214 = scmp.ne.s32.totalorder %s199, %s213
      %p215 = scmp.eq.s32.totalorder %s37, 0
      %p216 = por %p214, %p215
      %s218 = sadd.s32 %s217, 1
      %p221 = scmp.eq.s32.totalorder %s31, 3
      %p222 = scmp.ne.s32.totalorder %s217, %s219
      %p223 = scmp.eq.s32.totalorder %s31, 0
      %p224 = por %p222, %p223
      %p225 = scmp.ne.s32.totalorder %s217, %s219
      %p226 = scmp.eq.s32.totalorder %s36, 3
      %p227 = por %p225, %p226
      %p228 = scmp.ne.s32.totalorder %s219, %s220
      %p229 = scmp.eq.s32.totalorder %s36, 0
      %p230 = por %p228, %p229
      %p231 = scmp.ne.s32.totalorder %s219, %s220
      %p232 = scmp.eq.s32.totalorder %s37, 3
      %p233 = por %p231, %p232
      %p235 = scmp.ne.s32.totalorder %s220, %s234
      %p236 = scmp.eq.s32.totalorder %s37, 0
      %p237 = por %p235, %p236
      %s239 = sadd.s32 %s238, 1
      %p242 = scmp.eq.s32.totalorder %s31, 3
      %p243 = scmp.ne.s32.totalorder %s238, %s240
      %p244 = scmp.eq.s32.totalorder %s31, 0
      %p245 = por %p243, %p244
      %p246 = scmp.ne.s32.totalorder %s238, %s240
      %p247 = scmp.eq.s32.totalorder %s36, 3
      %p248 = por %p246, %p247
      %p249 = scmp.ne.s32.totalorder %s240, %s241
      %p250 = scmp.eq.s32.totalorder %s36, 0
      %p251 = por %p249, %p250
      %p252 = scmp.ne.s32.totalorder %s240, %s241
      %p253 = scmp.eq.s32.totalorder %s37, 3
      %p254 = por %p252, %p253
      %p256 = scmp.ne.s32.totalorder %s241, %s255
      %p257 = scmp.eq.s32.totalorder %s37, 0
      %p258 = por %p256, %p257
      %s260 = sadd.s32 %s259, 1
      %p263 = scmp.eq.s32.totalorder %s31, 3
      %p264 = scmp.ne.s32.totalorder %s259, %s261
      %p265 = scmp.eq.s32.totalorder %s31, 0
      %p266 = por %p264, %p265
      %p267 = scmp.ne.s32.totalorder %s259, %s261
      %p268 = scmp.eq.s32.totalorder %s36, 3
      %p269 = por %p267, %p268
      %p270 = scmp.ne.s32.totalorder %s261, %s262
      %p271 = scmp.eq.s32.totalorder %s36, 0
      %p272 = por %p270, %p271
      %p273 = scmp.ne.s32.totalorder %s261, %s262
      %p274 = scmp.eq.s32.totalorder %s37, 3
      %p275 = por %p273, %p274
      %p277 = scmp.ne.s32.totalorder %s262, %s276
      %p278 = scmp.eq.s32.totalorder %s37, 0
      %p279 = por %p277, %p278
      %s281 = sadd.s32 %s280, 1
      %p284 = scmp.eq.s32.totalorder %s31, 3
      %p285 = scmp.ne.s32.totalorder %s280, %s282
      %p286 = scmp.eq.s32.totalorder %s31, 0
      %p287 = por %p285, %p286
      %p288 = scmp.ne.s32.totalorder %s280, %s282
      %p289 = scmp.eq.s32.totalorder %s36, 3
      %p290 = por %p288, %p289
      %p291 = scmp.ne.s32.totalorder %s282, %s283
      %p292 = scmp.eq.s32.totalorder %s36, 0
      %p293 = por %p291, %p292
      %p294 = scmp.ne.s32.totalorder %s282, %s283
      %p295 = scmp.eq.s32.totalorder %s37, 3
      %p296 = por %p294, %p295
      %p298 = scmp.ne.s32.totalorder %s283, %s297
      %p299 = scmp.eq.s32.totalorder %s37, 0
      %p300 = por %p298, %p299
      %s302 = sadd.s32 %s301, 1
      %p305 = scmp.eq.s32.totalorder %s31, 3
      %p306 = scmp.ne.s32.totalorder %s301, %s303
      %p307 = scmp.eq.s32.totalorder %s31, 0
      %p308 = por %p306, %p307
      %p309 = scmp.ne.s32.totalorder %s301, %s303
      %p310 = scmp.eq.s32.totalorder %s36, 3
      %p311 = por %p309, %p310
      %p312 = scmp.ne.s32.totalorder %s303, %s304
      %p313 = scmp.eq.s32.totalorder %s36, 0
      %p314 = por %p312, %p313
      %p315 = scmp.ne.s32.totalorder %s303, %s304
      %p316 = scmp.eq.s32.totalorder %s37, 3
      %p317 = por %p315, %p316
      %p319 = scmp.ne.s32.totalorder %s304, %s318
      %p320 = scmp.eq.s32.totalorder %s37, 0
      %p321 = por %p319, %p320
      %s323 = sadd.s32 %s322, 1
      %p326 = scmp.eq.s32.totalorder %s31, 3
      %p327 = scmp.ne.s32.totalorder %s322, %s324
      %p328 = scmp.eq.s32.totalorder %s31, 0
      %p329 = por %p327, %p328
      %p330 = scmp.ne.s32.totalorder %s322, %s324
      %p331 = scmp.eq.s32.totalorder %s36, 3
      %p332 = por %p330, %p331
      %p333 = scmp.ne.s32.totalorder %s324, %s325
      %p334 = scmp.eq.s32.totalorder %s36, 0
      %p335 = por %p333, %p334
      %p336 = scmp.ne.s32.totalorder %s324, %s325
      %p337 = scmp.eq.s32.totalorder %s37, 3
      %p338 = por %p336, %p337
      %p340 = scmp.ne.s32.totalorder %s325, %s339
      %p341 = scmp.eq.s32.totalorder %s37, 0
      %p342 = por %p340, %p341
      %s343 = ssub.s32 %s31, %s38
      %p344 = scmp.eq.s32.totalorder %s343, 0
      %s346 = sadd.s32 %s345, 1
      %s347 = scalar_select %p344, %s345, %s346
      %p350 = pneg %p344
      %p351 = scmp.eq.s32.totalorder %s31, 3
      %p352 = por %p350, %p351
      %p353 = scmp.ne.s32.totalorder %s345, %s348
      %p354 = scmp.eq.s32.totalorder %s31, 0
      %p355 = por %p353, %p354
      %p356 = scmp.ne.s32.totalorder %s345, %s348
      %p357 = scmp.eq.s32.totalorder %s36, 3
      %p358 = por %p356, %p357
      %p359 = scmp.ne.s32.totalorder %s348, %s349
      %p360 = scmp.eq.s32.totalorder %s36, 0
      %p361 = por %p359, %p360
      %p362 = scmp.ne.s32.totalorder %s348, %s349
      %p363 = scmp.eq.s32.totalorder %s37, 3
      %p364 = por %p362, %p363
      %p366 = scmp.ne.s32.totalorder %s349, %s365
      %p367 = scmp.eq.s32.totalorder %s37, 0
      %p368 = por %p366, %p367
      %p369 = scmp.le.s32.totalorder 1, %s31
      %p370 = scmp.lt.s32.totalorder %s31, 5
      %p371 = pnand %p369, %p370
      %p372 = pneg %p371
      // Predicated region
      $region9: #{imgwithkg_forward.1} parent=5 // pred_check
        _
      $region10: #{imgwithkg_forward.1} parent=5 // pred_check_branch
        %374 = sbr.rel (%p371) target = $region12
      $region11: #{imgwithkg_forward.1} parent=5 // pred_region
        %s375 = ssub.s32 %s31, 1
        // Predicated region
        $region13: #{imgwithkg_forward.1} parent=11 // pred_check
          %p376 = pneg %p104
        $region14: #{imgwithkg_forward.1} parent=11 // pred_check_branch
          %378 = sbr.rel (%p376) target = $region16
        $region15: #{imgwithkg_forward.1} parent=11 // pred_region
          %380 = vsyncadd [#allocation5], 0
          %s381 = sshll.u32 %s2, 4
          %s382 = int_to_ptr.hbm [resolvable:$true] %s381
          %s383 = sshll.u32 [#allocation6], 4
          %s384 = int_to_ptr.vmem [resolvable:$true] %s383
          %389 = dma.hbm_to_vmem [thread:$0]  %s382, 4096, %s384, [#allocation5], 256, 256, 16
        $region16: #{imgwithkg_forward.1} parent=11 // pred_fallthru
          _
        // Predicated region
        $region17: #{imgwithkg_forward.1} parent=11 // pred_check
          %p390 = pneg %p125
        $region18: #{imgwithkg_forward.1} parent=11 // pred_check_branch
          %392 = sbr.rel (%p390) target = $region20
        $region19: #{imgwithkg_forward.1} parent=11 // pred_region
          %394 = vsyncadd [#allocation8], 0
          %s396 = sshll.u32 %s3, 4
          %s397 = int_to_ptr.hbm [resolvable:$true] %s396
          %s398 = sshll.u32 [#allocation7], 4
          %s399 = int_to_ptr.vmem [resolvable:$true] %s398
          %401 = dma.hbm_to_vmem [thread:$0]  %s397, 64, %s399, [#allocation8]
        $region20: #{imgwithkg_forward.1} parent=11 // pred_fallthru
          _
        // Predicated region
        $region21: #{imgwithkg_forward.1} parent=11 // pred_check
          %p402 = pneg %p146
        $region22: #{imgwithkg_forward.1} parent=11 // pred_check_branch
          %404 = sbr.rel (%p402) target = $region24
        $region23: #{imgwithkg_forward.1} parent=11 // pred_region
          %406 = vsyncadd [#allocation8], 0
          %s407 = sshll.u32 %s4, 4
          %s408 = int_to_ptr.hbm [resolvable:$true] %s407
          %s409 = sshll.u32 [#allocation9], 4
          %s410 = int_to_ptr.vmem [resolvable:$true] %s409
          %415 = dma.hbm_to_vmem [thread:$0]  %s408, 16384, %s410, [#allocation8], 256, 256, 16
        $region24: #{imgwithkg_forward.1} parent=11 // pred_fallthru
          _
        // Predicated region
        $region25: #{imgwithkg_forward.1} parent=11 // pred_check
          %p416 = pneg %p167
        $region26: #{imgwithkg_forward.1} parent=11 // pred_check_branch
          %418 = sbr.rel (%p416) target = $region28
        $region27: #{imgwithkg_forward.1} parent=11 // pred_region
          %420 = vsyncadd [#allocation11], 0
          %s422 = sshll.u32 %s5, 4
          %s423 = int_to_ptr.hbm [resolvable:$true] %s422
          %s424 = sshll.u32 [#allocation10], 4
          %s425 = int_to_ptr.vmem [resolvable:$true] %s424
          %427 = dma.hbm_to_vmem [thread:$0]  %s423, 64, %s425, [#allocation11]
        $region28: #{imgwithkg_forward.1} parent=11 // pred_fallthru
          _
        // Predicated region
        $region29: #{imgwithkg_forward.1} parent=11 // pred_check
          %p428 = pneg %p188
        $region30: #{imgwithkg_forward.1} parent=11 // pred_check_branch
          %430 = sbr.rel (%p428) target = $region32
        $region31: #{imgwithkg_forward.1} parent=11 // pred_region
          %432 = vsyncadd [#allocation11], 0
          %s433 = sshll.u32 %s6, 4
          %s434 = int_to_ptr.hbm [resolvable:$true] %s433
          %s435 = sshll.u32 [#allocation12], 4
          %s436 = int_to_ptr.vmem [resolvable:$true] %s435
          %441 = dma.hbm_to_vmem [thread:$0]  %s434, 32768, %s436, [#allocation11], 512, 512, 32
        $region32: #{imgwithkg_forward.1} parent=11 // pred_fallthru
          _
        // Predicated region
        $region33: #{imgwithkg_forward.1} parent=11 // pred_check
          %p442 = pneg %p209
        $region34: #{imgwithkg_forward.1} parent=11 // pred_check_branch
          %444 = sbr.rel (%p442) target = $region36
        $region35: #{imgwithkg_forward.1} parent=11 // pred_region
          _
        $region36: #{imgwithkg_forward.1} parent=11 // pred_fallthru
          _
        // Predicated region
        $region37: #{imgwithkg_forward.1} parent=11 // pred_check
          %p445 = pneg %p230
        $region38: #{imgwithkg_forward.1} parent=11 // pred_check_branch
          %447 = sbr.rel (%p445) target = $region40
        $region39: #{imgwithkg_forward.1} parent=11 // pred_region
          %449 = vsyncadd [#allocation14], 0
          %s450 = sshll.u32 %s8, 4
          %s451 = int_to_ptr.hbm [resolvable:$true] %s450
          %s452 = sshll.u32 [#allocation13], 4
          %s453 = int_to_ptr.vmem [resolvable:$true] %s452
          %458 = dma.hbm_to_vmem [thread:$0]  %s451, 16384, %s453, [#allocation14], 256, 256, 16
        $region40: #{imgwithkg_forward.1} parent=11 // pred_fallthru
          _
        // Predicated region
        $region41: #{imgwithkg_forward.1} parent=11 // pred_check
          %p459 = pneg %p251
        $region42: #{imgwithkg_forward.1} parent=11 // pred_check_branch
          %461 = sbr.rel (%p459) target = $region44
        $region43: #{imgwithkg_forward.1} parent=11 // pred_region
          %463 = vsyncadd [#allocation14], 0
          %s465 = sshll.u32 %s9, 4
          %s466 = int_to_ptr.hbm [resolvable:$true] %s465
          %s467 = sshll.u32 [#allocation15], 4
          %s468 = int_to_ptr.vmem [resolvable:$true] %s467
          %470 = dma.hbm_to_vmem [thread:$0]  %s466, 64, %s468, [#allocation14]
        $region44: #{imgwithkg_forward.1} parent=11 // pred_fallthru
          _
        // Predicated region
        $region45: #{imgwithkg_forward.1} parent=11 // pred_check
          %p471 = pneg %p272
        $region46: #{imgwithkg_forward.1} parent=11 // pred_check_branch
          %473 = sbr.rel (%p471) target = $region48
        $region47: #{imgwithkg_forward.1} parent=11 // pred_region
          %475 = vsyncadd [#allocation17], 0
          %s476 = sshll.u32 %s10, 4
          %s477 = int_to_ptr.hbm [resolvable:$true] %s476
          %s478 = sshll.u32 [#allocation16], 4
          %s479 = int_to_ptr.vmem [resolvable:$true] %s478
          %484 = dma.hbm_to_vmem [thread:$0]  %s477, 8192, %s479, [#allocation17], 128, 128, 8
        $region48: #{imgwithkg_forward.1} parent=11 // pred_fallthru
          _
        // Predicated region
        $region49: #{imgwithkg_forward.1} parent=11 // pred_check
          %p485 = pneg %p293
        $region50: #{imgwithkg_forward.1} parent=11 // pred_check_branch
          %487 = sbr.rel (%p485) target = $region52
        $region51: #{imgwithkg_forward.1} parent=11 // pred_region
          _
        $region52: #{imgwithkg_forward.1} parent=11 // pred_fallthru
          _
        // Predicated region
        $region53: #{imgwithkg_forward.1} parent=11 // pred_check
          %p488 = pneg %p314
        $region54: #{imgwithkg_forward.1} parent=11 // pred_check_branch
          %490 = sbr.rel (%p488) target = $region56
        $region55: #{imgwithkg_forward.1} parent=11 // pred_region
          %492 = vsyncadd [#allocation17], 0
          %s493 = sshll.u32 %s12, 4
          %s494 = int_to_ptr.hbm [resolvable:$true] %s493
          %s495 = sshll.u32 [#allocation18], 4
          %s496 = int_to_ptr.vmem [resolvable:$true] %s495
          %501 = dma.hbm_to_vmem [thread:$0]  %s494, 2048, %s496, [#allocation17], 64, 64, 4
        $region56: #{imgwithkg_forward.1} parent=11 // pred_fallthru
          _
        // Predicated region
        $region57: #{imgwithkg_forward.1} parent=11 // pred_check
          %p502 = pneg %p335
        $region58: #{imgwithkg_forward.1} parent=11 // pred_check_branch
          %504 = sbr.rel (%p502) target = $region60
        $region59: #{imgwithkg_forward.1} parent=11 // pred_region
          %506 = vsyncadd [#allocation20], 0
          %s508 = sshll.u32 %s13, 4
          %s509 = int_to_ptr.hbm [resolvable:$true] %s508
          %s510 = sshll.u32 [#allocation19], 4
          %s511 = int_to_ptr.vmem [resolvable:$true] %s510
          %513 = dma.hbm_to_vmem [thread:$0]  %s509, 16, %s511, [#allocation20]
        $region60: #{imgwithkg_forward.1} parent=11 // pred_fallthru
          _
      $region12: #{imgwithkg_forward.1} parent=5 // pred_fallthru
        _
      %p514 = scmp.lt.s32.totalorder %s31, 4
      // Predicated region
      $region61: #{imgwithkg_forward.1} parent=5 // pred_check
        %p515 = pneg %p514
      $region62: #{imgwithkg_forward.1} parent=5 // pred_check_branch
        %517 = sbr.rel (%p515) target = $region64
      $region63: #{imgwithkg_forward.1} parent=5 // pred_region
        // Predicated region
        $region65: #{imgwithkg_forward.1} parent=63 // pred_check
          %p518 = pneg %p51
        $region66: #{imgwithkg_forward.1} parent=63 // pred_check_branch
          %520 = sbr.rel (%p518) target = $region68
        $region67: #{imgwithkg_forward.1} parent=63 // pred_region
          %s521 = sand.u32 %s41, 1
          %s522 = scalar_lea.sflag [#allocation3], %s521
          %s523 = sand.u32 %s41, 1
          %s524 = smul.addr %s523, 16
          %s525 = scalar_lea.vmem [#allocation2], %s524
          %527 = vsyncadd %s522, 0
          %s528 = smul.addr %s31, 2
          %s529 = smul.addr %s528, 8
          %s530 = scalar_lea.hbm %s0, %s529
          %s531 = sshll.u32 %s530, 4
          %s532 = int_to_ptr.hbm [resolvable:$true] %s531
          %s533 = sshll.u32 %s525, 4
          %s534 = int_to_ptr.vmem [resolvable:$true] %s533
          %539 = dma.hbm_to_vmem [thread:$0]  %s532, 256, %s534, %s522, 128, 128, 8
        $region68: #{imgwithkg_forward.1} parent=63 // pred_fallthru
          _
        // Predicated region
        $region69: #{imgwithkg_forward.1} parent=63 // pred_check
          %p540 = pneg %p77
        $region70: #{imgwithkg_forward.1} parent=63 // pred_check_branch
          %542 = sbr.rel (%p540) target = $region72
        $region71: #{imgwithkg_forward.1} parent=63 // pred_region
          %s543 = sand.u32 %s31, 1
          %s544 = scalar_lea.sflag [#allocation5], %s543
          %s545 = sand.u32 %s67, 1
          %s546 = smul.addr %s545, 64
          %s547 = scalar_lea.vmem [#allocation4], %s546
          %549 = vsyncadd %s544, 0
          %s550 = smul.addr %s31, 8
          %s551 = smul.addr %s550, 8
          %s552 = scalar_lea.hbm %s1, %s551
          %s553 = sshll.u32 %s552, 4
          %s554 = int_to_ptr.hbm [resolvable:$true] %s553
          %s555 = sshll.u32 %s547, 4
          %s556 = int_to_ptr.vmem [resolvable:$true] %s555
          %561 = dma.hbm_to_vmem [thread:$0]  %s554, 1024, %s556, %s544, 512, 512, 32
        $region72: #{imgwithkg_forward.1} parent=63 // pred_fallthru
          _
      $region64: #{imgwithkg_forward.1} parent=5 // pred_fallthru
        _
      %p562 = scmp.le.s32.totalorder 1, %s31
      %p563 = scmp.lt.s32.totalorder %s31, 5
      %p564 = pnand %p562, %p563
      %p565 = pneg %p564
      // Predicated region
      $region73: #{imgwithkg_forward.1} parent=5 // pred_check
        _
      $region74: #{imgwithkg_forward.1} parent=5 // pred_check_branch
        %567 = sbr.rel (%p564) target = $region76
      $region75: #{imgwithkg_forward.1} parent=5 // pred_region
        %s568 = ssub.s32 %s31, 1
        %s569 = sand.u32 %s44, 1
        %s570 = scalar_lea.sflag [#allocation3], %s569
        %s571 = sand.u32 %s44, 1
        %s572 = smul.addr %s571, 16
        %s573 = scalar_lea.vmem [#allocation2], %s572
        // Predicated region
        $region77: #{imgwithkg_forward.1} parent=75 // pred_check
          %p574 = pneg %p57
        $region78: #{imgwithkg_forward.1} parent=75 // pred_check_branch
          %576 = sbr.rel (%p574) target = $region80
        $region79: #{imgwithkg_forward.1} parent=75 // pred_region
          %578 = dma.done %s570, 256
        $region80: #{imgwithkg_forward.1} parent=75 // pred_fallthru
          _
        %s579 = sand.u32 %s36, 1
        %s580 = scalar_lea.sflag [#allocation5], %s579
        %s581 = sand.u32 %s70, 1
        %s582 = smul.addr %s581, 64
        %s583 = scalar_lea.vmem [#allocation4], %s582
        // Predicated region
        $region81: #{imgwithkg_forward.1} parent=75 // pred_check
          %p584 = pneg %p83
        $region82: #{imgwithkg_forward.1} parent=75 // pred_check_branch
          %586 = sbr.rel (%p584) target = $region84
        $region83: #{imgwithkg_forward.1} parent=75 // pred_region
          %588 = dma.done %s580, 1024
        $region84: #{imgwithkg_forward.1} parent=75 // pred_fallthru
          _
        // Predicated region
        $region85: #{imgwithkg_forward.1} parent=75 // pred_check
          %p589 = pneg %p104
        $region86: #{imgwithkg_forward.1} parent=75 // pred_check_branch
          %591 = sbr.rel (%p589) target = $region88
        $region87: #{imgwithkg_forward.1} parent=75 // pred_region
          %593 = dma.done [#allocation5], 4096
        $region88: #{imgwithkg_forward.1} parent=75 // pred_fallthru
          _
        // Predicated region
        $region89: #{imgwithkg_forward.1} parent=75 // pred_check
          %p594 = pneg %p125
        $region90: #{imgwithkg_forward.1} parent=75 // pred_check_branch
          %596 = sbr.rel (%p594) target = $region92
        $region91: #{imgwithkg_forward.1} parent=75 // pred_region
          %598 = dma.done [#allocation8], 64
        $region92: #{imgwithkg_forward.1} parent=75 // pred_fallthru
          _
        // Predicated region
        $region93: #{imgwithkg_forward.1} parent=75 // pred_check
          %p599 = pneg %p146
        $region94: #{imgwithkg_forward.1} parent=75 // pred_check_branch
          %601 = sbr.rel (%p599) target = $region96
        $region95: #{imgwithkg_forward.1} parent=75 // pred_region
          %603 = dma.done [#allocation8], 16384
        $region96: #{imgwithkg_forward.1} parent=75 // pred_fallthru
          _
        // Predicated region
        $region97: #{imgwithkg_forward.1} parent=75 // pred_check
          %p604 = pneg %p167
        $region98: #{imgwithkg_forward.1} parent=75 // pred_check_branch
          %606 = sbr.rel (%p604) target = $region100
        $region99: #{imgwithkg_forward.1} parent=75 // pred_region
          %608 = dma.done [#allocation11], 64
        $region100: #{imgwithkg_forward.1} parent=75 // pred_fallthru
          _
        // Predicated region
        $region101: #{imgwithkg_forward.1} parent=75 // pred_check
          %p609 = pneg %p188
        $region102: #{imgwithkg_forward.1} parent=75 // pred_check_branch
          %611 = sbr.rel (%p609) target = $region104
        $region103: #{imgwithkg_forward.1} parent=75 // pred_region
          %613 = dma.done [#allocation11], 32768
        $region104: #{imgwithkg_forward.1} parent=75 // pred_fallthru
          _
        // Predicated region
        $region105: #{imgwithkg_forward.1} parent=75 // pred_check
          %p614 = pneg %p230
        $region106: #{imgwithkg_forward.1} parent=75 // pred_check_branch
          %616 = sbr.rel (%p614) target = $region108
        $region107: #{imgwithkg_forward.1} parent=75 // pred_region
          %618 = dma.done [#allocation14], 16384
        $region108: #{imgwithkg_forward.1} parent=75 // pred_fallthru
          _
        // Predicated region
        $region109: #{imgwithkg_forward.1} parent=75 // pred_check
          %p619 = pneg %p251
        $region110: #{imgwithkg_forward.1} parent=75 // pred_check_branch
          %621 = sbr.rel (%p619) target = $region112
        $region111: #{imgwithkg_forward.1} parent=75 // pred_region
          %623 = dma.done [#allocation14], 64
        $region112: #{imgwithkg_forward.1} parent=75 // pred_fallthru
          _
        // Predicated region
        $region113: #{imgwithkg_forward.1} parent=75 // pred_check
          %p624 = pneg %p272
        $region114: #{imgwithkg_forward.1} parent=75 // pred_check_branch
          %626 = sbr.rel (%p624) target = $region116
        $region115: #{imgwithkg_forward.1} parent=75 // pred_region
          %628 = dma.done [#allocation17], 8192
        $region116: #{imgwithkg_forward.1} parent=75 // pred_fallthru
          _
        // Predicated region
        $region117: #{imgwithkg_forward.1} parent=75 // pred_check
          %p629 = pneg %p314
        $region118: #{imgwithkg_forward.1} parent=75 // pred_check_branch
          %631 = sbr.rel (%p629) target = $region120
        $region119: #{imgwithkg_forward.1} parent=75 // pred_region
          %633 = dma.done [#allocation17], 2048
        $region120: #{imgwithkg_forward.1} parent=75 // pred_fallthru
          _
        // Predicated region
        $region121: #{imgwithkg_forward.1} parent=75 // pred_check
          %p634 = pneg %p335
        $region122: #{imgwithkg_forward.1} parent=75 // pred_check_branch
          %636 = sbr.rel (%p634) target = $region124
        $region123: #{imgwithkg_forward.1} parent=75 // pred_region
          %638 = dma.done [#allocation20], 16
        $region124: #{imgwithkg_forward.1} parent=75 // pred_fallthru
          _
        %s639 = sand.u32 %s44, 1
        %s640 = scalar_lea.sflag [#allocation3], %s639
        %s641 = sand.u32 %s44, 1
        %s642 = smul.addr %s641, 16
        %s643 = scalar_lea.vmem [#allocation2], %s642
        %p644 = pneg %p57
        %p645 = pneg %p54
        %s646 = sand.u32 %s36, 1
        %s647 = scalar_lea.sflag [#allocation5], %s646
        %s648 = sand.u32 %s70, 1
        %s649 = smul.addr %s648, 64
        %s650 = scalar_lea.vmem [#allocation4], %s649
        %p651 = pneg %p83
        %p652 = pneg %p80
        %p653 = pneg %p104
        %p654 = pneg %p101
        %p655 = pneg %p125
        %p656 = pneg %p122
        %p657 = pneg %p146
        %p658 = pneg %p143
        %p659 = pneg %p167
        %p660 = pneg %p164
        %p661 = pneg %p188
        %p662 = pneg %p185
        %p663 = pneg %p209
        %p664 = pneg %p206
        %p665 = pneg %p230
        %p666 = pneg %p227
        %p667 = pneg %p251
        %p668 = pneg %p248
        %p669 = pneg %p272
        %p670 = pneg %p269
        %p671 = pneg %p293
        %p672 = pneg %p290
        %p673 = pneg %p314
        %p674 = pneg %p311
        %p675 = pneg %p335
        %p676 = pneg %p332
        %p677 = pneg %p361
        %p678 = pneg %p358
        %p679 = scmp.lt.s32.totalorder %s36, 3
        %s680 = scalar_select %p679, %s36, 3
        %s681 = smul.addr %s680, 2
        %s682 = smul.addr %s681, 8
        %s683 = scalar_lea.vmem %s14, %s682
        %p684 = scmp.lt.s32.totalorder %s36, 3
        %s685 = scalar_select %p684, %s36, 3
        %s686 = smul.addr %s685, 2
        %s687 = smul.addr %s686, 8
        %s688 = scalar_lea.vmem %s14, %s687
        %v690 = vld [vmem:[%s573] sm:$0xff]
        %v691 = vld [vmem:[%s573 + $0x8] sm:$0xff]
        %v692 = vpack.c.bf16 %v691, %v690
        %v693 = vld [vmem:[%s583] sm:$0xff]
        %v694 = vld [vmem:[%s583 + $0x8] sm:$0xff]
        %v695 = vld [vmem:[%s583 + $0x10] sm:$0xff]
        %v696 = vld [vmem:[%s583 + $0x18] sm:$0xff]
        %v697 = vld [vmem:[%s583 + $0x20] sm:$0xff]
        %v698 = vld [vmem:[%s583 + $0x28] sm:$0xff]
        %v699 = vld [vmem:[%s583 + $0x30] sm:$0xff]
        %v700 = vld [vmem:[%s583 + $0x38] sm:$0xff]
        %v701 = vpack.c.bf16 %v697, %v693
        %v702 = vpack.c.bf16 %v698, %v694
        %v703 = vpack.c.bf16 %v699, %v695
        %v704 = vpack.c.bf16 %v700, %v696
        %v705 = vld [vmem:[#allocation6] sm:$0xff]
        %v706 = vld [vmem:[#allocation6 + $0x8] sm:$0xff]
        %v707 = vld [vmem:[#allocation6 + $0x10] sm:$0xff]
        %v708 = vld [vmem:[#allocation6 + $0x18] sm:$0xff]
        %v709 = vld [vmem:[#allocation6 + $0x20] sm:$0xff]
        %v710 = vld [vmem:[#allocation6 + $0x28] sm:$0xff]
        %v711 = vld [vmem:[#allocation6 + $0x30] sm:$0xff]
        %v712 = vld [vmem:[#allocation6 + $0x38] sm:$0xff]
        %v713 = vld [vmem:[#allocation6 + $0x40] sm:$0xff]
        %v714 = vld [vmem:[#allocation6 + $0x48] sm:$0xff]
        %v715 = vld [vmem:[#allocation6 + $0x50] sm:$0xff]
        %v716 = vld [vmem:[#allocation6 + $0x58] sm:$0xff]
        %v717 = vld [vmem:[#allocation6 + $0x60] sm:$0xff]
        %v718 = vld [vmem:[#allocation6 + $0x68] sm:$0xff]
        %v719 = vld [vmem:[#allocation6 + $0x70] sm:$0xff]
        %v720 = vld [vmem:[#allocation6 + $0x78] sm:$0xff]
        %v721 = vld [vmem:[#allocation6 + $0x80] sm:$0xff]
        %v722 = vld [vmem:[#allocation6 + $0x88] sm:$0xff]
        %v723 = vld [vmem:[#allocation6 + $0x90] sm:$0xff]
        %v724 = vld [vmem:[#allocation6 + $0x98] sm:$0xff]
        %v725 = vld [vmem:[#allocation6 + $0xa0] sm:$0xff]
        %v726 = vld [vmem:[#allocation6 + $0xa8] sm:$0xff]
        %v727 = vld [vmem:[#allocation6 + $0xb0] sm:$0xff]
        %v728 = vld [vmem:[#allocation6 + $0xb8] sm:$0xff]
        %v729 = vld [vmem:[#allocation6 + $0xc0] sm:$0xff]
        %v730 = vld [vmem:[#allocation6 + $0xc8] sm:$0xff]
        %v731 = vld [vmem:[#allocation6 + $0xd0] sm:$0xff]
        %v732 = vld [vmem:[#allocation6 + $0xd8] sm:$0xff]
        %v733 = vld [vmem:[#allocation6 + $0xe0] sm:$0xff]
        %v734 = vld [vmem:[#allocation6 + $0xe8] sm:$0xff]
        %v735 = vld [vmem:[#allocation6 + $0xf0] sm:$0xff]
        %v736 = vld [vmem:[#allocation6 + $0xf8] sm:$0xff]
        %v737 = vld [vmem:[#allocation7] sm:$0xf]
        %v739 = vperm.slane %v737, 0
        %v740 = vperm.slane %v737, 1
        %v741 = vperm.slane %v737, 2
        %v742 = vperm.slane %v737, 3
        %v779 = vunpack.c.l.b16 %v705
        %v780 = vunpack.c.h.b16 %v705
        %v781 = vunpack.c.l.b16 %v706
        %v782 = vunpack.c.h.b16 %v706
        %v783 = vunpack.c.l.b16 %v707
        %v784 = vunpack.c.h.b16 %v707
        %v785 = vunpack.c.l.b16 %v708
        %v786 = vunpack.c.h.b16 %v708
        %v787 = vunpack.c.l.b16 %v709
        %v788 = vunpack.c.h.b16 %v709
        %v789 = vunpack.c.l.b16 %v710
        %v790 = vunpack.c.h.b16 %v710
        %v791 = vunpack.c.l.b16 %v711
        %v792 = vunpack.c.h.b16 %v711
        %v793 = vunpack.c.l.b16 %v712
        %v794 = vunpack.c.h.b16 %v712
        %v795 = vunpack.c.l.b16 %v713
        %v796 = vunpack.c.h.b16 %v713
        %v797 = vunpack.c.l.b16 %v714
        %v798 = vunpack.c.h.b16 %v714
        %v799 = vunpack.c.l.b16 %v715
        %v800 = vunpack.c.h.b16 %v715
        %v801 = vunpack.c.l.b16 %v716
        %v802 = vunpack.c.h.b16 %v716
        %v803 = vunpack.c.l.b16 %v717
        %v804 = vunpack.c.h.b16 %v717
        %v805 = vunpack.c.l.b16 %v718
        %v806 = vunpack.c.h.b16 %v718
        %v807 = vunpack.c.l.b16 %v719
        %v808 = vunpack.c.h.b16 %v719
        %v809 = vunpack.c.l.b16 %v720
        %v810 = vunpack.c.h.b16 %v720
        %v811 = vunpack.c.l.b16 %v721
        %v812 = vunpack.c.h.b16 %v721
        %v813 = vunpack.c.l.b16 %v722
        %v814 = vunpack.c.h.b16 %v722
        %v815 = vunpack.c.l.b16 %v723
        %v816 = vunpack.c.h.b16 %v723
        %v817 = vunpack.c.l.b16 %v724
        %v818 = vunpack.c.h.b16 %v724
        %v819 = vunpack.c.l.b16 %v725
        %v820 = vunpack.c.h.b16 %v725
        %v821 = vunpack.c.l.b16 %v726
        %v822 = vunpack.c.h.b16 %v726
        %v823 = vunpack.c.l.b16 %v727
        %v824 = vunpack.c.h.b16 %v727
        %v825 = vunpack.c.l.b16 %v728
        %v826 = vunpack.c.h.b16 %v728
        %v827 = vunpack.c.l.b16 %v729
        %v828 = vunpack.c.h.b16 %v729
        %v829 = vunpack.c.l.b16 %v730
        %v830 = vunpack.c.h.b16 %v730
        %v831 = vunpack.c.l.b16 %v731
        %v832 = vunpack.c.h.b16 %v731
        %v833 = vunpack.c.l.b16 %v732
        %v834 = vunpack.c.h.b16 %v732
        %v835 = vunpack.c.l.b16 %v733
        %v836 = vunpack.c.h.b16 %v733
        %v837 = vunpack.c.l.b16 %v734
        %v838 = vunpack.c.h.b16 %v734
        %v839 = vunpack.c.l.b16 %v735
        %v840 = vunpack.c.h.b16 %v735
        %v841 = vunpack.c.l.b16 %v736
        %v842 = vunpack.c.h.b16 %v736
        %v843 = vpack.c.b16 %v783, %v779
        %v844 = vpack.c.b16 %v784, %v780
        %v845 = vpack.c.b16 %v785, %v781
        %v846 = vpack.c.b16 %v786, %v782
        %v847 = vpack.c.b16 %v791, %v787
        %v848 = vpack.c.b16 %v792, %v788
        %v849 = vpack.c.b16 %v793, %v789
        %v850 = vpack.c.b16 %v794, %v790
        %v851 = vpack.c.b16 %v799, %v795
        %v852 = vpack.c.b16 %v800, %v796
        %v853 = vpack.c.b16 %v801, %v797
        %v854 = vpack.c.b16 %v802, %v798
        %v855 = vpack.c.b16 %v807, %v803
        %v856 = vpack.c.b16 %v808, %v804
        %v857 = vpack.c.b16 %v809, %v805
        %v858 = vpack.c.b16 %v810, %v806
        %v859 = vpack.c.b16 %v815, %v811
        %v860 = vpack.c.b16 %v816, %v812
        %v861 = vpack.c.b16 %v817, %v813
        %v862 = vpack.c.b16 %v818, %v814
        %v863 = vpack.c.b16 %v823, %v819
        %v864 = vpack.c.b16 %v824, %v820
        %v865 = vpack.c.b16 %v825, %v821
        %v866 = vpack.c.b16 %v826, %v822
        %v867 = vpack.c.b16 %v831, %v827
        %v868 = vpack.c.b16 %v832, %v828
        %v869 = vpack.c.b16 %v833, %v829
        %v870 = vpack.c.b16 %v834, %v830
        %v871 = vpack.c.b16 %v839, %v835
        %v872 = vpack.c.b16 %v840, %v836
        %v873 = vpack.c.b16 %v841, %v837
        %v874 = vpack.c.b16 %v842, %v838
        %907 = vmatpush.bf16.msra.mxu0 %v871
        %908 = vmatpush.bf16.msra.mxu0 %v867
        %909 = vmatpush.bf16.msra.mxu0 %v863
        %910 = vmatpush.bf16.msra.mxu0 %v859
        %911 = vmatpush.bf16.msra.mxu0 %v855
        %912 = vmatpush.bf16.msra.mxu0 %v851
        %913 = vmatpush.bf16.msra.mxu0 %v847
        %914 = vmatpush.bf16.msra.mxu0 %v843
        %915 = vmatmul.bf16.gmra.mxu0 %v692
        %v916 = vpop.f32.mrf.mxu0
        %v917 = vadd.f32 %v739, %v916
        %v918 = vpop.f32.mrf.mxu0
        %v919 = vadd.f32 %v739, %v918
        %920 = vdwg.mxu0
        %921 = vmatpush.bf16.msra.mxu0 %v872
        %922 = vmatpush.bf16.msra.mxu0 %v868
        %923 = vmatpush.bf16.msra.mxu0 %v864
        %924 = vmatpush.bf16.msra.mxu0 %v860
        %925 = vmatpush.bf16.msra.mxu0 %v856
        %926 = vmatpush.bf16.msra.mxu0 %v852
        %927 = vmatpush.bf16.msra.mxu0 %v848
        %928 = vmatpush.bf16.msra.mxu0 %v844
        %929 = vmatmul.bf16.gmra.mxu0 %v692
        %v930 = vpop.f32.mrf.mxu0
        %v931 = vadd.f32 %v740, %v930
        %v932 = vpop.f32.mrf.mxu0
        %v933 = vadd.f32 %v740, %v932
        %934 = vdwg.mxu0
        %935 = vmatpush.bf16.msra.mxu0 %v873
        %936 = vmatpush.bf16.msra.mxu0 %v869
        %937 = vmatpush.bf16.msra.mxu0 %v865
        %938 = vmatpush.bf16.msra.mxu0 %v861
        %939 = vmatpush.bf16.msra.mxu0 %v857
        %940 = vmatpush.bf16.msra.mxu0 %v853
        %941 = vmatpush.bf16.msra.mxu0 %v849
        %942 = vmatpush.bf16.msra.mxu0 %v845
        %943 = vmatmul.bf16.gmra.mxu0 %v692
        %v944 = vpop.f32.mrf.mxu0
        %v945 = vadd.f32 %v741, %v944
        %v946 = vpop.f32.mrf.mxu0
        %v947 = vadd.f32 %v741, %v946
        %948 = vdwg.mxu0
        %949 = vmatpush.bf16.msra.mxu0 %v874
        %950 = vmatpush.bf16.msra.mxu0 %v870
        %951 = vmatpush.bf16.msra.mxu0 %v866
        %952 = vmatpush.bf16.msra.mxu0 %v862
        %953 = vmatpush.bf16.msra.mxu0 %v858
        %954 = vmatpush.bf16.msra.mxu0 %v854
        %955 = vmatpush.bf16.msra.mxu0 %v850
        %956 = vmatpush.bf16.msra.mxu0 %v846
        %957 = vmatmul.bf16.gmra.mxu0 %v692
        %v958 = vpop.f32.mrf.mxu0
        %v959 = vadd.f32 %v742, %v958
        %v960 = vpop.f32.mrf.mxu0
        %v961 = vadd.f32 %v742, %v960
        %962 = vdwg.mxu0
        %v963 = vpack.c.bf16 %v919, %v917
        %v964 = vpack.c.bf16 %v933, %v931
        %v965 = vpack.c.bf16 %v947, %v945
        %v966 = vpack.c.bf16 %v961, %v959
        %v967 = vld [vmem:[#allocation9] sm:$0xff]
        %v968 = vld [vmem:[#allocation9 + $0x8] sm:$0xff]
        %v969 = vld [vmem:[#allocation9 + $0x10] sm:$0xff]
        %v970 = vld [vmem:[#allocation9 + $0x18] sm:$0xff]
        %v971 = vld [vmem:[#allocation9 + $0x20] sm:$0xff]
        %v972 = vld [vmem:[#allocation9 + $0x28] sm:$0xff]
        %v973 = vld [vmem:[#allocation9 + $0x30] sm:$0xff]
        %v974 = vld [vmem:[#allocation9 + $0x38] sm:$0xff]
        %v975 = vld [vmem:[#allocation9 + $0x40] sm:$0xff]
        %v976 = vld [vmem:[#allocation9 + $0x48] sm:$0xff]
        %v977 = vld [vmem:[#allocation9 + $0x50] sm:$0xff]
        %v978 = vld [vmem:[#allocation9 + $0x58] sm:$0xff]
        %v979 = vld [vmem:[#allocation9 + $0x60] sm:$0xff]
        %v980 = vld [vmem:[#allocation9 + $0x68] sm:$0xff]
        %v981 = vld [vmem:[#allocation9 + $0x70] sm:$0xff]
        %v982 = vld [vmem:[#allocation9 + $0x78] sm:$0xff]
        %v983 = vld [vmem:[#allocation9 + $0x80] sm:$0xff]
        %v984 = vld [vmem:[#allocation9 + $0x88] sm:$0xff]
        %v985 = vld [vmem:[#allocation9 + $0x90] sm:$0xff]
        %v986 = vld [vmem:[#allocation9 + $0x98] sm:$0xff]
        %v987 = vld [vmem:[#allocation9 + $0xa0] sm:$0xff]
        %v988 = vld [vmem:[#allocation9 + $0xa8] sm:$0xff]
        %v989 = vld [vmem:[#allocation9 + $0xb0] sm:$0xff]
        %v990 = vld [vmem:[#allocation9 + $0xb8] sm:$0xff]
        %v991 = vld [vmem:[#allocation9 + $0xc0] sm:$0xff]
        %v992 = vld [vmem:[#allocation9 + $0xc8] sm:$0xff]
        %v993 = vld [vmem:[#allocation9 + $0xd0] sm:$0xff]
        %v994 = vld [vmem:[#allocation9 + $0xd8] sm:$0xff]
        %v995 = vld [vmem:[#allocation9 + $0xe0] sm:$0xff]
        %v996 = vld [vmem:[#allocation9 + $0xe8] sm:$0xff]
        %v997 = vld [vmem:[#allocation9 + $0xf0] sm:$0xff]
        %v998 = vld [vmem:[#allocation9 + $0xf8] sm:$0xff]
        %v999 = vld [vmem:[#allocation9 + $0x100] sm:$0xff]
        %v1000 = vld [vmem:[#allocation9 + $0x108] sm:$0xff]
        %v1001 = vld [vmem:[#allocation9 + $0x110] sm:$0xff]
        %v1002 = vld [vmem:[#allocation9 + $0x118] sm:$0xff]
        %v1003 = vld [vmem:[#allocation9 + $0x120] sm:$0xff]
        %v1004 = vld [vmem:[#allocation9 + $0x128] sm:$0xff]
        %v1005 = vld [vmem:[#allocation9 + $0x130] sm:$0xff]
        %v1006 = vld [vmem:[#allocation9 + $0x138] sm:$0xff]
        %v1007 = vld [vmem:[#allocation9 + $0x140] sm:$0xff]
        %v1008 = vld [vmem:[#allocation9 + $0x148] sm:$0xff]
        %v1009 = vld [vmem:[#allocation9 + $0x150] sm:$0xff]
        %v1010 = vld [vmem:[#allocation9 + $0x158] sm:$0xff]
        %v1011 = vld [vmem:[#allocation9 + $0x160] sm:$0xff]
        %v1012 = vld [vmem:[#allocation9 + $0x168] sm:$0xff]
        %v1013 = vld [vmem:[#allocation9 + $0x170] sm:$0xff]
        %v1014 = vld [vmem:[#allocation9 + $0x178] sm:$0xff]
        %v1015 = vld [vmem:[#allocation9 + $0x180] sm:$0xff]
        %v1016 = vld [vmem:[#allocation9 + $0x188] sm:$0xff]
        %v1017 = vld [vmem:[#allocation9 + $0x190] sm:$0xff]
        %v1018 = vld [vmem:[#allocation9 + $0x198] sm:$0xff]
        %v1019 = vld [vmem:[#allocation9 + $0x1a0] sm:$0xff]
        %v1020 = vld [vmem:[#allocation9 + $0x1a8] sm:$0xff]
        %v1021 = vld [vmem:[#allocation9 + $0x1b0] sm:$0xff]
        %v1022 = vld [vmem:[#allocation9 + $0x1b8] sm:$0xff]
        %v1023 = vld [vmem:[#allocation9 + $0x1c0] sm:$0xff]
        %v1024 = vld [vmem:[#allocation9 + $0x1c8] sm:$0xff]
        %v1025 = vld [vmem:[#allocation9 + $0x1d0] sm:$0xff]
        %v1026 = vld [vmem:[#allocation9 + $0x1d8] sm:$0xff]
        %v1027 = vld [vmem:[#allocation9 + $0x1e0] sm:$0xff]
        %v1028 = vld [vmem:[#allocation9 + $0x1e8] sm:$0xff]
        %v1029 = vld [vmem:[#allocation9 + $0x1f0] sm:$0xff]
        %v1030 = vld [vmem:[#allocation9 + $0x1f8] sm:$0xff]
        %v1031 = vld [vmem:[#allocation9 + $0x200] sm:$0xff]
        %v1032 = vld [vmem:[#allocation9 + $0x208] sm:$0xff]
        %v1033 = vld [vmem:[#allocation9 + $0x210] sm:$0xff]
        %v1034 = vld [vmem:[#allocation9 + $0x218] sm:$0xff]
        %v1035 = vld [vmem:[#allocation9 + $0x220] sm:$0xff]
        %v1036 = vld [vmem:[#allocation9 + $0x228] sm:$0xff]
        %v1037 = vld [vmem:[#allocation9 + $0x230] sm:$0xff]
        %v1038 = vld [vmem:[#allocation9 + $0x238] sm:$0xff]
        %v1039 = vld [vmem:[#allocation9 + $0x240] sm:$0xff]
        %v1040 = vld [vmem:[#allocation9 + $0x248] sm:$0xff]
        %v1041 = vld [vmem:[#allocation9 + $0x250] sm:$0xff]
        %v1042 = vld [vmem:[#allocation9 + $0x258] sm:$0xff]
        %v1043 = vld [vmem:[#allocation9 + $0x260] sm:$0xff]
        %v1044 = vld [vmem:[#allocation9 + $0x268] sm:$0xff]
        %v1045 = vld [vmem:[#allocation9 + $0x270] sm:$0xff]
        %v1046 = vld [vmem:[#allocation9 + $0x278] sm:$0xff]
        %v1047 = vld [vmem:[#allocation9 + $0x280] sm:$0xff]
        %v1048 = vld [vmem:[#allocation9 + $0x288] sm:$0xff]
        %v1049 = vld [vmem:[#allocation9 + $0x290] sm:$0xff]
        %v1050 = vld [vmem:[#allocation9 + $0x298] sm:$0xff]
        %v1051 = vld [vmem:[#allocation9 + $0x2a0] sm:$0xff]
        %v1052 = vld [vmem:[#allocation9 + $0x2a8] sm:$0xff]
        %v1053 = vld [vmem:[#allocation9 + $0x2b0] sm:$0xff]
        %v1054 = vld [vmem:[#allocation9 + $0x2b8] sm:$0xff]
        %v1055 = vld [vmem:[#allocation9 + $0x2c0] sm:$0xff]
        %v1056 = vld [vmem:[#allocation9 + $0x2c8] sm:$0xff]
        %v1057 = vld [vmem:[#allocation9 + $0x2d0] sm:$0xff]
        %v1058 = vld [vmem:[#allocation9 + $0x2d8] sm:$0xff]
        %v1059 = vld [vmem:[#allocation9 + $0x2e0] sm:$0xff]
        %v1060 = vld [vmem:[#allocation9 + $0x2e8] sm:$0xff]
        %v1061 = vld [vmem:[#allocation9 + $0x2f0] sm:$0xff]
        %v1062 = vld [vmem:[#allocation9 + $0x2f8] sm:$0xff]
        %v1063 = vld [vmem:[#allocation9 + $0x300] sm:$0xff]
        %v1064 = vld [vmem:[#allocation9 + $0x308] sm:$0xff]
        %v1065 = vld [vmem:[#allocation9 + $0x310] sm:$0xff]
        %v1066 = vld [vmem:[#allocation9 + $0x318] sm:$0xff]
        %v1067 = vld [vmem:[#allocation9 + $0x320] sm:$0xff]
        %v1068 = vld [vmem:[#allocation9 + $0x328] sm:$0xff]
        %v1069 = vld [vmem:[#allocation9 + $0x330] sm:$0xff]
        %v1070 = vld [vmem:[#allocation9 + $0x338] sm:$0xff]
        %v1071 = vld [vmem:[#allocation9 + $0x340] sm:$0xff]
        %v1072 = vld [vmem:[#allocation9 + $0x348] sm:$0xff]
        %v1073 = vld [vmem:[#allocation9 + $0x350] sm:$0xff]
        %v1074 = vld [vmem:[#allocation9 + $0x358] sm:$0xff]
        %v1075 = vld [vmem:[#allocation9 + $0x360] sm:$0xff]
        %v1076 = vld [vmem:[#allocation9 + $0x368] sm:$0xff]
        %v1077 = vld [vmem:[#allocation9 + $0x370] sm:$0xff]
        %v1078 = vld [vmem:[#allocation9 + $0x378] sm:$0xff]
        %v1079 = vld [vmem:[#allocation9 + $0x380] sm:$0xff]
        %v1080 = vld [vmem:[#allocation9 + $0x388] sm:$0xff]
        %v1081 = vld [vmem:[#allocation9 + $0x390] sm:$0xff]
        %v1082 = vld [vmem:[#allocation9 + $0x398] sm:$0xff]
        %v1083 = vld [vmem:[#allocation9 + $0x3a0] sm:$0xff]
        %v1084 = vld [vmem:[#allocation9 + $0x3a8] sm:$0xff]
        %v1085 = vld [vmem:[#allocation9 + $0x3b0] sm:$0xff]
        %v1086 = vld [vmem:[#allocation9 + $0x3b8] sm:$0xff]
        %v1087 = vld [vmem:[#allocation9 + $0x3c0] sm:$0xff]
        %v1088 = vld [vmem:[#allocation9 + $0x3c8] sm:$0xff]
        %v1089 = vld [vmem:[#allocation9 + $0x3d0] sm:$0xff]
        %v1090 = vld [vmem:[#allocation9 + $0x3d8] sm:$0xff]
        %v1091 = vld [vmem:[#allocation9 + $0x3e0] sm:$0xff]
        %v1092 = vld [vmem:[#allocation9 + $0x3e8] sm:$0xff]
        %v1093 = vld [vmem:[#allocation9 + $0x3f0] sm:$0xff]
        %v1094 = vld [vmem:[#allocation9 + $0x3f8] sm:$0xff]
        %v1095 = vld [vmem:[#allocation10] sm:$0xf]
        %v1097 = vperm.slane %v1095, 0
        %v1098 = vperm.slane %v1095, 1
        %v1099 = vperm.slane %v1095, 2
        %v1100 = vperm.slane %v1095, 3
        %v1233 = vunpack.c.l.b16 %v967
        %v1234 = vunpack.c.h.b16 %v967
        %v1235 = vunpack.c.l.b16 %v968
        %v1236 = vunpack.c.h.b16 %v968
        %v1237 = vunpack.c.l.b16 %v969
        %v1238 = vunpack.c.h.b16 %v969
        %v1239 = vunpack.c.l.b16 %v970
        %v1240 = vunpack.c.h.b16 %v970
        %v1241 = vunpack.c.l.b16 %v971
        %v1242 = vunpack.c.h.b16 %v971
        %v1243 = vunpack.c.l.b16 %v972
        %v1244 = vunpack.c.h.b16 %v972
        %v1245 = vunpack.c.l.b16 %v973
        %v1246 = vunpack.c.h.b16 %v973
        %v1247 = vunpack.c.l.b16 %v974
        %v1248 = vunpack.c.h.b16 %v974
        %v1249 = vunpack.c.l.b16 %v975
        %v1250 = vunpack.c.h.b16 %v975
        %v1251 = vunpack.c.l.b16 %v976
        %v1252 = vunpack.c.h.b16 %v976
        %v1253 = vunpack.c.l.b16 %v977
        %v1254 = vunpack.c.h.b16 %v977
        %v1255 = vunpack.c.l.b16 %v978
        %v1256 = vunpack.c.h.b16 %v978
        %v1257 = vunpack.c.l.b16 %v979
        %v1258 = vunpack.c.h.b16 %v979
        %v1259 = vunpack.c.l.b16 %v980
        %v1260 = vunpack.c.h.b16 %v980
        %v1261 = vunpack.c.l.b16 %v981
        %v1262 = vunpack.c.h.b16 %v981
        %v1263 = vunpack.c.l.b16 %v982
        %v1264 = vunpack.c.h.b16 %v982
        %v1265 = vunpack.c.l.b16 %v983
        %v1266 = vunpack.c.h.b16 %v983
        %v1267 = vunpack.c.l.b16 %v984
        %v1268 = vunpack.c.h.b16 %v984
        %v1269 = vunpack.c.l.b16 %v985
        %v1270 = vunpack.c.h.b16 %v985
        %v1271 = vunpack.c.l.b16 %v986
        %v1272 = vunpack.c.h.b16 %v986
        %v1273 = vunpack.c.l.b16 %v987
        %v1274 = vunpack.c.h.b16 %v987
        %v1275 = vunpack.c.l.b16 %v988
        %v1276 = vunpack.c.h.b16 %v988
        %v1277 = vunpack.c.l.b16 %v989
        %v1278 = vunpack.c.h.b16 %v989
        %v1279 = vunpack.c.l.b16 %v990
        %v1280 = vunpack.c.h.b16 %v990
        %v1281 = vunpack.c.l.b16 %v991
        %v1282 = vunpack.c.h.b16 %v991
        %v1283 = vunpack.c.l.b16 %v992
        %v1284 = vunpack.c.h.b16 %v992
        %v1285 = vunpack.c.l.b16 %v993
        %v1286 = vunpack.c.h.b16 %v993
        %v1287 = vunpack.c.l.b16 %v994
        %v1288 = vunpack.c.h.b16 %v994
        %v1289 = vunpack.c.l.b16 %v995
        %v1290 = vunpack.c.h.b16 %v995
        %v1291 = vunpack.c.l.b16 %v996
        %v1292 = vunpack.c.h.b16 %v996
        %v1293 = vunpack.c.l.b16 %v997
        %v1294 = vunpack.c.h.b16 %v997
        %v1295 = vunpack.c.l.b16 %v998
        %v1296 = vunpack.c.h.b16 %v998
        %v1297 = vunpack.c.l.b16 %v999
        %v1298 = vunpack.c.h.b16 %v999
        %v1299 = vunpack.c.l.b16 %v1000
        %v1300 = vunpack.c.h.b16 %v1000
        %v1301 = vunpack.c.l.b16 %v1001
        %v1302 = vunpack.c.h.b16 %v1001
        %v1303 = vunpack.c.l.b16 %v1002
        %v1304 = vunpack.c.h.b16 %v1002
        %v1305 = vunpack.c.l.b16 %v1003
        %v1306 = vunpack.c.h.b16 %v1003
        %v1307 = vunpack.c.l.b16 %v1004
        %v1308 = vunpack.c.h.b16 %v1004
        %v1309 = vunpack.c.l.b16 %v1005
        %v1310 = vunpack.c.h.b16 %v1005
        %v1311 = vunpack.c.l.b16 %v1006
        %v1312 = vunpack.c.h.b16 %v1006
        %v1313 = vunpack.c.l.b16 %v1007
        %v1314 = vunpack.c.h.b16 %v1007
        %v1315 = vunpack.c.l.b16 %v1008
        %v1316 = vunpack.c.h.b16 %v1008
        %v1317 = vunpack.c.l.b16 %v1009
        %v1318 = vunpack.c.h.b16 %v1009
        %v1319 = vunpack.c.l.b16 %v1010
        %v1320 = vunpack.c.h.b16 %v1010
        %v1321 = vunpack.c.l.b16 %v1011
        %v1322 = vunpack.c.h.b16 %v1011
        %v1323 = vunpack.c.l.b16 %v1012
        %v1324 = vunpack.c.h.b16 %v1012
        %v1325 = vunpack.c.l.b16 %v1013
        %v1326 = vunpack.c.h.b16 %v1013
        %v1327 = vunpack.c.l.b16 %v1014
        %v1328 = vunpack.c.h.b16 %v1014
        %v1329 = vunpack.c.l.b16 %v1015
        %v1330 = vunpack.c.h.b16 %v1015
        %v1331 = vunpack.c.l.b16 %v1016
        %v1332 = vunpack.c.h.b16 %v1016
        %v1333 = vunpack.c.l.b16 %v1017
        %v1334 = vunpack.c.h.b16 %v1017
        %v1335 = vunpack.c.l.b16 %v1018
        %v1336 = vunpack.c.h.b16 %v1018
        %v1337 = vunpack.c.l.b16 %v1019
        %v1338 = vunpack.c.h.b16 %v1019
        %v1339 = vunpack.c.l.b16 %v1020
        %v1340 = vunpack.c.h.b16 %v1020
        %v1341 = vunpack.c.l.b16 %v1021
        %v1342 = vunpack.c.h.b16 %v1021
        %v1343 = vunpack.c.l.b16 %v1022
        %v1344 = vunpack.c.h.b16 %v1022
        %v1345 = vunpack.c.l.b16 %v1023
        %v1346 = vunpack.c.h.b16 %v1023
        %v1347 = vunpack.c.l.b16 %v1024
        %v1348 = vunpack.c.h.b16 %v1024
        %v1349 = vunpack.c.l.b16 %v1025
        %v1350 = vunpack.c.h.b16 %v1025
        %v1351 = vunpack.c.l.b16 %v1026
        %v1352 = vunpack.c.h.b16 %v1026
        %v1353 = vunpack.c.l.b16 %v1027
        %v1354 = vunpack.c.h.b16 %v1027
        %v1355 = vunpack.c.l.b16 %v1028
        %v1356 = vunpack.c.h.b16 %v1028
        %v1357 = vunpack.c.l.b16 %v1029
        %v1358 = vunpack.c.h.b16 %v1029
        %v1359 = vunpack.c.l.b16 %v1030
        %v1360 = vunpack.c.h.b16 %v1030
        %v1361 = vunpack.c.l.b16 %v1031
        %v1362 = vunpack.c.h.b16 %v1031
        %v1363 = vunpack.c.l.b16 %v1032
        %v1364 = vunpack.c.h.b16 %v1032
        %v1365 = vunpack.c.l.b16 %v1033
        %v1366 = vunpack.c.h.b16 %v1033
        %v1367 = vunpack.c.l.b16 %v1034
        %v1368 = vunpack.c.h.b16 %v1034
        %v1369 = vunpack.c.l.b16 %v1035
        %v1370 = vunpack.c.h.b16 %v1035
        %v1371 = vunpack.c.l.b16 %v1036
        %v1372 = vunpack.c.h.b16 %v1036
        %v1373 = vunpack.c.l.b16 %v1037
        %v1374 = vunpack.c.h.b16 %v1037
        %v1375 = vunpack.c.l.b16 %v1038
        %v1376 = vunpack.c.h.b16 %v1038
        %v1377 = vunpack.c.l.b16 %v1039
        %v1378 = vunpack.c.h.b16 %v1039
        %v1379 = vunpack.c.l.b16 %v1040
        %v1380 = vunpack.c.h.b16 %v1040
        %v1381 = vunpack.c.l.b16 %v1041
        %v1382 = vunpack.c.h.b16 %v1041
        %v1383 = vunpack.c.l.b16 %v1042
        %v1384 = vunpack.c.h.b16 %v1042
        %v1385 = vunpack.c.l.b16 %v1043
        %v1386 = vunpack.c.h.b16 %v1043
        %v1387 = vunpack.c.l.b16 %v1044
        %v1388 = vunpack.c.h.b16 %v1044
        %v1389 = vunpack.c.l.b16 %v1045
        %v1390 = vunpack.c.h.b16 %v1045
        %v1391 = vunpack.c.l.b16 %v1046
        %v1392 = vunpack.c.h.b16 %v1046
        %v1393 = vunpack.c.l.b16 %v1047
        %v1394 = vunpack.c.h.b16 %v1047
        %v1395 = vunpack.c.l.b16 %v1048
        %v1396 = vunpack.c.h.b16 %v1048
        %v1397 = vunpack.c.l.b16 %v1049
        %v1398 = vunpack.c.h.b16 %v1049
        %v1399 = vunpack.c.l.b16 %v1050
        %v1400 = vunpack.c.h.b16 %v1050
        %v1401 = vunpack.c.l.b16 %v1051
        %v1402 = vunpack.c.h.b16 %v1051
        %v1403 = vunpack.c.l.b16 %v1052
        %v1404 = vunpack.c.h.b16 %v1052
        %v1405 = vunpack.c.l.b16 %v1053
        %v1406 = vunpack.c.h.b16 %v1053
        %v1407 = vunpack.c.l.b16 %v1054
        %v1408 = vunpack.c.h.b16 %v1054
        %v1409 = vunpack.c.l.b16 %v1055
        %v1410 = vunpack.c.h.b16 %v1055
        %v1411 = vunpack.c.l.b16 %v1056
        %v1412 = vunpack.c.h.b16 %v1056
        %v1413 = vunpack.c.l.b16 %v1057
        %v1414 = vunpack.c.h.b16 %v1057
        %v1415 = vunpack.c.l.b16 %v1058
        %v1416 = vunpack.c.h.b16 %v1058
        %v1417 = vunpack.c.l.b16 %v1059
        %v1418 = vunpack.c.h.b16 %v1059
        %v1419 = vunpack.c.l.b16 %v1060
        %v1420 = vunpack.c.h.b16 %v1060
        %v1421 = vunpack.c.l.b16 %v1061
        %v1422 = vunpack.c.h.b16 %v1061
        %v1423 = vunpack.c.l.b16 %v1062
        %v1424 = vunpack.c.h.b16 %v1062
        %v1425 = vunpack.c.l.b16 %v1063
        %v1426 = vunpack.c.h.b16 %v1063
        %v1427 = vunpack.c.l.b16 %v1064
        %v1428 = vunpack.c.h.b16 %v1064
        %v1429 = vunpack.c.l.b16 %v1065
        %v1430 = vunpack.c.h.b16 %v1065
        %v1431 = vunpack.c.l.b16 %v1066
        %v1432 = vunpack.c.h.b16 %v1066
        %v1433 = vunpack.c.l.b16 %v1067
        %v1434 = vunpack.c.h.b16 %v1067
        %v1435 = vunpack.c.l.b16 %v1068
        %v1436 = vunpack.c.h.b16 %v1068
        %v1437 = vunpack.c.l.b16 %v1069
        %v1438 = vunpack.c.h.b16 %v1069
        %v1439 = vunpack.c.l.b16 %v1070
        %v1440 = vunpack.c.h.b16 %v1070
        %v1441 = vunpack.c.l.b16 %v1071
        %v1442 = vunpack.c.h.b16 %v1071
        %v1443 = vunpack.c.l.b16 %v1072
        %v1444 = vunpack.c.h.b16 %v1072
        %v1445 = vunpack.c.l.b16 %v1073
        %v1446 = vunpack.c.h.b16 %v1073
        %v1447 = vunpack.c.l.b16 %v1074
        %v1448 = vunpack.c.h.b16 %v1074
        %v1449 = vunpack.c.l.b16 %v1075
        %v1450 = vunpack.c.h.b16 %v1075
        %v1451 = vunpack.c.l.b16 %v1076
        %v1452 = vunpack.c.h.b16 %v1076
        %v1453 = vunpack.c.l.b16 %v1077
        %v1454 = vunpack.c.h.b16 %v1077
        %v1455 = vunpack.c.l.b16 %v1078
        %v1456 = vunpack.c.h.b16 %v1078
        %v1457 = vunpack.c.l.b16 %v1079
        %v1458 = vunpack.c.h.b16 %v1079
        %v1459 = vunpack.c.l.b16 %v1080
        %v1460 = vunpack.c.h.b16 %v1080
        %v1461 = vunpack.c.l.b16 %v1081
        %v1462 = vunpack.c.h.b16 %v1081
        %v1463 = vunpack.c.l.b16 %v1082
        %v1464 = vunpack.c.h.b16 %v1082
        %v1465 = vunpack.c.l.b16 %v1083
        %v1466 = vunpack.c.h.b16 %v1083
        %v1467 = vunpack.c.l.b16 %v1084
        %v1468 = vunpack.c.h.b16 %v1084
        %v1469 = vunpack.c.l.b16 %v1085
        %v1470 = vunpack.c.h.b16 %v1085
        %v1471 = vunpack.c.l.b16 %v1086
        %v1472 = vunpack.c.h.b16 %v1086
        %v1473 = vunpack.c.l.b16 %v1087
        %v1474 = vunpack.c.h.b16 %v1087
        %v1475 = vunpack.c.l.b16 %v1088
        %v1476 = vunpack.c.h.b16 %v1088
        %v1477 = vunpack.c.l.b16 %v1089
        %v1478 = vunpack.c.h.b16 %v1089
        %v1479 = vunpack.c.l.b16 %v1090
        %v1480 = vunpack.c.h.b16 %v1090
        %v1481 = vunpack.c.l.b16 %v1091
        %v1482 = vunpack.c.h.b16 %v1091
        %v1483 = vunpack.c.l.b16 %v1092
        %v1484 = vunpack.c.h.b16 %v1092
        %v1485 = vunpack.c.l.b16 %v1093
        %v1486 = vunpack.c.h.b16 %v1093
        %v1487 = vunpack.c.l.b16 %v1094
        %v1488 = vunpack.c.h.b16 %v1094
        %v1489 = vpack.c.b16 %v1237, %v1233
        %v1490 = vpack.c.b16 %v1238, %v1234
        %v1491 = vpack.c.b16 %v1239, %v1235
        %v1492 = vpack.c.b16 %v1240, %v1236
        %v1493 = vpack.c.b16 %v1245, %v1241
        %v1494 = vpack.c.b16 %v1246, %v1242
        %v1495 = vpack.c.b16 %v1247, %v1243
        %v1496 = vpack.c.b16 %v1248, %v1244
        %v1497 = vpack.c.b16 %v1253, %v1249
        %v1498 = vpack.c.b16 %v1254, %v1250
        %v1499 = vpack.c.b16 %v1255, %v1251
        %v1500 = vpack.c.b16 %v1256, %v1252
        %v1501 = vpack.c.b16 %v1261, %v1257
        %v1502 = vpack.c.b16 %v1262, %v1258
        %v1503 = vpack.c.b16 %v1263, %v1259
        %v1504 = vpack.c.b16 %v1264, %v1260
        %v1505 = vpack.c.b16 %v1269, %v1265
        %v1506 = vpack.c.b16 %v1270, %v1266
        %v1507 = vpack.c.b16 %v1271, %v1267
        %v1508 = vpack.c.b16 %v1272, %v1268
        %v1509 = vpack.c.b16 %v1277, %v1273
        %v1510 = vpack.c.b16 %v1278, %v1274
        %v1511 = vpack.c.b16 %v1279, %v1275
        %v1512 = vpack.c.b16 %v1280, %v1276
        %v1513 = vpack.c.b16 %v1285, %v1281
        %v1514 = vpack.c.b16 %v1286, %v1282
        %v1515 = vpack.c.b16 %v1287, %v1283
        %v1516 = vpack.c.b16 %v1288, %v1284
        %v1517 = vpack.c.b16 %v1293, %v1289
        %v1518 = vpack.c.b16 %v1294, %v1290
        %v1519 = vpack.c.b16 %v1295, %v1291
        %v1520 = vpack.c.b16 %v1296, %v1292
        %v1521 = vpack.c.b16 %v1301, %v1297
        %v1522 = vpack.c.b16 %v1302, %v1298
        %v1523 = vpack.c.b16 %v1303, %v1299
        %v1524 = vpack.c.b16 %v1304, %v1300
        %v1525 = vpack.c.b16 %v1309, %v1305
        %v1526 = vpack.c.b16 %v1310, %v1306
        %v1527 = vpack.c.b16 %v1311, %v1307
        %v1528 = vpack.c.b16 %v1312, %v1308
        %v1529 = vpack.c.b16 %v1317, %v1313
        %v1530 = vpack.c.b16 %v1318, %v1314
        %v1531 = vpack.c.b16 %v1319, %v1315
        %v1532 = vpack.c.b16 %v1320, %v1316
        %v1533 = vpack.c.b16 %v1325, %v1321
        %v1534 = vpack.c.b16 %v1326, %v1322
        %v1535 = vpack.c.b16 %v1327, %v1323
        %v1536 = vpack.c.b16 %v1328, %v1324
        %v1537 = vpack.c.b16 %v1333, %v1329
        %v1538 = vpack.c.b16 %v1334, %v1330
        %v1539 = vpack.c.b16 %v1335, %v1331
        %v1540 = vpack.c.b16 %v1336, %v1332
        %v1541 = vpack.c.b16 %v1341, %v1337
        %v1542 = vpack.c.b16 %v1342, %v1338
        %v1543 = vpack.c.b16 %v1343, %v1339
        %v1544 = vpack.c.b16 %v1344, %v1340
        %v1545 = vpack.c.b16 %v1349, %v1345
        %v1546 = vpack.c.b16 %v1350, %v1346
        %v1547 = vpack.c.b16 %v1351, %v1347
        %v1548 = vpack.c.b16 %v1352, %v1348
        %v1549 = vpack.c.b16 %v1357, %v1353
        %v1550 = vpack.c.b16 %v1358, %v1354
        %v1551 = vpack.c.b16 %v1359, %v1355
        %v1552 = vpack.c.b16 %v1360, %v1356
        %v1553 = vpack.c.b16 %v1365, %v1361
        %v1554 = vpack.c.b16 %v1366, %v1362
        %v1555 = vpack.c.b16 %v1367, %v1363
        %v1556 = vpack.c.b16 %v1368, %v1364
        %v1557 = vpack.c.b16 %v1373, %v1369
        %v1558 = vpack.c.b16 %v1374, %v1370
        %v1559 = vpack.c.b16 %v1375, %v1371
        %v1560 = vpack.c.b16 %v1376, %v1372
        %v1561 = vpack.c.b16 %v1381, %v1377
        %v1562 = vpack.c.b16 %v1382, %v1378
        %v1563 = vpack.c.b16 %v1383, %v1379
        %v1564 = vpack.c.b16 %v1384, %v1380
        %v1565 = vpack.c.b16 %v1389, %v1385
        %v1566 = vpack.c.b16 %v1390, %v1386
        %v1567 = vpack.c.b16 %v1391, %v1387
        %v1568 = vpack.c.b16 %v1392, %v1388
        %v1569 = vpack.c.b16 %v1397, %v1393
        %v1570 = vpack.c.b16 %v1398, %v1394
        %v1571 = vpack.c.b16 %v1399, %v1395
        %v1572 = vpack.c.b16 %v1400, %v1396
        %v1573 = vpack.c.b16 %v1405, %v1401
        %v1574 = vpack.c.b16 %v1406, %v1402
        %v1575 = vpack.c.b16 %v1407, %v1403
        %v1576 = vpack.c.b16 %v1408, %v1404
        %v1577 = vpack.c.b16 %v1413, %v1409
        %v1578 = vpack.c.b16 %v1414, %v1410
        %v1579 = vpack.c.b16 %v1415, %v1411
        %v1580 = vpack.c.b16 %v1416, %v1412
        %v1581 = vpack.c.b16 %v1421, %v1417
        %v1582 = vpack.c.b16 %v1422, %v1418
        %v1583 = vpack.c.b16 %v1423, %v1419
        %v1584 = vpack.c.b16 %v1424, %v1420
        %v1585 = vpack.c.b16 %v1429, %v1425
        %v1586 = vpack.c.b16 %v1430, %v1426
        %v1587 = vpack.c.b16 %v1431, %v1427
        %v1588 = vpack.c.b16 %v1432, %v1428
        %v1589 = vpack.c.b16 %v1437, %v1433
        %v1590 = vpack.c.b16 %v1438, %v1434
        %v1591 = vpack.c.b16 %v1439, %v1435
        %v1592 = vpack.c.b16 %v1440, %v1436
        %v1593 = vpack.c.b16 %v1445, %v1441
        %v1594 = vpack.c.b16 %v1446, %v1442
        %v1595 = vpack.c.b16 %v1447, %v1443
        %v1596 = vpack.c.b16 %v1448, %v1444
        %v1597 = vpack.c.b16 %v1453, %v1449
        %v1598 = vpack.c.b16 %v1454, %v1450
        %v1599 = vpack.c.b16 %v1455, %v1451
        %v1600 = vpack.c.b16 %v1456, %v1452
        %v1601 = vpack.c.b16 %v1461, %v1457
        %v1602 = vpack.c.b16 %v1462, %v1458
        %v1603 = vpack.c.b16 %v1463, %v1459
        %v1604 = vpack.c.b16 %v1464, %v1460
        %v1605 = vpack.c.b16 %v1469, %v1465
        %v1606 = vpack.c.b16 %v1470, %v1466
        %v1607 = vpack.c.b16 %v1471, %v1467
        %v1608 = vpack.c.b16 %v1472, %v1468
        %v1609 = vpack.c.b16 %v1477, %v1473
        %v1610 = vpack.c.b16 %v1478, %v1474
        %v1611 = vpack.c.b16 %v1479, %v1475
        %v1612 = vpack.c.b16 %v1480, %v1476
        %v1613 = vpack.c.b16 %v1485, %v1481
        %v1614 = vpack.c.b16 %v1486, %v1482
        %v1615 = vpack.c.b16 %v1487, %v1483
        %v1616 = vpack.c.b16 %v1488, %v1484
        %1745 = vmatpush.bf16.msra.mxu0 %v1517
        %1746 = vmatpush.bf16.msra.mxu0 %v1513
        %1747 = vmatpush.bf16.msra.mxu0 %v1509
        %1748 = vmatpush.bf16.msra.mxu0 %v1505
        %1749 = vmatpush.bf16.msra.mxu0 %v1501
        %1750 = vmatpush.bf16.msra.mxu0 %v1497
        %1751 = vmatpush.bf16.msra.mxu0 %v1493
        %1752 = vmatpush.bf16.msra.mxu0 %v1489
        %1753 = vmatmul.bf16.gmra.mxu0 %v701
        %v1754 = vpop.f32.mrf.mxu0
        %v1755 = vadd.f32 %v1097, %v1754
        %v1756 = vpop.f32.mrf.mxu0
        %v1757 = vadd.f32 %v1097, %v1756
        %1758 = vdwg.mxu0
        %1759 = vmatpush.bf16.msra.mxu0 %v1549
        %1760 = vmatpush.bf16.msra.mxu0 %v1545
        %1761 = vmatpush.bf16.msra.mxu0 %v1541
        %1762 = vmatpush.bf16.msra.mxu0 %v1537
        %1763 = vmatpush.bf16.msra.mxu0 %v1533
        %1764 = vmatpush.bf16.msra.mxu0 %v1529
        %1765 = vmatpush.bf16.msra.mxu0 %v1525
        %1766 = vmatpush.bf16.msra.mxu0 %v1521
        %1767 = vmatmul.bf16.gmra.mxu0 %v702
        %v1768 = vpop.f32.mrf.mxu0
        %v1769 = vadd.f32 %v1755, %v1768
        %v1770 = vpop.f32.mrf.mxu0
        %v1771 = vadd.f32 %v1757, %v1770
        %1772 = vdwg.mxu0
        %1773 = vmatpush.bf16.msra.mxu0 %v1581
        %1774 = vmatpush.bf16.msra.mxu0 %v1577
        %1775 = vmatpush.bf16.msra.mxu0 %v1573
        %1776 = vmatpush.bf16.msra.mxu0 %v1569
        %1777 = vmatpush.bf16.msra.mxu0 %v1565
        %1778 = vmatpush.bf16.msra.mxu0 %v1561
        %1779 = vmatpush.bf16.msra.mxu0 %v1557
        %1780 = vmatpush.bf16.msra.mxu0 %v1553
        %1781 = vmatmul.bf16.gmra.mxu0 %v703
        %v1782 = vpop.f32.mrf.mxu0
        %v1783 = vadd.f32 %v1769, %v1782
        %v1784 = vpop.f32.mrf.mxu0
        %v1785 = vadd.f32 %v1771, %v1784
        %1786 = vdwg.mxu0
        %1787 = vmatpush.bf16.msra.mxu0 %v1613
        %1788 = vmatpush.bf16.msra.mxu0 %v1609
        %1789 = vmatpush.bf16.msra.mxu0 %v1605
        %1790 = vmatpush.bf16.msra.mxu0 %v1601
        %1791 = vmatpush.bf16.msra.mxu0 %v1597
        %1792 = vmatpush.bf16.msra.mxu0 %v1593
        %1793 = vmatpush.bf16.msra.mxu0 %v1589
        %1794 = vmatpush.bf16.msra.mxu0 %v1585
        %1795 = vmatmul.bf16.gmra.mxu0 %v704
        %v1796 = vpop.f32.mrf.mxu0
        %v1797 = vadd.f32 %v1783, %v1796
        %v1798 = vpop.f32.mrf.mxu0
        %v1799 = vadd.f32 %v1785, %v1798
        %1800 = vdwg.mxu0
        %1801 = vmatpush.bf16.msra.mxu0 %v1518
        %1802 = vmatpush.bf16.msra.mxu0 %v1514
        %1803 = vmatpush.bf16.msra.mxu0 %v1510
        %1804 = vmatpush.bf16.msra.mxu0 %v1506
        %1805 = vmatpush.bf16.msra.mxu0 %v1502
        %1806 = vmatpush.bf16.msra.mxu0 %v1498
        %1807 = vmatpush.bf16.msra.mxu0 %v1494
        %1808 = vmatpush.bf16.msra.mxu0 %v1490
        %1809 = vmatmul.bf16.gmra.mxu0 %v701
        %v1810 = vpop.f32.mrf.mxu0
        %v1811 = vadd.f32 %v1098, %v1810
        %v1812 = vpop.f32.mrf.mxu0
        %v1813 = vadd.f32 %v1098, %v1812
        %1814 = vdwg.mxu0
        %1815 = vmatpush.bf16.msra.mxu0 %v1550
        %1816 = vmatpush.bf16.msra.mxu0 %v1546
        %1817 = vmatpush.bf16.msra.mxu0 %v1542
        %1818 = vmatpush.bf16.msra.mxu0 %v1538
        %1819 = vmatpush.bf16.msra.mxu0 %v1534
        %1820 = vmatpush.bf16.msra.mxu0 %v1530
        %1821 = vmatpush.bf16.msra.mxu0 %v1526
        %1822 = vmatpush.bf16.msra.mxu0 %v1522
        %1823 = vmatmul.bf16.gmra.mxu0 %v702
        %v1824 = vpop.f32.mrf.mxu0
        %v1825 = vadd.f32 %v1811, %v1824
        %v1826 = vpop.f32.mrf.mxu0
        %v1827 = vadd.f32 %v1813, %v1826
        %1828 = vdwg.mxu0
        %1829 = vmatpush.bf16.msra.mxu0 %v1582
        %1830 = vmatpush.bf16.msra.mxu0 %v1578
        %1831 = vmatpush.bf16.msra.mxu0 %v1574
        %1832 = vmatpush.bf16.msra.mxu0 %v1570
        %1833 = vmatpush.bf16.msra.mxu0 %v1566
        %1834 = vmatpush.bf16.msra.mxu0 %v1562
        %1835 = vmatpush.bf16.msra.mxu0 %v1558
        %1836 = vmatpush.bf16.msra.mxu0 %v1554
        %1837 = vmatmul.bf16.gmra.mxu0 %v703
        %v1838 = vpop.f32.mrf.mxu0
        %v1839 = vadd.f32 %v1825, %v1838
        %v1840 = vpop.f32.mrf.mxu0
        %v1841 = vadd.f32 %v1827, %v1840
        %1842 = vdwg.mxu0
        %1843 = vmatpush.bf16.msra.mxu0 %v1614
        %1844 = vmatpush.bf16.msra.mxu0 %v1610
        %1845 = vmatpush.bf16.msra.mxu0 %v1606
        %1846 = vmatpush.bf16.msra.mxu0 %v1602
        %1847 = vmatpush.bf16.msra.mxu0 %v1598
        %1848 = vmatpush.bf16.msra.mxu0 %v1594
        %1849 = vmatpush.bf16.msra.mxu0 %v1590
        %1850 = vmatpush.bf16.msra.mxu0 %v1586
        %1851 = vmatmul.bf16.gmra.mxu0 %v704
        %v1852 = vpop.f32.mrf.mxu0
        %v1853 = vadd.f32 %v1839, %v1852
        %v1854 = vpop.f32.mrf.mxu0
        %v1855 = vadd.f32 %v1841, %v1854
        %1856 = vdwg.mxu0
        %1857 = vmatpush.bf16.msra.mxu0 %v1519
        %1858 = vmatpush.bf16.msra.mxu0 %v1515
        %1859 = vmatpush.bf16.msra.mxu0 %v1511
        %1860 = vmatpush.bf16.msra.mxu0 %v1507
        %1861 = vmatpush.bf16.msra.mxu0 %v1503
        %1862 = vmatpush.bf16.msra.mxu0 %v1499
        %1863 = vmatpush.bf16.msra.mxu0 %v1495
        %1864 = vmatpush.bf16.msra.mxu0 %v1491
        %1865 = vmatmul.bf16.gmra.mxu0 %v701
        %v1866 = vpop.f32.mrf.mxu0
        %v1867 = vadd.f32 %v1099, %v1866
        %v1868 = vpop.f32.mrf.mxu0
        %v1869 = vadd.f32 %v1099, %v1868
        %1870 = vdwg.mxu0
        %1871 = vmatpush.bf16.msra.mxu0 %v1551
        %1872 = vmatpush.bf16.msra.mxu0 %v1547
        %1873 = vmatpush.bf16.msra.mxu0 %v1543
        %1874 = vmatpush.bf16.msra.mxu0 %v1539
        %1875 = vmatpush.bf16.msra.mxu0 %v1535
        %1876 = vmatpush.bf16.msra.mxu0 %v1531
        %1877 = vmatpush.bf16.msra.mxu0 %v1527
        %1878 = vmatpush.bf16.msra.mxu0 %v1523
        %1879 = vmatmul.bf16.gmra.mxu0 %v702
        %v1880 = vpop.f32.mrf.mxu0
        %v1881 = vadd.f32 %v1867, %v1880
        %v1882 = vpop.f32.mrf.mxu0
        %v1883 = vadd.f32 %v1869, %v1882
        %1884 = vdwg.mxu0
        %1885 = vmatpush.bf16.msra.mxu0 %v1583
        %1886 = vmatpush.bf16.msra.mxu0 %v1579
        %1887 = vmatpush.bf16.msra.mxu0 %v1575
        %1888 = vmatpush.bf16.msra.mxu0 %v1571
        %1889 = vmatpush.bf16.msra.mxu0 %v1567
        %1890 = vmatpush.bf16.msra.mxu0 %v1563
        %1891 = vmatpush.bf16.msra.mxu0 %v1559
        %1892 = vmatpush.bf16.msra.mxu0 %v1555
        %1893 = vmatmul.bf16.gmra.mxu0 %v703
        %v1894 = vpop.f32.mrf.mxu0
        %v1895 = vadd.f32 %v1881, %v1894
        %v1896 = vpop.f32.mrf.mxu0
        %v1897 = vadd.f32 %v1883, %v1896
        %1898 = vdwg.mxu0
        %1899 = vmatpush.bf16.msra.mxu0 %v1615
        %1900 = vmatpush.bf16.msra.mxu0 %v1611
        %1901 = vmatpush.bf16.msra.mxu0 %v1607
        %1902 = vmatpush.bf16.msra.mxu0 %v1603
        %1903 = vmatpush.bf16.msra.mxu0 %v1599
        %1904 = vmatpush.bf16.msra.mxu0 %v1595
        %1905 = vmatpush.bf16.msra.mxu0 %v1591
        %1906 = vmatpush.bf16.msra.mxu0 %v1587
        %1907 = vmatmul.bf16.gmra.mxu0 %v704
        %v1908 = vpop.f32.mrf.mxu0
        %v1909 = vadd.f32 %v1895, %v1908
        %v1910 = vpop.f32.mrf.mxu0
        %v1911 = vadd.f32 %v1897, %v1910
        %1912 = vdwg.mxu0
        %1913 = vmatpush.bf16.msra.mxu0 %v1520
        %1914 = vmatpush.bf16.msra.mxu0 %v1516
        %1915 = vmatpush.bf16.msra.mxu0 %v1512
        %1916 = vmatpush.bf16.msra.mxu0 %v1508
        %1917 = vmatpush.bf16.msra.mxu0 %v1504
        %1918 = vmatpush.bf16.msra.mxu0 %v1500
        %1919 = vmatpush.bf16.msra.mxu0 %v1496
        %1920 = vmatpush.bf16.msra.mxu0 %v1492
        %1921 = vmatmul.bf16.gmra.mxu0 %v701
        %v1922 = vpop.f32.mrf.mxu0
        %v1923 = vadd.f32 %v1100, %v1922
        %v1924 = vpop.f32.mrf.mxu0
        %v1925 = vadd.f32 %v1100, %v1924
        %1926 = vdwg.mxu0
        %1927 = vmatpush.bf16.msra.mxu0 %v1552
        %1928 = vmatpush.bf16.msra.mxu0 %v1548
        %1929 = vmatpush.bf16.msra.mxu0 %v1544
        %1930 = vmatpush.bf16.msra.mxu0 %v1540
        %1931 = vmatpush.bf16.msra.mxu0 %v1536
        %1932 = vmatpush.bf16.msra.mxu0 %v1532
        %1933 = vmatpush.bf16.msra.mxu0 %v1528
        %1934 = vmatpush.bf16.msra.mxu0 %v1524
        %1935 = vmatmul.bf16.gmra.mxu0 %v702
        %v1936 = vpop.f32.mrf.mxu0
        %v1937 = vadd.f32 %v1923, %v1936
        %v1938 = vpop.f32.mrf.mxu0
        %v1939 = vadd.f32 %v1925, %v1938
        %1940 = vdwg.mxu0
        %1941 = vmatpush.bf16.msra.mxu0 %v1584
        %1942 = vmatpush.bf16.msra.mxu0 %v1580
        %1943 = vmatpush.bf16.msra.mxu0 %v1576
        %1944 = vmatpush.bf16.msra.mxu0 %v1572
        %1945 = vmatpush.bf16.msra.mxu0 %v1568
        %1946 = vmatpush.bf16.msra.mxu0 %v1564
        %1947 = vmatpush.bf16.msra.mxu0 %v1560
        %1948 = vmatpush.bf16.msra.mxu0 %v1556
        %1949 = vmatmul.bf16.gmra.mxu0 %v703
        %v1950 = vpop.f32.mrf.mxu0
        %v1951 = vadd.f32 %v1937, %v1950
        %v1952 = vpop.f32.mrf.mxu0
        %v1953 = vadd.f32 %v1939, %v1952
        %1954 = vdwg.mxu0
        %1955 = vmatpush.bf16.msra.mxu0 %v1616
        %1956 = vmatpush.bf16.msra.mxu0 %v1612
        %1957 = vmatpush.bf16.msra.mxu0 %v1608
        %1958 = vmatpush.bf16.msra.mxu0 %v1604
        %1959 = vmatpush.bf16.msra.mxu0 %v1600
        %1960 = vmatpush.bf16.msra.mxu0 %v1596
        %1961 = vmatpush.bf16.msra.mxu0 %v1592
        %1962 = vmatpush.bf16.msra.mxu0 %v1588
        %1963 = vmatmul.bf16.gmra.mxu0 %v704
        %v1964 = vpop.f32.mrf.mxu0
        %v1965 = vadd.f32 %v1951, %v1964
        %v1966 = vpop.f32.mrf.mxu0
        %v1967 = vadd.f32 %v1953, %v1966
        %1968 = vdwg.mxu0
        %v1969 = vpack.c.bf16 %v1853, %v1797
        %v1970 = vpack.c.bf16 %v1965, %v1909
        %v1971 = vpack.c.bf16 %v1855, %v1799
        %v1972 = vpack.c.bf16 %v1967, %v1911
        %v1973 = vld [vmem:[#allocation12] sm:$0xff]
        %v1974 = vld [vmem:[#allocation12 + $0x8] sm:$0xff]
        %v1975 = vld [vmem:[#allocation12 + $0x10] sm:$0xff]
        %v1976 = vld [vmem:[#allocation12 + $0x18] sm:$0xff]
        %v1977 = vld [vmem:[#allocation12 + $0x20] sm:$0xff]
        %v1978 = vld [vmem:[#allocation12 + $0x28] sm:$0xff]
        %v1979 = vld [vmem:[#allocation12 + $0x30] sm:$0xff]
        %v1980 = vld [vmem:[#allocation12 + $0x38] sm:$0xff]
        %v1981 = vld [vmem:[#allocation12 + $0x40] sm:$0xff]
        %v1982 = vld [vmem:[#allocation12 + $0x48] sm:$0xff]
        %v1983 = vld [vmem:[#allocation12 + $0x50] sm:$0xff]
        %v1984 = vld [vmem:[#allocation12 + $0x58] sm:$0xff]
        %v1985 = vld [vmem:[#allocation12 + $0x60] sm:$0xff]
        %v1986 = vld [vmem:[#allocation12 + $0x68] sm:$0xff]
        %v1987 = vld [vmem:[#allocation12 + $0x70] sm:$0xff]
        %v1988 = vld [vmem:[#allocation12 + $0x78] sm:$0xff]
        %v1989 = vld [vmem:[#allocation12 + $0x80] sm:$0xff]
        %v1990 = vld [vmem:[#allocation12 + $0x88] sm:$0xff]
        %v1991 = vld [vmem:[#allocation12 + $0x90] sm:$0xff]
        %v1992 = vld [vmem:[#allocation12 + $0x98] sm:$0xff]
        %v1993 = vld [vmem:[#allocation12 + $0xa0] sm:$0xff]
        %v1994 = vld [vmem:[#allocation12 + $0xa8] sm:$0xff]
        %v1995 = vld [vmem:[#allocation12 + $0xb0] sm:$0xff]
        %v1996 = vld [vmem:[#allocation12 + $0xb8] sm:$0xff]
        %v1997 = vld [vmem:[#allocation12 + $0xc0] sm:$0xff]
        %v1998 = vld [vmem:[#allocation12 + $0xc8] sm:$0xff]
        %v1999 = vld [vmem:[#allocation12 + $0xd0] sm:$0xff]
        %v2000 = vld [vmem:[#allocation12 + $0xd8] sm:$0xff]
        %v2001 = vld [vmem:[#allocation12 + $0xe0] sm:$0xff]
        %v2002 = vld [vmem:[#allocation12 + $0xe8] sm:$0xff]
        %v2003 = vld [vmem:[#allocation12 + $0xf0] sm:$0xff]
        %v2004 = vld [vmem:[#allocation12 + $0xf8] sm:$0xff]
        %v2005 = vld [vmem:[#allocation12 + $0x100] sm:$0xff]
        %v2006 = vld [vmem:[#allocation12 + $0x108] sm:$0xff]
        %v2007 = vld [vmem:[#allocation12 + $0x110] sm:$0xff]
        %v2008 = vld [vmem:[#allocation12 + $0x118] sm:$0xff]
        %v2009 = vld [vmem:[#allocation12 + $0x120] sm:$0xff]
        %v2010 = vld [vmem:[#allocation12 + $0x128] sm:$0xff]
        %v2011 = vld [vmem:[#allocation12 + $0x130] sm:$0xff]
        %v2012 = vld [vmem:[#allocation12 + $0x138] sm:$0xff]
        %v2013 = vld [vmem:[#allocation12 + $0x140] sm:$0xff]
        %v2014 = vld [vmem:[#allocation12 + $0x148] sm:$0xff]
        %v2015 = vld [vmem:[#allocation12 + $0x150] sm:$0xff]
        %v2016 = vld [vmem:[#allocation12 + $0x158] sm:$0xff]
        %v2017 = vld [vmem:[#allocation12 + $0x160] sm:$0xff]
        %v2018 = vld [vmem:[#allocation12 + $0x168] sm:$0xff]
        %v2019 = vld [vmem:[#allocation12 + $0x170] sm:$0xff]
        %v2020 = vld [vmem:[#allocation12 + $0x178] sm:$0xff]
        %v2021 = vld [vmem:[#allocation12 + $0x180] sm:$0xff]
        %v2022 = vld [vmem:[#allocation12 + $0x188] sm:$0xff]
        %v2023 = vld [vmem:[#allocation12 + $0x190] sm:$0xff]
        %v2024 = vld [vmem:[#allocation12 + $0x198] sm:$0xff]
        %v2025 = vld [vmem:[#allocation12 + $0x1a0] sm:$0xff]
        %v2026 = vld [vmem:[#allocation12 + $0x1a8] sm:$0xff]
        %v2027 = vld [vmem:[#allocation12 + $0x1b0] sm:$0xff]
        %v2028 = vld [vmem:[#allocation12 + $0x1b8] sm:$0xff]
        %v2029 = vld [vmem:[#allocation12 + $0x1c0] sm:$0xff]
        %v2030 = vld [vmem:[#allocation12 + $0x1c8] sm:$0xff]
        %v2031 = vld [vmem:[#allocation12 + $0x1d0] sm:$0xff]
        %v2032 = vld [vmem:[#allocation12 + $0x1d8] sm:$0xff]
        %v2033 = vld [vmem:[#allocation12 + $0x1e0] sm:$0xff]
        %v2034 = vld [vmem:[#allocation12 + $0x1e8] sm:$0xff]
        %v2035 = vld [vmem:[#allocation12 + $0x1f0] sm:$0xff]
        %v2036 = vld [vmem:[#allocation12 + $0x1f8] sm:$0xff]
        %v2037 = vld [vmem:[#allocation12 + $0x200] sm:$0xff]
        %v2038 = vld [vmem:[#allocation12 + $0x208] sm:$0xff]
        %v2039 = vld [vmem:[#allocation12 + $0x210] sm:$0xff]
        %v2040 = vld [vmem:[#allocation12 + $0x218] sm:$0xff]
        %v2041 = vld [vmem:[#allocation12 + $0x220] sm:$0xff]
        %v2042 = vld [vmem:[#allocation12 + $0x228] sm:$0xff]
        %v2043 = vld [vmem:[#allocation12 + $0x230] sm:$0xff]
        %v2044 = vld [vmem:[#allocation12 + $0x238] sm:$0xff]
        %v2045 = vld [vmem:[#allocation12 + $0x240] sm:$0xff]
        %v2046 = vld [vmem:[#allocation12 + $0x248] sm:$0xff]
        %v2047 = vld [vmem:[#allocation12 + $0x250] sm:$0xff]
        %v2048 = vld [vmem:[#allocation12 + $0x258] sm:$0xff]
        %v2049 = vld [vmem:[#allocation12 + $0x260] sm:$0xff]
        %v2050 = vld [vmem:[#allocation12 + $0x268] sm:$0xff]
        %v2051 = vld [vmem:[#allocation12 + $0x270] sm:$0xff]
        %v2052 = vld [vmem:[#allocation12 + $0x278] sm:$0xff]
        %v2053 = vld [vmem:[#allocation12 + $0x280] sm:$0xff]
        %v2054 = vld [vmem:[#allocation12 + $0x288] sm:$0xff]
        %v2055 = vld [vmem:[#allocation12 + $0x290] sm:$0xff]
        %v2056 = vld [vmem:[#allocation12 + $0x298] sm:$0xff]
        %v2057 = vld [vmem:[#allocation12 + $0x2a0] sm:$0xff]
        %v2058 = vld [vmem:[#allocation12 + $0x2a8] sm:$0xff]
        %v2059 = vld [vmem:[#allocation12 + $0x2b0] sm:$0xff]
        %v2060 = vld [vmem:[#allocation12 + $0x2b8] sm:$0xff]
        %v2061 = vld [vmem:[#allocation12 + $0x2c0] sm:$0xff]
        %v2062 = vld [vmem:[#allocation12 + $0x2c8] sm:$0xff]
        %v2063 = vld [vmem:[#allocation12 + $0x2d0] sm:$0xff]
        %v2064 = vld [vmem:[#allocation12 + $0x2d8] sm:$0xff]
        %v2065 = vld [vmem:[#allocation12 + $0x2e0] sm:$0xff]
        %v2066 = vld [vmem:[#allocation12 + $0x2e8] sm:$0xff]
        %v2067 = vld [vmem:[#allocation12 + $0x2f0] sm:$0xff]
        %v2068 = vld [vmem:[#allocation12 + $0x2f8] sm:$0xff]
        %v2069 = vld [vmem:[#allocation12 + $0x300] sm:$0xff]
        %v2070 = vld [vmem:[#allocation12 + $0x308] sm:$0xff]
        %v2071 = vld [vmem:[#allocation12 + $0x310] sm:$0xff]
        %v2072 = vld [vmem:[#allocation12 + $0x318] sm:$0xff]
        %v2073 = vld [vmem:[#allocation12 + $0x320] sm:$0xff]
        %v2074 = vld [vmem:[#allocation12 + $0x328] sm:$0xff]
        %v2075 = vld [vmem:[#allocation12 + $0x330] sm:$0xff]
        %v2076 = vld [vmem:[#allocation12 + $0x338] sm:$0xff]
        %v2077 = vld [vmem:[#allocation12 + $0x340] sm:$0xff]
        %v2078 = vld [vmem:[#allocation12 + $0x348] sm:$0xff]
        %v2079 = vld [vmem:[#allocation12 + $0x350] sm:$0xff]
        %v2080 = vld [vmem:[#allocation12 + $0x358] sm:$0xff]
        %v2081 = vld [vmem:[#allocation12 + $0x360] sm:$0xff]
        %v2082 = vld [vmem:[#allocation12 + $0x368] sm:$0xff]
        %v2083 = vld [vmem:[#allocation12 + $0x370] sm:$0xff]
        %v2084 = vld [vmem:[#allocation12 + $0x378] sm:$0xff]
        %v2085 = vld [vmem:[#allocation12 + $0x380] sm:$0xff]
        %v2086 = vld [vmem:[#allocation12 + $0x388] sm:$0xff]
        %v2087 = vld [vmem:[#allocation12 + $0x390] sm:$0xff]
        %v2088 = vld [vmem:[#allocation12 + $0x398] sm:$0xff]
        %v2089 = vld [vmem:[#allocation12 + $0x3a0] sm:$0xff]
        %v2090 = vld [vmem:[#allocation12 + $0x3a8] sm:$0xff]
        %v2091 = vld [vmem:[#allocation12 + $0x3b0] sm:$0xff]
        %v2092 = vld [vmem:[#allocation12 + $0x3b8] sm:$0xff]
        %v2093 = vld [vmem:[#allocation12 + $0x3c0] sm:$0xff]
        %v2094 = vld [vmem:[#allocation12 + $0x3c8] sm:$0xff]
        %v2095 = vld [vmem:[#allocation12 + $0x3d0] sm:$0xff]
        %v2096 = vld [vmem:[#allocation12 + $0x3d8] sm:$0xff]
        %v2097 = vld [vmem:[#allocation12 + $0x3e0] sm:$0xff]
        %v2098 = vld [vmem:[#allocation12 + $0x3e8] sm:$0xff]
        %v2099 = vld [vmem:[#allocation12 + $0x3f0] sm:$0xff]
        %v2100 = vld [vmem:[#allocation12 + $0x3f8] sm:$0xff]
        %v2101 = vld [vmem:[#allocation12 + $0x400] sm:$0xff]
        %v2102 = vld [vmem:[#allocation12 + $0x408] sm:$0xff]
        %v2103 = vld [vmem:[#allocation12 + $0x410] sm:$0xff]
        %v2104 = vld [vmem:[#allocation12 + $0x418] sm:$0xff]
        %v2105 = vld [vmem:[#allocation12 + $0x420] sm:$0xff]
        %v2106 = vld [vmem:[#allocation12 + $0x428] sm:$0xff]
        %v2107 = vld [vmem:[#allocation12 + $0x430] sm:$0xff]
        %v2108 = vld [vmem:[#allocation12 + $0x438] sm:$0xff]
        %v2109 = vld [vmem:[#allocation12 + $0x440] sm:$0xff]
        %v2110 = vld [vmem:[#allocation12 + $0x448] sm:$0xff]
        %v2111 = vld [vmem:[#allocation12 + $0x450] sm:$0xff]
        %v2112 = vld [vmem:[#allocation12 + $0x458] sm:$0xff]
        %v2113 = vld [vmem:[#allocation12 + $0x460] sm:$0xff]
        %v2114 = vld [vmem:[#allocation12 + $0x468] sm:$0xff]
        %v2115 = vld [vmem:[#allocation12 + $0x470] sm:$0xff]
        %v2116 = vld [vmem:[#allocation12 + $0x478] sm:$0xff]
        %v2117 = vld [vmem:[#allocation12 + $0x480] sm:$0xff]
        %v2118 = vld [vmem:[#allocation12 + $0x488] sm:$0xff]
        %v2119 = vld [vmem:[#allocation12 + $0x490] sm:$0xff]
        %v2120 = vld [vmem:[#allocation12 + $0x498] sm:$0xff]
        %v2121 = vld [vmem:[#allocation12 + $0x4a0] sm:$0xff]
        %v2122 = vld [vmem:[#allocation12 + $0x4a8] sm:$0xff]
        %v2123 = vld [vmem:[#allocation12 + $0x4b0] sm:$0xff]
        %v2124 = vld [vmem:[#allocation12 + $0x4b8] sm:$0xff]
        %v2125 = vld [vmem:[#allocation12 + $0x4c0] sm:$0xff]
        %v2126 = vld [vmem:[#allocation12 + $0x4c8] sm:$0xff]
        %v2127 = vld [vmem:[#allocation12 + $0x4d0] sm:$0xff]
        %v2128 = vld [vmem:[#allocation12 + $0x4d8] sm:$0xff]
        %v2129 = vld [vmem:[#allocation12 + $0x4e0] sm:$0xff]
        %v2130 = vld [vmem:[#allocation12 + $0x4e8] sm:$0xff]
        %v2131 = vld [vmem:[#allocation12 + $0x4f0] sm:$0xff]
        %v2132 = vld [vmem:[#allocation12 + $0x4f8] sm:$0xff]
        %v2133 = vld [vmem:[#allocation12 + $0x500] sm:$0xff]
        %v2134 = vld [vmem:[#allocation12 + $0x508] sm:$0xff]
        %v2135 = vld [vmem:[#allocation12 + $0x510] sm:$0xff]
        %v2136 = vld [vmem:[#allocation12 + $0x518] sm:$0xff]
        %v2137 = vld [vmem:[#allocation12 + $0x520] sm:$0xff]
        %v2138 = vld [vmem:[#allocation12 + $0x528] sm:$0xff]
        %v2139 = vld [vmem:[#allocation12 + $0x530] sm:$0xff]
        %v2140 = vld [vmem:[#allocation12 + $0x538] sm:$0xff]
        %v2141 = vld [vmem:[#allocation12 + $0x540] sm:$0xff]
        %v2142 = vld [vmem:[#allocation12 + $0x548] sm:$0xff]
        %v2143 = vld [vmem:[#allocation12 + $0x550] sm:$0xff]
        %v2144 = vld [vmem:[#allocation12 + $0x558] sm:$0xff]
        %v2145 = vld [vmem:[#allocation12 + $0x560] sm:$0xff]
        %v2146 = vld [vmem:[#allocation12 + $0x568] sm:$0xff]
        %v2147 = vld [vmem:[#allocation12 + $0x570] sm:$0xff]
        %v2148 = vld [vmem:[#allocation12 + $0x578] sm:$0xff]
        %v2149 = vld [vmem:[#allocation12 + $0x580] sm:$0xff]
        %v2150 = vld [vmem:[#allocation12 + $0x588] sm:$0xff]
        %v2151 = vld [vmem:[#allocation12 + $0x590] sm:$0xff]
        %v2152 = vld [vmem:[#allocation12 + $0x598] sm:$0xff]
        %v2153 = vld [vmem:[#allocation12 + $0x5a0] sm:$0xff]
        %v2154 = vld [vmem:[#allocation12 + $0x5a8] sm:$0xff]
        %v2155 = vld [vmem:[#allocation12 + $0x5b0] sm:$0xff]
        %v2156 = vld [vmem:[#allocation12 + $0x5b8] sm:$0xff]
        %v2157 = vld [vmem:[#allocation12 + $0x5c0] sm:$0xff]
        %v2158 = vld [vmem:[#allocation12 + $0x5c8] sm:$0xff]
        %v2159 = vld [vmem:[#allocation12 + $0x5d0] sm:$0xff]
        %v2160 = vld [vmem:[#allocation12 + $0x5d8] sm:$0xff]
        %v2161 = vld [vmem:[#allocation12 + $0x5e0] sm:$0xff]
        %v2162 = vld [vmem:[#allocation12 + $0x5e8] sm:$0xff]
        %v2163 = vld [vmem:[#allocation12 + $0x5f0] sm:$0xff]
        %v2164 = vld [vmem:[#allocation12 + $0x5f8] sm:$0xff]
        %v2165 = vld [vmem:[#allocation12 + $0x600] sm:$0xff]
        %v2166 = vld [vmem:[#allocation12 + $0x608] sm:$0xff]
        %v2167 = vld [vmem:[#allocation12 + $0x610] sm:$0xff]
        %v2168 = vld [vmem:[#allocation12 + $0x618] sm:$0xff]
        %v2169 = vld [vmem:[#allocation12 + $0x620] sm:$0xff]
        %v2170 = vld [vmem:[#allocation12 + $0x628] sm:$0xff]
        %v2171 = vld [vmem:[#allocation12 + $0x630] sm:$0xff]
        %v2172 = vld [vmem:[#allocation12 + $0x638] sm:$0xff]
        %v2173 = vld [vmem:[#allocation12 + $0x640] sm:$0xff]
        %v2174 = vld [vmem:[#allocation12 + $0x648] sm:$0xff]
        %v2175 = vld [vmem:[#allocation12 + $0x650] sm:$0xff]
        %v2176 = vld [vmem:[#allocation12 + $0x658] sm:$0xff]
        %v2177 = vld [vmem:[#allocation12 + $0x660] sm:$0xff]
        %v2178 = vld [vmem:[#allocation12 + $0x668] sm:$0xff]
        %v2179 = vld [vmem:[#allocation12 + $0x670] sm:$0xff]
        %v2180 = vld [vmem:[#allocation12 + $0x678] sm:$0xff]
        %v2181 = vld [vmem:[#allocation12 + $0x680] sm:$0xff]
        %v2182 = vld [vmem:[#allocation12 + $0x688] sm:$0xff]
        %v2183 = vld [vmem:[#allocation12 + $0x690] sm:$0xff]
        %v2184 = vld [vmem:[#allocation12 + $0x698] sm:$0xff]
        %v2185 = vld [vmem:[#allocation12 + $0x6a0] sm:$0xff]
        %v2186 = vld [vmem:[#allocation12 + $0x6a8] sm:$0xff]
        %v2187 = vld [vmem:[#allocation12 + $0x6b0] sm:$0xff]
        %v2188 = vld [vmem:[#allocation12 + $0x6b8] sm:$0xff]
        %v2189 = vld [vmem:[#allocation12 + $0x6c0] sm:$0xff]
        %v2190 = vld [vmem:[#allocation12 + $0x6c8] sm:$0xff]
        %v2191 = vld [vmem:[#allocation12 + $0x6d0] sm:$0xff]
        %v2192 = vld [vmem:[#allocation12 + $0x6d8] sm:$0xff]
        %v2193 = vld [vmem:[#allocation12 + $0x6e0] sm:$0xff]
        %v2194 = vld [vmem:[#allocation12 + $0x6e8] sm:$0xff]
        %v2195 = vld [vmem:[#allocation12 + $0x6f0] sm:$0xff]
        %v2196 = vld [vmem:[#allocation12 + $0x6f8] sm:$0xff]
        %v2197 = vld [vmem:[#allocation12 + $0x700] sm:$0xff]
        %v2198 = vld [vmem:[#allocation12 + $0x708] sm:$0xff]
        %v2199 = vld [vmem:[#allocation12 + $0x710] sm:$0xff]
        %v2200 = vld [vmem:[#allocation12 + $0x718] sm:$0xff]
        %v2201 = vld [vmem:[#allocation12 + $0x720] sm:$0xff]
        %v2202 = vld [vmem:[#allocation12 + $0x728] sm:$0xff]
        %v2203 = vld [vmem:[#allocation12 + $0x730] sm:$0xff]
        %v2204 = vld [vmem:[#allocation12 + $0x738] sm:$0xff]
        %v2205 = vld [vmem:[#allocation12 + $0x740] sm:$0xff]
        %v2206 = vld [vmem:[#allocation12 + $0x748] sm:$0xff]
        %v2207 = vld [vmem:[#allocation12 + $0x750] sm:$0xff]
        %v2208 = vld [vmem:[#allocation12 + $0x758] sm:$0xff]
        %v2209 = vld [vmem:[#allocation12 + $0x760] sm:$0xff]
        %v2210 = vld [vmem:[#allocation12 + $0x768] sm:$0xff]
        %v2211 = vld [vmem:[#allocation12 + $0x770] sm:$0xff]
        %v2212 = vld [vmem:[#allocation12 + $0x778] sm:$0xff]
        %v2213 = vld [vmem:[#allocation12 + $0x780] sm:$0xff]
        %v2214 = vld [vmem:[#allocation12 + $0x788] sm:$0xff]
        %v2215 = vld [vmem:[#allocation12 + $0x790] sm:$0xff]
        %v2216 = vld [vmem:[#allocation12 + $0x798] sm:$0xff]
        %v2217 = vld [vmem:[#allocation12 + $0x7a0] sm:$0xff]
        %v2218 = vld [vmem:[#allocation12 + $0x7a8] sm:$0xff]
        %v2219 = vld [vmem:[#allocation12 + $0x7b0] sm:$0xff]
        %v2220 = vld [vmem:[#allocation12 + $0x7b8] sm:$0xff]
        %v2221 = vld [vmem:[#allocation12 + $0x7c0] sm:$0xff]
        %v2222 = vld [vmem:[#allocation12 + $0x7c8] sm:$0xff]
        %v2223 = vld [vmem:[#allocation12 + $0x7d0] sm:$0xff]
        %v2224 = vld [vmem:[#allocation12 + $0x7d8] sm:$0xff]
        %v2225 = vld [vmem:[#allocation12 + $0x7e0] sm:$0xff]
        %v2226 = vld [vmem:[#allocation12 + $0x7e8] sm:$0xff]
        %v2227 = vld [vmem:[#allocation12 + $0x7f0] sm:$0xff]
        %v2228 = vld [vmem:[#allocation12 + $0x7f8] sm:$0xff]
        %v2229 = vld [vmem:[%s7] sm:$0xff]
        %v2231 = vperm.slane %v2229, 0
        %v2232 = vperm.slane %v2229, 1
        %v2233 = vperm.slane %v2229, 2
        %v2234 = vperm.slane %v2229, 3
        %v2235 = vperm.slane %v2229, 4
        %v2236 = vperm.slane %v2229, 5
        %v2237 = vperm.slane %v2229, 6
        %v2238 = vperm.slane %v2229, 7
        %v2503 = vunpack.c.l.b16 %v1973
        %v2504 = vunpack.c.h.b16 %v1973
        %v2505 = vunpack.c.l.b16 %v1974
        %v2506 = vunpack.c.h.b16 %v1974
        %v2507 = vunpack.c.l.b16 %v1975
        %v2508 = vunpack.c.h.b16 %v1975
        %v2509 = vunpack.c.l.b16 %v1976
        %v2510 = vunpack.c.h.b16 %v1976
        %v2511 = vunpack.c.l.b16 %v1977
        %v2512 = vunpack.c.h.b16 %v1977
        %v2513 = vunpack.c.l.b16 %v1978
        %v2514 = vunpack.c.h.b16 %v1978
        %v2515 = vunpack.c.l.b16 %v1979
        %v2516 = vunpack.c.h.b16 %v1979
        %v2517 = vunpack.c.l.b16 %v1980
        %v2518 = vunpack.c.h.b16 %v1980
        %v2519 = vunpack.c.l.b16 %v1981
        %v2520 = vunpack.c.h.b16 %v1981
        %v2521 = vunpack.c.l.b16 %v1982
        %v2522 = vunpack.c.h.b16 %v1982
        %v2523 = vunpack.c.l.b16 %v1983
        %v2524 = vunpack.c.h.b16 %v1983
        %v2525 = vunpack.c.l.b16 %v1984
        %v2526 = vunpack.c.h.b16 %v1984
        %v2527 = vunpack.c.l.b16 %v1985
        %v2528 = vunpack.c.h.b16 %v1985
        %v2529 = vunpack.c.l.b16 %v1986
        %v2530 = vunpack.c.h.b16 %v1986
        %v2531 = vunpack.c.l.b16 %v1987
        %v2532 = vunpack.c.h.b16 %v1987
        %v2533 = vunpack.c.l.b16 %v1988
        %v2534 = vunpack.c.h.b16 %v1988
        %v2535 = vunpack.c.l.b16 %v1989
        %v2536 = vunpack.c.h.b16 %v1989
        %v2537 = vunpack.c.l.b16 %v1990
        %v2538 = vunpack.c.h.b16 %v1990
        %v2539 = vunpack.c.l.b16 %v1991
        %v2540 = vunpack.c.h.b16 %v1991
        %v2541 = vunpack.c.l.b16 %v1992
        %v2542 = vunpack.c.h.b16 %v1992
        %v2543 = vunpack.c.l.b16 %v1993
        %v2544 = vunpack.c.h.b16 %v1993
        %v2545 = vunpack.c.l.b16 %v1994
        %v2546 = vunpack.c.h.b16 %v1994
        %v2547 = vunpack.c.l.b16 %v1995
        %v2548 = vunpack.c.h.b16 %v1995
        %v2549 = vunpack.c.l.b16 %v1996
        %v2550 = vunpack.c.h.b16 %v1996
        %v2551 = vunpack.c.l.b16 %v1997
        %v2552 = vunpack.c.h.b16 %v1997
        %v2553 = vunpack.c.l.b16 %v1998
        %v2554 = vunpack.c.h.b16 %v1998
        %v2555 = vunpack.c.l.b16 %v1999
        %v2556 = vunpack.c.h.b16 %v1999
        %v2557 = vunpack.c.l.b16 %v2000
        %v2558 = vunpack.c.h.b16 %v2000
        %v2559 = vunpack.c.l.b16 %v2001
        %v2560 = vunpack.c.h.b16 %v2001
        %v2561 = vunpack.c.l.b16 %v2002
        %v2562 = vunpack.c.h.b16 %v2002
        %v2563 = vunpack.c.l.b16 %v2003
        %v2564 = vunpack.c.h.b16 %v2003
        %v2565 = vunpack.c.l.b16 %v2004
        %v2566 = vunpack.c.h.b16 %v2004
        %v2567 = vunpack.c.l.b16 %v2005
        %v2568 = vunpack.c.h.b16 %v2005
        %v2569 = vunpack.c.l.b16 %v2006
        %v2570 = vunpack.c.h.b16 %v2006
        %v2571 = vunpack.c.l.b16 %v2007
        %v2572 = vunpack.c.h.b16 %v2007
        %v2573 = vunpack.c.l.b16 %v2008
        %v2574 = vunpack.c.h.b16 %v2008
        %v2575 = vunpack.c.l.b16 %v2009
        %v2576 = vunpack.c.h.b16 %v2009
        %v2577 = vunpack.c.l.b16 %v2010
        %v2578 = vunpack.c.h.b16 %v2010
        %v2579 = vunpack.c.l.b16 %v2011
        %v2580 = vunpack.c.h.b16 %v2011
        %v2581 = vunpack.c.l.b16 %v2012
        %v2582 = vunpack.c.h.b16 %v2012
        %v2583 = vunpack.c.l.b16 %v2013
        %v2584 = vunpack.c.h.b16 %v2013
        %v2585 = vunpack.c.l.b16 %v2014
        %v2586 = vunpack.c.h.b16 %v2014
        %v2587 = vunpack.c.l.b16 %v2015
        %v2588 = vunpack.c.h.b16 %v2015
        %v2589 = vunpack.c.l.b16 %v2016
        %v2590 = vunpack.c.h.b16 %v2016
        %v2591 = vunpack.c.l.b16 %v2017
        %v2592 = vunpack.c.h.b16 %v2017
        %v2593 = vunpack.c.l.b16 %v2018
        %v2594 = vunpack.c.h.b16 %v2018
        %v2595 = vunpack.c.l.b16 %v2019
        %v2596 = vunpack.c.h.b16 %v2019
        %v2597 = vunpack.c.l.b16 %v2020
        %v2598 = vunpack.c.h.b16 %v2020
        %v2599 = vunpack.c.l.b16 %v2021
        %v2600 = vunpack.c.h.b16 %v2021
        %v2601 = vunpack.c.l.b16 %v2022
        %v2602 = vunpack.c.h.b16 %v2022
        %v2603 = vunpack.c.l.b16 %v2023
        %v2604 = vunpack.c.h.b16 %v2023
        %v2605 = vunpack.c.l.b16 %v2024
        %v2606 = vunpack.c.h.b16 %v2024
        %v2607 = vunpack.c.l.b16 %v2025
        %v2608 = vunpack.c.h.b16 %v2025
        %v2609 = vunpack.c.l.b16 %v2026
        %v2610 = vunpack.c.h.b16 %v2026
        %v2611 = vunpack.c.l.b16 %v2027
        %v2612 = vunpack.c.h.b16 %v2027
        %v2613 = vunpack.c.l.b16 %v2028
        %v2614 = vunpack.c.h.b16 %v2028
        %v2615 = vunpack.c.l.b16 %v2029
        %v2616 = vunpack.c.h.b16 %v2029
        %v2617 = vunpack.c.l.b16 %v2030
        %v2618 = vunpack.c.h.b16 %v2030
        %v2619 = vunpack.c.l.b16 %v2031
        %v2620 = vunpack.c.h.b16 %v2031
        %v2621 = vunpack.c.l.b16 %v2032
        %v2622 = vunpack.c.h.b16 %v2032
        %v2623 = vunpack.c.l.b16 %v2033
        %v2624 = vunpack.c.h.b16 %v2033
        %v2625 = vunpack.c.l.b16 %v2034
        %v2626 = vunpack.c.h.b16 %v2034
        %v2627 = vunpack.c.l.b16 %v2035
        %v2628 = vunpack.c.h.b16 %v2035
        %v2629 = vunpack.c.l.b16 %v2036
        %v2630 = vunpack.c.h.b16 %v2036
        %v2631 = vunpack.c.l.b16 %v2037
        %v2632 = vunpack.c.h.b16 %v2037
        %v2633 = vunpack.c.l.b16 %v2038
        %v2634 = vunpack.c.h.b16 %v2038
        %v2635 = vunpack.c.l.b16 %v2039
        %v2636 = vunpack.c.h.b16 %v2039
        %v2637 = vunpack.c.l.b16 %v2040
        %v2638 = vunpack.c.h.b16 %v2040
        %v2639 = vunpack.c.l.b16 %v2041
        %v2640 = vunpack.c.h.b16 %v2041
        %v2641 = vunpack.c.l.b16 %v2042
        %v2642 = vunpack.c.h.b16 %v2042
        %v2643 = vunpack.c.l.b16 %v2043
        %v2644 = vunpack.c.h.b16 %v2043
        %v2645 = vunpack.c.l.b16 %v2044
        %v2646 = vunpack.c.h.b16 %v2044
        %v2647 = vunpack.c.l.b16 %v2045
        %v2648 = vunpack.c.h.b16 %v2045
        %v2649 = vunpack.c.l.b16 %v2046
        %v2650 = vunpack.c.h.b16 %v2046
        %v2651 = vunpack.c.l.b16 %v2047
        %v2652 = vunpack.c.h.b16 %v2047
        %v2653 = vunpack.c.l.b16 %v2048
        %v2654 = vunpack.c.h.b16 %v2048
        %v2655 = vunpack.c.l.b16 %v2049
        %v2656 = vunpack.c.h.b16 %v2049
        %v2657 = vunpack.c.l.b16 %v2050
        %v2658 = vunpack.c.h.b16 %v2050
        %v2659 = vunpack.c.l.b16 %v2051
        %v2660 = vunpack.c.h.b16 %v2051
        %v2661 = vunpack.c.l.b16 %v2052
        %v2662 = vunpack.c.h.b16 %v2052
        %v2663 = vunpack.c.l.b16 %v2053
        %v2664 = vunpack.c.h.b16 %v2053
        %v2665 = vunpack.c.l.b16 %v2054
        %v2666 = vunpack.c.h.b16 %v2054
        %v2667 = vunpack.c.l.b16 %v2055
        %v2668 = vunpack.c.h.b16 %v2055
        %v2669 = vunpack.c.l.b16 %v2056
        %v2670 = vunpack.c.h.b16 %v2056
        %v2671 = vunpack.c.l.b16 %v2057
        %v2672 = vunpack.c.h.b16 %v2057
        %v2673 = vunpack.c.l.b16 %v2058
        %v2674 = vunpack.c.h.b16 %v2058
        %v2675 = vunpack.c.l.b16 %v2059
        %v2676 = vunpack.c.h.b16 %v2059
        %v2677 = vunpack.c.l.b16 %v2060
        %v2678 = vunpack.c.h.b16 %v2060
        %v2679 = vunpack.c.l.b16 %v2061
        %v2680 = vunpack.c.h.b16 %v2061
        %v2681 = vunpack.c.l.b16 %v2062
        %v2682 = vunpack.c.h.b16 %v2062
        %v2683 = vunpack.c.l.b16 %v2063
        %v2684 = vunpack.c.h.b16 %v2063
        %v2685 = vunpack.c.l.b16 %v2064
        %v2686 = vunpack.c.h.b16 %v2064
        %v2687 = vunpack.c.l.b16 %v2065
        %v2688 = vunpack.c.h.b16 %v2065
        %v2689 = vunpack.c.l.b16 %v2066
        %v2690 = vunpack.c.h.b16 %v2066
        %v2691 = vunpack.c.l.b16 %v2067
        %v2692 = vunpack.c.h.b16 %v2067
        %v2693 = vunpack.c.l.b16 %v2068
        %v2694 = vunpack.c.h.b16 %v2068
        %v2695 = vunpack.c.l.b16 %v2069
        %v2696 = vunpack.c.h.b16 %v2069
        %v2697 = vunpack.c.l.b16 %v2070
        %v2698 = vunpack.c.h.b16 %v2070
        %v2699 = vunpack.c.l.b16 %v2071
        %v2700 = vunpack.c.h.b16 %v2071
        %v2701 = vunpack.c.l.b16 %v2072
        %v2702 = vunpack.c.h.b16 %v2072
        %v2703 = vunpack.c.l.b16 %v2073
        %v2704 = vunpack.c.h.b16 %v2073
        %v2705 = vunpack.c.l.b16 %v2074
        %v2706 = vunpack.c.h.b16 %v2074
        %v2707 = vunpack.c.l.b16 %v2075
        %v2708 = vunpack.c.h.b16 %v2075
        %v2709 = vunpack.c.l.b16 %v2076
        %v2710 = vunpack.c.h.b16 %v2076
        %v2711 = vunpack.c.l.b16 %v2077
        %v2712 = vunpack.c.h.b16 %v2077
        %v2713 = vunpack.c.l.b16 %v2078
        %v2714 = vunpack.c.h.b16 %v2078
        %v2715 = vunpack.c.l.b16 %v2079
        %v2716 = vunpack.c.h.b16 %v2079
        %v2717 = vunpack.c.l.b16 %v2080
        %v2718 = vunpack.c.h.b16 %v2080
        %v2719 = vunpack.c.l.b16 %v2081
        %v2720 = vunpack.c.h.b16 %v2081
        %v2721 = vunpack.c.l.b16 %v2082
        %v2722 = vunpack.c.h.b16 %v2082
        %v2723 = vunpack.c.l.b16 %v2083
        %v2724 = vunpack.c.h.b16 %v2083
        %v2725 = vunpack.c.l.b16 %v2084
        %v2726 = vunpack.c.h.b16 %v2084
        %v2727 = vunpack.c.l.b16 %v2085
        %v2728 = vunpack.c.h.b16 %v2085
        %v2729 = vunpack.c.l.b16 %v2086
        %v2730 = vunpack.c.h.b16 %v2086
        %v2731 = vunpack.c.l.b16 %v2087
        %v2732 = vunpack.c.h.b16 %v2087
        %v2733 = vunpack.c.l.b16 %v2088
        %v2734 = vunpack.c.h.b16 %v2088
        %v2735 = vunpack.c.l.b16 %v2089
        %v2736 = vunpack.c.h.b16 %v2089
        %v2737 = vunpack.c.l.b16 %v2090
        %v2738 = vunpack.c.h.b16 %v2090
        %v2739 = vunpack.c.l.b16 %v2091
        %v2740 = vunpack.c.h.b16 %v2091
        %v2741 = vunpack.c.l.b16 %v2092
        %v2742 = vunpack.c.h.b16 %v2092
        %v2743 = vunpack.c.l.b16 %v2093
        %v2744 = vunpack.c.h.b16 %v2093
        %v2745 = vunpack.c.l.b16 %v2094
        %v2746 = vunpack.c.h.b16 %v2094
        %v2747 = vunpack.c.l.b16 %v2095
        %v2748 = vunpack.c.h.b16 %v2095
        %v2749 = vunpack.c.l.b16 %v2096
        %v2750 = vunpack.c.h.b16 %v2096
        %v2751 = vunpack.c.l.b16 %v2097
        %v2752 = vunpack.c.h.b16 %v2097
        %v2753 = vunpack.c.l.b16 %v2098
        %v2754 = vunpack.c.h.b16 %v2098
        %v2755 = vunpack.c.l.b16 %v2099
        %v2756 = vunpack.c.h.b16 %v2099
        %v2757 = vunpack.c.l.b16 %v2100
        %v2758 = vunpack.c.h.b16 %v2100
        %v2759 = vunpack.c.l.b16 %v2101
        %v2760 = vunpack.c.h.b16 %v2101
        %v2761 = vunpack.c.l.b16 %v2102
        %v2762 = vunpack.c.h.b16 %v2102
        %v2763 = vunpack.c.l.b16 %v2103
        %v2764 = vunpack.c.h.b16 %v2103
        %v2765 = vunpack.c.l.b16 %v2104
        %v2766 = vunpack.c.h.b16 %v2104
        %v2767 = vunpack.c.l.b16 %v2105
        %v2768 = vunpack.c.h.b16 %v2105
        %v2769 = vunpack.c.l.b16 %v2106
        %v2770 = vunpack.c.h.b16 %v2106
        %v2771 = vunpack.c.l.b16 %v2107
        %v2772 = vunpack.c.h.b16 %v2107
        %v2773 = vunpack.c.l.b16 %v2108
        %v2774 = vunpack.c.h.b16 %v2108
        %v2775 = vunpack.c.l.b16 %v2109
        %v2776 = vunpack.c.h.b16 %v2109
        %v2777 = vunpack.c.l.b16 %v2110
        %v2778 = vunpack.c.h.b16 %v2110
        %v2779 = vunpack.c.l.b16 %v2111
        %v2780 = vunpack.c.h.b16 %v2111
        %v2781 = vunpack.c.l.b16 %v2112
        %v2782 = vunpack.c.h.b16 %v2112
        %v2783 = vunpack.c.l.b16 %v2113
        %v2784 = vunpack.c.h.b16 %v2113
        %v2785 = vunpack.c.l.b16 %v2114
        %v2786 = vunpack.c.h.b16 %v2114
        %v2787 = vunpack.c.l.b16 %v2115
        %v2788 = vunpack.c.h.b16 %v2115
        %v2789 = vunpack.c.l.b16 %v2116
        %v2790 = vunpack.c.h.b16 %v2116
        %v2791 = vunpack.c.l.b16 %v2117
        %v2792 = vunpack.c.h.b16 %v2117
        %v2793 = vunpack.c.l.b16 %v2118
        %v2794 = vunpack.c.h.b16 %v2118
        %v2795 = vunpack.c.l.b16 %v2119
        %v2796 = vunpack.c.h.b16 %v2119
        %v2797 = vunpack.c.l.b16 %v2120
        %v2798 = vunpack.c.h.b16 %v2120
        %v2799 = vunpack.c.l.b16 %v2121
        %v2800 = vunpack.c.h.b16 %v2121
        %v2801 = vunpack.c.l.b16 %v2122
        %v2802 = vunpack.c.h.b16 %v2122
        %v2803 = vunpack.c.l.b16 %v2123
        %v2804 = vunpack.c.h.b16 %v2123
        %v2805 = vunpack.c.l.b16 %v2124
        %v2806 = vunpack.c.h.b16 %v2124
        %v2807 = vunpack.c.l.b16 %v2125
        %v2808 = vunpack.c.h.b16 %v2125
        %v2809 = vunpack.c.l.b16 %v2126
        %v2810 = vunpack.c.h.b16 %v2126
        %v2811 = vunpack.c.l.b16 %v2127
        %v2812 = vunpack.c.h.b16 %v2127
        %v2813 = vunpack.c.l.b16 %v2128
        %v2814 = vunpack.c.h.b16 %v2128
        %v2815 = vunpack.c.l.b16 %v2129
        %v2816 = vunpack.c.h.b16 %v2129
        %v2817 = vunpack.c.l.b16 %v2130
        %v2818 = vunpack.c.h.b16 %v2130
        %v2819 = vunpack.c.l.b16 %v2131
        %v2820 = vunpack.c.h.b16 %v2131
        %v2821 = vunpack.c.l.b16 %v2132
        %v2822 = vunpack.c.h.b16 %v2132
        %v2823 = vunpack.c.l.b16 %v2133
        %v2824 = vunpack.c.h.b16 %v2133
        %v2825 = vunpack.c.l.b16 %v2134
        %v2826 = vunpack.c.h.b16 %v2134
        %v2827 = vunpack.c.l.b16 %v2135
        %v2828 = vunpack.c.h.b16 %v2135
        %v2829 = vunpack.c.l.b16 %v2136
        %v2830 = vunpack.c.h.b16 %v2136
        %v2831 = vunpack.c.l.b16 %v2137
        %v2832 = vunpack.c.h.b16 %v2137
        %v2833 = vunpack.c.l.b16 %v2138
        %v2834 = vunpack.c.h.b16 %v2138
        %v2835 = vunpack.c.l.b16 %v2139
        %v2836 = vunpack.c.h.b16 %v2139
        %v2837 = vunpack.c.l.b16 %v2140
        %v2838 = vunpack.c.h.b16 %v2140
        %v2839 = vunpack.c.l.b16 %v2141
        %v2840 = vunpack.c.h.b16 %v2141
        %v2841 = vunpack.c.l.b16 %v2142
        %v2842 = vunpack.c.h.b16 %v2142
        %v2843 = vunpack.c.l.b16 %v2143
        %v2844 = vunpack.c.h.b16 %v2143
        %v2845 = vunpack.c.l.b16 %v2144
        %v2846 = vunpack.c.h.b16 %v2144
        %v2847 = vunpack.c.l.b16 %v2145
        %v2848 = vunpack.c.h.b16 %v2145
        %v2849 = vunpack.c.l.b16 %v2146
        %v2850 = vunpack.c.h.b16 %v2146
        %v2851 = vunpack.c.l.b16 %v2147
        %v2852 = vunpack.c.h.b16 %v2147
        %v2853 = vunpack.c.l.b16 %v2148
        %v2854 = vunpack.c.h.b16 %v2148
        %v2855 = vunpack.c.l.b16 %v2149
        %v2856 = vunpack.c.h.b16 %v2149
        %v2857 = vunpack.c.l.b16 %v2150
        %v2858 = vunpack.c.h.b16 %v2150
        %v2859 = vunpack.c.l.b16 %v2151
        %v2860 = vunpack.c.h.b16 %v2151
        %v2861 = vunpack.c.l.b16 %v2152
        %v2862 = vunpack.c.h.b16 %v2152
        %v2863 = vunpack.c.l.b16 %v2153
        %v2864 = vunpack.c.h.b16 %v2153
        %v2865 = vunpack.c.l.b16 %v2154
        %v2866 = vunpack.c.h.b16 %v2154
        %v2867 = vunpack.c.l.b16 %v2155
        %v2868 = vunpack.c.h.b16 %v2155
        %v2869 = vunpack.c.l.b16 %v2156
        %v2870 = vunpack.c.h.b16 %v2156
        %v2871 = vunpack.c.l.b16 %v2157
        %v2872 = vunpack.c.h.b16 %v2157
        %v2873 = vunpack.c.l.b16 %v2158
        %v2874 = vunpack.c.h.b16 %v2158
        %v2875 = vunpack.c.l.b16 %v2159
        %v2876 = vunpack.c.h.b16 %v2159
        %v2877 = vunpack.c.l.b16 %v2160
        %v2878 = vunpack.c.h.b16 %v2160
        %v2879 = vunpack.c.l.b16 %v2161
        %v2880 = vunpack.c.h.b16 %v2161
        %v2881 = vunpack.c.l.b16 %v2162
        %v2882 = vunpack.c.h.b16 %v2162
        %v2883 = vunpack.c.l.b16 %v2163
        %v2884 = vunpack.c.h.b16 %v2163
        %v2885 = vunpack.c.l.b16 %v2164
        %v2886 = vunpack.c.h.b16 %v2164
        %v2887 = vunpack.c.l.b16 %v2165
        %v2888 = vunpack.c.h.b16 %v2165
        %v2889 = vunpack.c.l.b16 %v2166
        %v2890 = vunpack.c.h.b16 %v2166
        %v2891 = vunpack.c.l.b16 %v2167
        %v2892 = vunpack.c.h.b16 %v2167
        %v2893 = vunpack.c.l.b16 %v2168
        %v2894 = vunpack.c.h.b16 %v2168
        %v2895 = vunpack.c.l.b16 %v2169
        %v2896 = vunpack.c.h.b16 %v2169
        %v2897 = vunpack.c.l.b16 %v2170
        %v2898 = vunpack.c.h.b16 %v2170
        %v2899 = vunpack.c.l.b16 %v2171
        %v2900 = vunpack.c.h.b16 %v2171
        %v2901 = vunpack.c.l.b16 %v2172
        %v2902 = vunpack.c.h.b16 %v2172
        %v2903 = vunpack.c.l.b16 %v2173
        %v2904 = vunpack.c.h.b16 %v2173
        %v2905 = vunpack.c.l.b16 %v2174
        %v2906 = vunpack.c.h.b16 %v2174
        %v2907 = vunpack.c.l.b16 %v2175
        %v2908 = vunpack.c.h.b16 %v2175
        %v2909 = vunpack.c.l.b16 %v2176
        %v2910 = vunpack.c.h.b16 %v2176
        %v2911 = vunpack.c.l.b16 %v2177
        %v2912 = vunpack.c.h.b16 %v2177
        %v2913 = vunpack.c.l.b16 %v2178
        %v2914 = vunpack.c.h.b16 %v2178
        %v2915 = vunpack.c.l.b16 %v2179
        %v2916 = vunpack.c.h.b16 %v2179
        %v2917 = vunpack.c.l.b16 %v2180
        %v2918 = vunpack.c.h.b16 %v2180
        %v2919 = vunpack.c.l.b16 %v2181
        %v2920 = vunpack.c.h.b16 %v2181
        %v2921 = vunpack.c.l.b16 %v2182
        %v2922 = vunpack.c.h.b16 %v2182
        %v2923 = vunpack.c.l.b16 %v2183
        %v2924 = vunpack.c.h.b16 %v2183
        %v2925 = vunpack.c.l.b16 %v2184
        %v2926 = vunpack.c.h.b16 %v2184
        %v2927 = vunpack.c.l.b16 %v2185
        %v2928 = vunpack.c.h.b16 %v2185
        %v2929 = vunpack.c.l.b16 %v2186
        %v2930 = vunpack.c.h.b16 %v2186
        %v2931 = vunpack.c.l.b16 %v2187
        %v2932 = vunpack.c.h.b16 %v2187
        %v2933 = vunpack.c.l.b16 %v2188
        %v2934 = vunpack.c.h.b16 %v2188
        %v2935 = vunpack.c.l.b16 %v2189
        %v2936 = vunpack.c.h.b16 %v2189
        %v2937 = vunpack.c.l.b16 %v2190
        %v2938 = vunpack.c.h.b16 %v2190
        %v2939 = vunpack.c.l.b16 %v2191
        %v2940 = vunpack.c.h.b16 %v2191
        %v2941 = vunpack.c.l.b16 %v2192
        %v2942 = vunpack.c.h.b16 %v2192
        %v2943 = vunpack.c.l.b16 %v2193
        %v2944 = vunpack.c.h.b16 %v2193
        %v2945 = vunpack.c.l.b16 %v2194
        %v2946 = vunpack.c.h.b16 %v2194
        %v2947 = vunpack.c.l.b16 %v2195
        %v2948 = vunpack.c.h.b16 %v2195
        %v2949 = vunpack.c.l.b16 %v2196
        %v2950 = vunpack.c.h.b16 %v2196
        %v2951 = vunpack.c.l.b16 %v2197
        %v2952 = vunpack.c.h.b16 %v2197
        %v2953 = vunpack.c.l.b16 %v2198
        %v2954 = vunpack.c.h.b16 %v2198
        %v2955 = vunpack.c.l.b16 %v2199
        %v2956 = vunpack.c.h.b16 %v2199
        %v2957 = vunpack.c.l.b16 %v2200
        %v2958 = vunpack.c.h.b16 %v2200
        %v2959 = vunpack.c.l.b16 %v2201
        %v2960 = vunpack.c.h.b16 %v2201
        %v2961 = vunpack.c.l.b16 %v2202
        %v2962 = vunpack.c.h.b16 %v2202
        %v2963 = vunpack.c.l.b16 %v2203
        %v2964 = vunpack.c.h.b16 %v2203
        %v2965 = vunpack.c.l.b16 %v2204
        %v2966 = vunpack.c.h.b16 %v2204
        %v2967 = vunpack.c.l.b16 %v2205
        %v2968 = vunpack.c.h.b16 %v2205
        %v2969 = vunpack.c.l.b16 %v2206
        %v2970 = vunpack.c.h.b16 %v2206
        %v2971 = vunpack.c.l.b16 %v2207
        %v2972 = vunpack.c.h.b16 %v2207
        %v2973 = vunpack.c.l.b16 %v2208
        %v2974 = vunpack.c.h.b16 %v2208
        %v2975 = vunpack.c.l.b16 %v2209
        %v2976 = vunpack.c.h.b16 %v2209
        %v2977 = vunpack.c.l.b16 %v2210
        %v2978 = vunpack.c.h.b16 %v2210
        %v2979 = vunpack.c.l.b16 %v2211
        %v2980 = vunpack.c.h.b16 %v2211
        %v2981 = vunpack.c.l.b16 %v2212
        %v2982 = vunpack.c.h.b16 %v2212
        %v2983 = vunpack.c.l.b16 %v2213
        %v2984 = vunpack.c.h.b16 %v2213
        %v2985 = vunpack.c.l.b16 %v2214
        %v2986 = vunpack.c.h.b16 %v2214
        %v2987 = vunpack.c.l.b16 %v2215
        %v2988 = vunpack.c.h.b16 %v2215
        %v2989 = vunpack.c.l.b16 %v2216
        %v2990 = vunpack.c.h.b16 %v2216
        %v2991 = vunpack.c.l.b16 %v2217
        %v2992 = vunpack.c.h.b16 %v2217
        %v2993 = vunpack.c.l.b16 %v2218
        %v2994 = vunpack.c.h.b16 %v2218
        %v2995 = vunpack.c.l.b16 %v2219
        %v2996 = vunpack.c.h.b16 %v2219
        %v2997 = vunpack.c.l.b16 %v2220
        %v2998 = vunpack.c.h.b16 %v2220
        %v2999 = vunpack.c.l.b16 %v2221
        %v3000 = vunpack.c.h.b16 %v2221
        %v3001 = vunpack.c.l.b16 %v2222
        %v3002 = vunpack.c.h.b16 %v2222
        %v3003 = vunpack.c.l.b16 %v2223
        %v3004 = vunpack.c.h.b16 %v2223
        %v3005 = vunpack.c.l.b16 %v2224
        %v3006 = vunpack.c.h.b16 %v2224
        %v3007 = vunpack.c.l.b16 %v2225
        %v3008 = vunpack.c.h.b16 %v2225
        %v3009 = vunpack.c.l.b16 %v2226
        %v3010 = vunpack.c.h.b16 %v2226
        %v3011 = vunpack.c.l.b16 %v2227
        %v3012 = vunpack.c.h.b16 %v2227
        %v3013 = vunpack.c.l.b16 %v2228
        %v3014 = vunpack.c.h.b16 %v2228
        %v3015 = vpack.c.b16 %v2511, %v2503
        %v3016 = vpack.c.b16 %v2512, %v2504
        %v3017 = vpack.c.b16 %v2513, %v2505
        %v3018 = vpack.c.b16 %v2514, %v2506
        %v3019 = vpack.c.b16 %v2515, %v2507
        %v3020 = vpack.c.b16 %v2516, %v2508
        %v3021 = vpack.c.b16 %v2517, %v2509
        %v3022 = vpack.c.b16 %v2518, %v2510
        %v3023 = vpack.c.b16 %v2527, %v2519
        %v3024 = vpack.c.b16 %v2528, %v2520
        %v3025 = vpack.c.b16 %v2529, %v2521
        %v3026 = vpack.c.b16 %v2530, %v2522
        %v3027 = vpack.c.b16 %v2531, %v2523
        %v3028 = vpack.c.b16 %v2532, %v2524
        %v3029 = vpack.c.b16 %v2533, %v2525
        %v3030 = vpack.c.b16 %v2534, %v2526
        %v3031 = vpack.c.b16 %v2543, %v2535
        %v3032 = vpack.c.b16 %v2544, %v2536
        %v3033 = vpack.c.b16 %v2545, %v2537
        %v3034 = vpack.c.b16 %v2546, %v2538
        %v3035 = vpack.c.b16 %v2547, %v2539
        %v3036 = vpack.c.b16 %v2548, %v2540
        %v3037 = vpack.c.b16 %v2549, %v2541
        %v3038 = vpack.c.b16 %v2550, %v2542
        %v3039 = vpack.c.b16 %v2559, %v2551
        %v3040 = vpack.c.b16 %v2560, %v2552
        %v3041 = vpack.c.b16 %v2561, %v2553
        %v3042 = vpack.c.b16 %v2562, %v2554
        %v3043 = vpack.c.b16 %v2563, %v2555
        %v3044 = vpack.c.b16 %v2564, %v2556
        %v3045 = vpack.c.b16 %v2565, %v2557
        %v3046 = vpack.c.b16 %v2566, %v2558
        %v3047 = vpack.c.b16 %v2575, %v2567
        %v3048 = vpack.c.b16 %v2576, %v2568
        %v3049 = vpack.c.b16 %v2577, %v2569
        %v3050 = vpack.c.b16 %v2578, %v2570
        %v3051 = vpack.c.b16 %v2579, %v2571
        %v3052 = vpack.c.b16 %v2580, %v2572
        %v3053 = vpack.c.b16 %v2581, %v2573
        %v3054 = vpack.c.b16 %v2582, %v2574
        %v3055 = vpack.c.b16 %v2591, %v2583
        %v3056 = vpack.c.b16 %v2592, %v2584
        %v3057 = vpack.c.b16 %v2593, %v2585
        %v3058 = vpack.c.b16 %v2594, %v2586
        %v3059 = vpack.c.b16 %v2595, %v2587
        %v3060 = vpack.c.b16 %v2596, %v2588
        %v3061 = vpack.c.b16 %v2597, %v2589
        %v3062 = vpack.c.b16 %v2598, %v2590
        %v3063 = vpack.c.b16 %v2607, %v2599
        %v3064 = vpack.c.b16 %v2608, %v2600
        %v3065 = vpack.c.b16 %v2609, %v2601
        %v3066 = vpack.c.b16 %v2610, %v2602
        %v3067 = vpack.c.b16 %v2611, %v2603
        %v3068 = vpack.c.b16 %v2612, %v2604
        %v3069 = vpack.c.b16 %v2613, %v2605
        %v3070 = vpack.c.b16 %v2614, %v2606
        %v3071 = vpack.c.b16 %v2623, %v2615
        %v3072 = vpack.c.b16 %v2624, %v2616
        %v3073 = vpack.c.b16 %v2625, %v2617
        %v3074 = vpack.c.b16 %v2626, %v2618
        %v3075 = vpack.c.b16 %v2627, %v2619
        %v3076 = vpack.c.b16 %v2628, %v2620
        %v3077 = vpack.c.b16 %v2629, %v2621
        %v3078 = vpack.c.b16 %v2630, %v2622
        %v3079 = vpack.c.b16 %v2639, %v2631
        %v3080 = vpack.c.b16 %v2640, %v2632
        %v3081 = vpack.c.b16 %v2641, %v2633
        %v3082 = vpack.c.b16 %v2642, %v2634
        %v3083 = vpack.c.b16 %v2643, %v2635
        %v3084 = vpack.c.b16 %v2644, %v2636
        %v3085 = vpack.c.b16 %v2645, %v2637
        %v3086 = vpack.c.b16 %v2646, %v2638
        %v3087 = vpack.c.b16 %v2655, %v2647
        %v3088 = vpack.c.b16 %v2656, %v2648
        %v3089 = vpack.c.b16 %v2657, %v2649
        %v3090 = vpack.c.b16 %v2658, %v2650
        %v3091 = vpack.c.b16 %v2659, %v2651
        %v3092 = vpack.c.b16 %v2660, %v2652
        %v3093 = vpack.c.b16 %v2661, %v2653
        %v3094 = vpack.c.b16 %v2662, %v2654
        %v3095 = vpack.c.b16 %v2671, %v2663
        %v3096 = vpack.c.b16 %v2672, %v2664
        %v3097 = vpack.c.b16 %v2673, %v2665
        %v3098 = vpack.c.b16 %v2674, %v2666
        %v3099 = vpack.c.b16 %v2675, %v2667
        %v3100 = vpack.c.b16 %v2676, %v2668
        %v3101 = vpack.c.b16 %v2677, %v2669
        %v3102 = vpack.c.b16 %v2678, %v2670
        %v3103 = vpack.c.b16 %v2687, %v2679
        %v3104 = vpack.c.b16 %v2688, %v2680
        %v3105 = vpack.c.b16 %v2689, %v2681
        %v3106 = vpack.c.b16 %v2690, %v2682
        %v3107 = vpack.c.b16 %v2691, %v2683
        %v3108 = vpack.c.b16 %v2692, %v2684
        %v3109 = vpack.c.b16 %v2693, %v2685
        %v3110 = vpack.c.b16 %v2694, %v2686
        %v3111 = vpack.c.b16 %v2703, %v2695
        %v3112 = vpack.c.b16 %v2704, %v2696
        %v3113 = vpack.c.b16 %v2705, %v2697
        %v3114 = vpack.c.b16 %v2706, %v2698
        %v3115 = vpack.c.b16 %v2707, %v2699
        %v3116 = vpack.c.b16 %v2708, %v2700
        %v3117 = vpack.c.b16 %v2709, %v2701
        %v3118 = vpack.c.b16 %v2710, %v2702
        %v3119 = vpack.c.b16 %v2719, %v2711
        %v3120 = vpack.c.b16 %v2720, %v2712
        %v3121 = vpack.c.b16 %v2721, %v2713
        %v3122 = vpack.c.b16 %v2722, %v2714
        %v3123 = vpack.c.b16 %v2723, %v2715
        %v3124 = vpack.c.b16 %v2724, %v2716
        %v3125 = vpack.c.b16 %v2725, %v2717
        %v3126 = vpack.c.b16 %v2726, %v2718
        %v3127 = vpack.c.b16 %v2735, %v2727
        %v3128 = vpack.c.b16 %v2736, %v2728
        %v3129 = vpack.c.b16 %v2737, %v2729
        %v3130 = vpack.c.b16 %v2738, %v2730
        %v3131 = vpack.c.b16 %v2739, %v2731
        %v3132 = vpack.c.b16 %v2740, %v2732
        %v3133 = vpack.c.b16 %v2741, %v2733
        %v3134 = vpack.c.b16 %v2742, %v2734
        %v3135 = vpack.c.b16 %v2751, %v2743
        %v3136 = vpack.c.b16 %v2752, %v2744
        %v3137 = vpack.c.b16 %v2753, %v2745
        %v3138 = vpack.c.b16 %v2754, %v2746
        %v3139 = vpack.c.b16 %v2755, %v2747
        %v3140 = vpack.c.b16 %v2756, %v2748
        %v3141 = vpack.c.b16 %v2757, %v2749
        %v3142 = vpack.c.b16 %v2758, %v2750
        %v3143 = vpack.c.b16 %v2767, %v2759
        %v3144 = vpack.c.b16 %v2768, %v2760
        %v3145 = vpack.c.b16 %v2769, %v2761
        %v3146 = vpack.c.b16 %v2770, %v2762
        %v3147 = vpack.c.b16 %v2771, %v2763
        %v3148 = vpack.c.b16 %v2772, %v2764
        %v3149 = vpack.c.b16 %v2773, %v2765
        %v3150 = vpack.c.b16 %v2774, %v2766
        %v3151 = vpack.c.b16 %v2783, %v2775
        %v3152 = vpack.c.b16 %v2784, %v2776
        %v3153 = vpack.c.b16 %v2785, %v2777
        %v3154 = vpack.c.b16 %v2786, %v2778
        %v3155 = vpack.c.b16 %v2787, %v2779
        %v3156 = vpack.c.b16 %v2788, %v2780
        %v3157 = vpack.c.b16 %v2789, %v2781
        %v3158 = vpack.c.b16 %v2790, %v2782
        %v3159 = vpack.c.b16 %v2799, %v2791
        %v3160 = vpack.c.b16 %v2800, %v2792
        %v3161 = vpack.c.b16 %v2801, %v2793
        %v3162 = vpack.c.b16 %v2802, %v2794
        %v3163 = vpack.c.b16 %v2803, %v2795
        %v3164 = vpack.c.b16 %v2804, %v2796
        %v3165 = vpack.c.b16 %v2805, %v2797
        %v3166 = vpack.c.b16 %v2806, %v2798
        %v3167 = vpack.c.b16 %v2815, %v2807
        %v3168 = vpack.c.b16 %v2816, %v2808
        %v3169 = vpack.c.b16 %v2817, %v2809
        %v3170 = vpack.c.b16 %v2818, %v2810
        %v3171 = vpack.c.b16 %v2819, %v2811
        %v3172 = vpack.c.b16 %v2820, %v2812
        %v3173 = vpack.c.b16 %v2821, %v2813
        %v3174 = vpack.c.b16 %v2822, %v2814
        %v3175 = vpack.c.b16 %v2831, %v2823
        %v3176 = vpack.c.b16 %v2832, %v2824
        %v3177 = vpack.c.b16 %v2833, %v2825
        %v3178 = vpack.c.b16 %v2834, %v2826
        %v3179 = vpack.c.b16 %v2835, %v2827
        %v3180 = vpack.c.b16 %v2836, %v2828
        %v3181 = vpack.c.b16 %v2837, %v2829
        %v3182 = vpack.c.b16 %v2838, %v2830
        %v3183 = vpack.c.b16 %v2847, %v2839
        %v3184 = vpack.c.b16 %v2848, %v2840
        %v3185 = vpack.c.b16 %v2849, %v2841
        %v3186 = vpack.c.b16 %v2850, %v2842
        %v3187 = vpack.c.b16 %v2851, %v2843
        %v3188 = vpack.c.b16 %v2852, %v2844
        %v3189 = vpack.c.b16 %v2853, %v2845
        %v3190 = vpack.c.b16 %v2854, %v2846
        %v3191 = vpack.c.b16 %v2863, %v2855
        %v3192 = vpack.c.b16 %v2864, %v2856
        %v3193 = vpack.c.b16 %v2865, %v2857
        %v3194 = vpack.c.b16 %v2866, %v2858
        %v3195 = vpack.c.b16 %v2867, %v2859
        %v3196 = vpack.c.b16 %v2868, %v2860
        %v3197 = vpack.c.b16 %v2869, %v2861
        %v3198 = vpack.c.b16 %v2870, %v2862
        %v3199 = vpack.c.b16 %v2879, %v2871
        %v3200 = vpack.c.b16 %v2880, %v2872
        %v3201 = vpack.c.b16 %v2881, %v2873
        %v3202 = vpack.c.b16 %v2882, %v2874
        %v3203 = vpack.c.b16 %v2883, %v2875
        %v3204 = vpack.c.b16 %v2884, %v2876
        %v3205 = vpack.c.b16 %v2885, %v2877
        %v3206 = vpack.c.b16 %v2886, %v2878
        %v3207 = vpack.c.b16 %v2895, %v2887
        %v3208 = vpack.c.b16 %v2896, %v2888
        %v3209 = vpack.c.b16 %v2897, %v2889
        %v3210 = vpack.c.b16 %v2898, %v2890
        %v3211 = vpack.c.b16 %v2899, %v2891
        %v3212 = vpack.c.b16 %v2900, %v2892
        %v3213 = vpack.c.b16 %v2901, %v2893
        %v3214 = vpack.c.b16 %v2902, %v2894
        %v3215 = vpack.c.b16 %v2911, %v2903
        %v3216 = vpack.c.b16 %v2912, %v2904
        %v3217 = vpack.c.b16 %v2913, %v2905
        %v3218 = vpack.c.b16 %v2914, %v2906
        %v3219 = vpack.c.b16 %v2915, %v2907
        %v3220 = vpack.c.b16 %v2916, %v2908
        %v3221 = vpack.c.b16 %v2917, %v2909
        %v3222 = vpack.c.b16 %v2918, %v2910
        %v3223 = vpack.c.b16 %v2927, %v2919
        %v3224 = vpack.c.b16 %v2928, %v2920
        %v3225 = vpack.c.b16 %v2929, %v2921
        %v3226 = vpack.c.b16 %v2930, %v2922
        %v3227 = vpack.c.b16 %v2931, %v2923
        %v3228 = vpack.c.b16 %v2932, %v2924
        %v3229 = vpack.c.b16 %v2933, %v2925
        %v3230 = vpack.c.b16 %v2934, %v2926
        %v3231 = vpack.c.b16 %v2943, %v2935
        %v3232 = vpack.c.b16 %v2944, %v2936
        %v3233 = vpack.c.b16 %v2945, %v2937
        %v3234 = vpack.c.b16 %v2946, %v2938
        %v3235 = vpack.c.b16 %v2947, %v2939
        %v3236 = vpack.c.b16 %v2948, %v2940
        %v3237 = vpack.c.b16 %v2949, %v2941
        %v3238 = vpack.c.b16 %v2950, %v2942
        %v3239 = vpack.c.b16 %v2959, %v2951
        %v3240 = vpack.c.b16 %v2960, %v2952
        %v3241 = vpack.c.b16 %v2961, %v2953
        %v3242 = vpack.c.b16 %v2962, %v2954
        %v3243 = vpack.c.b16 %v2963, %v2955
        %v3244 = vpack.c.b16 %v2964, %v2956
        %v3245 = vpack.c.b16 %v2965, %v2957
        %v3246 = vpack.c.b16 %v2966, %v2958
        %v3247 = vpack.c.b16 %v2975, %v2967
        %v3248 = vpack.c.b16 %v2976, %v2968
        %v3249 = vpack.c.b16 %v2977, %v2969
        %v3250 = vpack.c.b16 %v2978, %v2970
        %v3251 = vpack.c.b16 %v2979, %v2971
        %v3252 = vpack.c.b16 %v2980, %v2972
        %v3253 = vpack.c.b16 %v2981, %v2973
        %v3254 = vpack.c.b16 %v2982, %v2974
        %v3255 = vpack.c.b16 %v2991, %v2983
        %v3256 = vpack.c.b16 %v2992, %v2984
        %v3257 = vpack.c.b16 %v2993, %v2985
        %v3258 = vpack.c.b16 %v2994, %v2986
        %v3259 = vpack.c.b16 %v2995, %v2987
        %v3260 = vpack.c.b16 %v2996, %v2988
        %v3261 = vpack.c.b16 %v2997, %v2989
        %v3262 = vpack.c.b16 %v2998, %v2990
        %v3263 = vpack.c.b16 %v3007, %v2999
        %v3264 = vpack.c.b16 %v3008, %v3000
        %v3265 = vpack.c.b16 %v3009, %v3001
        %v3266 = vpack.c.b16 %v3010, %v3002
        %v3267 = vpack.c.b16 %v3011, %v3003
        %v3268 = vpack.c.b16 %v3012, %v3004
        %v3269 = vpack.c.b16 %v3013, %v3005
        %v3270 = vpack.c.b16 %v3014, %v3006
        %3527 = vmatpush.bf16.msra.mxu0 %v3071
        %3528 = vmatpush.bf16.msra.mxu0 %v3063
        %3529 = vmatpush.bf16.msra.mxu0 %v3055
        %3530 = vmatpush.bf16.msra.mxu0 %v3047
        %3531 = vmatpush.bf16.msra.mxu0 %v3039
        %3532 = vmatpush.bf16.msra.mxu0 %v3031
        %3533 = vmatpush.bf16.msra.mxu0 %v3023
        %3534 = vmatpush.bf16.msra.mxu0 %v3015
        %3535 = vmatmul.bf16.gmra.mxu0 %v963
        %v3536 = vpop.f32.mrf.mxu0
        %v3537 = vadd.f32 %v2231, %v3536
        %v3538 = vpop.f32.mrf.mxu0
        %v3539 = vadd.f32 %v2231, %v3538
        %3540 = vdwg.mxu0
        %3541 = vmatpush.bf16.msra.mxu0 %v3135
        %3542 = vmatpush.bf16.msra.mxu0 %v3127
        %3543 = vmatpush.bf16.msra.mxu0 %v3119
        %3544 = vmatpush.bf16.msra.mxu0 %v3111
        %3545 = vmatpush.bf16.msra.mxu0 %v3103
        %3546 = vmatpush.bf16.msra.mxu0 %v3095
        %3547 = vmatpush.bf16.msra.mxu0 %v3087
        %3548 = vmatpush.bf16.msra.mxu0 %v3079
        %3549 = vmatmul.bf16.gmra.mxu0 %v964
        %v3550 = vpop.f32.mrf.mxu0
        %v3551 = vadd.f32 %v3537, %v3550
        %v3552 = vpop.f32.mrf.mxu0
        %v3553 = vadd.f32 %v3539, %v3552
        %3554 = vdwg.mxu0
        %3555 = vmatpush.bf16.msra.mxu0 %v3199
        %3556 = vmatpush.bf16.msra.mxu0 %v3191
        %3557 = vmatpush.bf16.msra.mxu0 %v3183
        %3558 = vmatpush.bf16.msra.mxu0 %v3175
        %3559 = vmatpush.bf16.msra.mxu0 %v3167
        %3560 = vmatpush.bf16.msra.mxu0 %v3159
        %3561 = vmatpush.bf16.msra.mxu0 %v3151
        %3562 = vmatpush.bf16.msra.mxu0 %v3143
        %3563 = vmatmul.bf16.gmra.mxu0 %v965
        %v3564 = vpop.f32.mrf.mxu0
        %v3565 = vadd.f32 %v3551, %v3564
        %v3566 = vpop.f32.mrf.mxu0
        %v3567 = vadd.f32 %v3553, %v3566
        %3568 = vdwg.mxu0
        %3569 = vmatpush.bf16.msra.mxu0 %v3263
        %3570 = vmatpush.bf16.msra.mxu0 %v3255
        %3571 = vmatpush.bf16.msra.mxu0 %v3247
        %3572 = vmatpush.bf16.msra.mxu0 %v3239
        %3573 = vmatpush.bf16.msra.mxu0 %v3231
        %3574 = vmatpush.bf16.msra.mxu0 %v3223
        %3575 = vmatpush.bf16.msra.mxu0 %v3215
        %3576 = vmatpush.bf16.msra.mxu0 %v3207
        %3577 = vmatmul.bf16.gmra.mxu0 %v966
        %v3578 = vpop.f32.mrf.mxu0
        %v3579 = vadd.f32 %v3565, %v3578
        %v3580 = vpop.f32.mrf.mxu0
        %v3581 = vadd.f32 %v3567, %v3580
        %3582 = vdwg.mxu0
        %3583 = vmatpush.bf16.msra.mxu0 %v3072
        %3584 = vmatpush.bf16.msra.mxu0 %v3064
        %3585 = vmatpush.bf16.msra.mxu0 %v3056
        %3586 = vmatpush.bf16.msra.mxu0 %v3048
        %3587 = vmatpush.bf16.msra.mxu0 %v3040
        %3588 = vmatpush.bf16.msra.mxu0 %v3032
        %3589 = vmatpush.bf16.msra.mxu0 %v3024
        %3590 = vmatpush.bf16.msra.mxu0 %v3016
        %3591 = vmatmul.bf16.gmra.mxu0 %v963
        %v3592 = vpop.f32.mrf.mxu0
        %v3593 = vadd.f32 %v2232, %v3592
        %v3594 = vpop.f32.mrf.mxu0
        %v3595 = vadd.f32 %v2232, %v3594
        %3596 = vdwg.mxu0
        %3597 = vmatpush.bf16.msra.mxu0 %v3136
        %3598 = vmatpush.bf16.msra.mxu0 %v3128
        %3599 = vmatpush.bf16.msra.mxu0 %v3120
        %3600 = vmatpush.bf16.msra.mxu0 %v3112
        %3601 = vmatpush.bf16.msra.mxu0 %v3104
        %3602 = vmatpush.bf16.msra.mxu0 %v3096
        %3603 = vmatpush.bf16.msra.mxu0 %v3088
        %3604 = vmatpush.bf16.msra.mxu0 %v3080
        %3605 = vmatmul.bf16.gmra.mxu0 %v964
        %v3606 = vpop.f32.mrf.mxu0
        %v3607 = vadd.f32 %v3593, %v3606
        %v3608 = vpop.f32.mrf.mxu0
        %v3609 = vadd.f32 %v3595, %v3608
        %3610 = vdwg.mxu0
        %3611 = vmatpush.bf16.msra.mxu0 %v3200
        %3612 = vmatpush.bf16.msra.mxu0 %v3192
        %3613 = vmatpush.bf16.msra.mxu0 %v3184
        %3614 = vmatpush.bf16.msra.mxu0 %v3176
        %3615 = vmatpush.bf16.msra.mxu0 %v3168
        %3616 = vmatpush.bf16.msra.mxu0 %v3160
        %3617 = vmatpush.bf16.msra.mxu0 %v3152
        %3618 = vmatpush.bf16.msra.mxu0 %v3144
        %3619 = vmatmul.bf16.gmra.mxu0 %v965
        %v3620 = vpop.f32.mrf.mxu0
        %v3621 = vadd.f32 %v3607, %v3620
        %v3622 = vpop.f32.mrf.mxu0
        %v3623 = vadd.f32 %v3609, %v3622
        %3624 = vdwg.mxu0
        %3625 = vmatpush.bf16.msra.mxu0 %v3264
        %3626 = vmatpush.bf16.msra.mxu0 %v3256
        %3627 = vmatpush.bf16.msra.mxu0 %v3248
        %3628 = vmatpush.bf16.msra.mxu0 %v3240
        %3629 = vmatpush.bf16.msra.mxu0 %v3232
        %3630 = vmatpush.bf16.msra.mxu0 %v3224
        %3631 = vmatpush.bf16.msra.mxu0 %v3216
        %3632 = vmatpush.bf16.msra.mxu0 %v3208
        %3633 = vmatmul.bf16.gmra.mxu0 %v966
        %v3634 = vpop.f32.mrf.mxu0
        %v3635 = vadd.f32 %v3621, %v3634
        %v3636 = vpop.f32.mrf.mxu0
        %v3637 = vadd.f32 %v3623, %v3636
        %3638 = vdwg.mxu0
        %3639 = vmatpush.bf16.msra.mxu0 %v3073
        %3640 = vmatpush.bf16.msra.mxu0 %v3065
        %3641 = vmatpush.bf16.msra.mxu0 %v3057
        %3642 = vmatpush.bf16.msra.mxu0 %v3049
        %3643 = vmatpush.bf16.msra.mxu0 %v3041
        %3644 = vmatpush.bf16.msra.mxu0 %v3033
        %3645 = vmatpush.bf16.msra.mxu0 %v3025
        %3646 = vmatpush.bf16.msra.mxu0 %v3017
        %3647 = vmatmul.bf16.gmra.mxu0 %v963
        %v3648 = vpop.f32.mrf.mxu0
        %v3649 = vadd.f32 %v2233, %v3648
        %v3650 = vpop.f32.mrf.mxu0
        %v3651 = vadd.f32 %v2233, %v3650
        %3652 = vdwg.mxu0
        %3653 = vmatpush.bf16.msra.mxu0 %v3137
        %3654 = vmatpush.bf16.msra.mxu0 %v3129
        %3655 = vmatpush.bf16.msra.mxu0 %v3121
        %3656 = vmatpush.bf16.msra.mxu0 %v3113
        %3657 = vmatpush.bf16.msra.mxu0 %v3105
        %3658 = vmatpush.bf16.msra.mxu0 %v3097
        %3659 = vmatpush.bf16.msra.mxu0 %v3089
        %3660 = vmatpush.bf16.msra.mxu0 %v3081
        %3661 = vmatmul.bf16.gmra.mxu0 %v964
        %v3662 = vpop.f32.mrf.mxu0
        %v3663 = vadd.f32 %v3649, %v3662
        %v3664 = vpop.f32.mrf.mxu0
        %v3665 = vadd.f32 %v3651, %v3664
        %3666 = vdwg.mxu0
        %3667 = vmatpush.bf16.msra.mxu0 %v3201
        %3668 = vmatpush.bf16.msra.mxu0 %v3193
        %3669 = vmatpush.bf16.msra.mxu0 %v3185
        %3670 = vmatpush.bf16.msra.mxu0 %v3177
        %3671 = vmatpush.bf16.msra.mxu0 %v3169
        %3672 = vmatpush.bf16.msra.mxu0 %v3161
        %3673 = vmatpush.bf16.msra.mxu0 %v3153
        %3674 = vmatpush.bf16.msra.mxu0 %v3145
        %3675 = vmatmul.bf16.gmra.mxu0 %v965
        %v3676 = vpop.f32.mrf.mxu0
        %v3677 = vadd.f32 %v3663, %v3676
        %v3678 = vpop.f32.mrf.mxu0
        %v3679 = vadd.f32 %v3665, %v3678
        %3680 = vdwg.mxu0
        %3681 = vmatpush.bf16.msra.mxu0 %v3265
        %3682 = vmatpush.bf16.msra.mxu0 %v3257
        %3683 = vmatpush.bf16.msra.mxu0 %v3249
        %3684 = vmatpush.bf16.msra.mxu0 %v3241
        %3685 = vmatpush.bf16.msra.mxu0 %v3233
        %3686 = vmatpush.bf16.msra.mxu0 %v3225
        %3687 = vmatpush.bf16.msra.mxu0 %v3217
        %3688 = vmatpush.bf16.msra.mxu0 %v3209
        %3689 = vmatmul.bf16.gmra.mxu0 %v966
        %v3690 = vpop.f32.mrf.mxu0
        %v3691 = vadd.f32 %v3677, %v3690
        %v3692 = vpop.f32.mrf.mxu0
        %v3693 = vadd.f32 %v3679, %v3692
        %3694 = vdwg.mxu0
        %3695 = vmatpush.bf16.msra.mxu0 %v3074
        %3696 = vmatpush.bf16.msra.mxu0 %v3066
        %3697 = vmatpush.bf16.msra.mxu0 %v3058
        %3698 = vmatpush.bf16.msra.mxu0 %v3050
        %3699 = vmatpush.bf16.msra.mxu0 %v3042
        %3700 = vmatpush.bf16.msra.mxu0 %v3034
        %3701 = vmatpush.bf16.msra.mxu0 %v3026
        %3702 = vmatpush.bf16.msra.mxu0 %v3018
        %3703 = vmatmul.bf16.gmra.mxu0 %v963
        %v3704 = vpop.f32.mrf.mxu0
        %v3705 = vadd.f32 %v2234, %v3704
        %v3706 = vpop.f32.mrf.mxu0
        %v3707 = vadd.f32 %v2234, %v3706
        %3708 = vdwg.mxu0
        %3709 = vmatpush.bf16.msra.mxu0 %v3138
        %3710 = vmatpush.bf16.msra.mxu0 %v3130
        %3711 = vmatpush.bf16.msra.mxu0 %v3122
        %3712 = vmatpush.bf16.msra.mxu0 %v3114
        %3713 = vmatpush.bf16.msra.mxu0 %v3106
        %3714 = vmatpush.bf16.msra.mxu0 %v3098
        %3715 = vmatpush.bf16.msra.mxu0 %v3090
        %3716 = vmatpush.bf16.msra.mxu0 %v3082
        %3717 = vmatmul.bf16.gmra.mxu0 %v964
        %v3718 = vpop.f32.mrf.mxu0
        %v3719 = vadd.f32 %v3705, %v3718
        %v3720 = vpop.f32.mrf.mxu0
        %v3721 = vadd.f32 %v3707, %v3720
        %3722 = vdwg.mxu0
        %3723 = vmatpush.bf16.msra.mxu0 %v3202
        %3724 = vmatpush.bf16.msra.mxu0 %v3194
        %3725 = vmatpush.bf16.msra.mxu0 %v3186
        %3726 = vmatpush.bf16.msra.mxu0 %v3178
        %3727 = vmatpush.bf16.msra.mxu0 %v3170
        %3728 = vmatpush.bf16.msra.mxu0 %v3162
        %3729 = vmatpush.bf16.msra.mxu0 %v3154
        %3730 = vmatpush.bf16.msra.mxu0 %v3146
        %3731 = vmatmul.bf16.gmra.mxu0 %v965
        %v3732 = vpop.f32.mrf.mxu0
        %v3733 = vadd.f32 %v3719, %v3732
        %v3734 = vpop.f32.mrf.mxu0
        %v3735 = vadd.f32 %v3721, %v3734
        %3736 = vdwg.mxu0
        %3737 = vmatpush.bf16.msra.mxu0 %v3266
        %3738 = vmatpush.bf16.msra.mxu0 %v3258
        %3739 = vmatpush.bf16.msra.mxu0 %v3250
        %3740 = vmatpush.bf16.msra.mxu0 %v3242
        %3741 = vmatpush.bf16.msra.mxu0 %v3234
        %3742 = vmatpush.bf16.msra.mxu0 %v3226
        %3743 = vmatpush.bf16.msra.mxu0 %v3218
        %3744 = vmatpush.bf16.msra.mxu0 %v3210
        %3745 = vmatmul.bf16.gmra.mxu0 %v966
        %v3746 = vpop.f32.mrf.mxu0
        %v3747 = vadd.f32 %v3733, %v3746
        %v3748 = vpop.f32.mrf.mxu0
        %v3749 = vadd.f32 %v3735, %v3748
        %3750 = vdwg.mxu0
        %3751 = vmatpush.bf16.msra.mxu0 %v3075
        %3752 = vmatpush.bf16.msra.mxu0 %v3067
        %3753 = vmatpush.bf16.msra.mxu0 %v3059
        %3754 = vmatpush.bf16.msra.mxu0 %v3051
        %3755 = vmatpush.bf16.msra.mxu0 %v3043
        %3756 = vmatpush.bf16.msra.mxu0 %v3035
        %3757 = vmatpush.bf16.msra.mxu0 %v3027
        %3758 = vmatpush.bf16.msra.mxu0 %v3019
        %3759 = vmatmul.bf16.gmra.mxu0 %v963
        %v3760 = vpop.f32.mrf.mxu0
        %v3761 = vadd.f32 %v2235, %v3760
        %v3762 = vpop.f32.mrf.mxu0
        %v3763 = vadd.f32 %v2235, %v3762
        %3764 = vdwg.mxu0
        %3765 = vmatpush.bf16.msra.mxu0 %v3139
        %3766 = vmatpush.bf16.msra.mxu0 %v3131
        %3767 = vmatpush.bf16.msra.mxu0 %v3123
        %3768 = vmatpush.bf16.msra.mxu0 %v3115
        %3769 = vmatpush.bf16.msra.mxu0 %v3107
        %3770 = vmatpush.bf16.msra.mxu0 %v3099
        %3771 = vmatpush.bf16.msra.mxu0 %v3091
        %3772 = vmatpush.bf16.msra.mxu0 %v3083
        %3773 = vmatmul.bf16.gmra.mxu0 %v964
        %v3774 = vpop.f32.mrf.mxu0
        %v3775 = vadd.f32 %v3761, %v3774
        %v3776 = vpop.f32.mrf.mxu0
        %v3777 = vadd.f32 %v3763, %v3776
        %3778 = vdwg.mxu0
        %3779 = vmatpush.bf16.msra.mxu0 %v3203
        %3780 = vmatpush.bf16.msra.mxu0 %v3195
        %3781 = vmatpush.bf16.msra.mxu0 %v3187
        %3782 = vmatpush.bf16.msra.mxu0 %v3179
        %3783 = vmatpush.bf16.msra.mxu0 %v3171
        %3784 = vmatpush.bf16.msra.mxu0 %v3163
        %3785 = vmatpush.bf16.msra.mxu0 %v3155
        %3786 = vmatpush.bf16.msra.mxu0 %v3147
        %3787 = vmatmul.bf16.gmra.mxu0 %v965
        %v3788 = vpop.f32.mrf.mxu0
        %v3789 = vadd.f32 %v3775, %v3788
        %v3790 = vpop.f32.mrf.mxu0
        %v3791 = vadd.f32 %v3777, %v3790
        %3792 = vdwg.mxu0
        %3793 = vmatpush.bf16.msra.mxu0 %v3267
        %3794 = vmatpush.bf16.msra.mxu0 %v3259
        %3795 = vmatpush.bf16.msra.mxu0 %v3251
        %3796 = vmatpush.bf16.msra.mxu0 %v3243
        %3797 = vmatpush.bf16.msra.mxu0 %v3235
        %3798 = vmatpush.bf16.msra.mxu0 %v3227
        %3799 = vmatpush.bf16.msra.mxu0 %v3219
        %3800 = vmatpush.bf16.msra.mxu0 %v3211
        %3801 = vmatmul.bf16.gmra.mxu0 %v966
        %v3802 = vpop.f32.mrf.mxu0
        %v3803 = vadd.f32 %v3789, %v3802
        %v3804 = vpop.f32.mrf.mxu0
        %v3805 = vadd.f32 %v3791, %v3804
        %3806 = vdwg.mxu0
        %3807 = vmatpush.bf16.msra.mxu0 %v3076
        %3808 = vmatpush.bf16.msra.mxu0 %v3068
        %3809 = vmatpush.bf16.msra.mxu0 %v3060
        %3810 = vmatpush.bf16.msra.mxu0 %v3052
        %3811 = vmatpush.bf16.msra.mxu0 %v3044
        %3812 = vmatpush.bf16.msra.mxu0 %v3036
        %3813 = vmatpush.bf16.msra.mxu0 %v3028
        %3814 = vmatpush.bf16.msra.mxu0 %v3020
        %3815 = vmatmul.bf16.gmra.mxu0 %v963
        %v3816 = vpop.f32.mrf.mxu0
        %v3817 = vadd.f32 %v2236, %v3816
        %v3818 = vpop.f32.mrf.mxu0
        %v3819 = vadd.f32 %v2236, %v3818
        %3820 = vdwg.mxu0
        %3821 = vmatpush.bf16.msra.mxu0 %v3140
        %3822 = vmatpush.bf16.msra.mxu0 %v3132
        %3823 = vmatpush.bf16.msra.mxu0 %v3124
        %3824 = vmatpush.bf16.msra.mxu0 %v3116
        %3825 = vmatpush.bf16.msra.mxu0 %v3108
        %3826 = vmatpush.bf16.msra.mxu0 %v3100
        %3827 = vmatpush.bf16.msra.mxu0 %v3092
        %3828 = vmatpush.bf16.msra.mxu0 %v3084
        %3829 = vmatmul.bf16.gmra.mxu0 %v964
        %v3830 = vpop.f32.mrf.mxu0
        %v3831 = vadd.f32 %v3817, %v3830
        %v3832 = vpop.f32.mrf.mxu0
        %v3833 = vadd.f32 %v3819, %v3832
        %3834 = vdwg.mxu0
        %3835 = vmatpush.bf16.msra.mxu0 %v3204
        %3836 = vmatpush.bf16.msra.mxu0 %v3196
        %3837 = vmatpush.bf16.msra.mxu0 %v3188
        %3838 = vmatpush.bf16.msra.mxu0 %v3180
        %3839 = vmatpush.bf16.msra.mxu0 %v3172
        %3840 = vmatpush.bf16.msra.mxu0 %v3164
        %3841 = vmatpush.bf16.msra.mxu0 %v3156
        %3842 = vmatpush.bf16.msra.mxu0 %v3148
        %3843 = vmatmul.bf16.gmra.mxu0 %v965
        %v3844 = vpop.f32.mrf.mxu0
        %v3845 = vadd.f32 %v3831, %v3844
        %v3846 = vpop.f32.mrf.mxu0
        %v3847 = vadd.f32 %v3833, %v3846
        %3848 = vdwg.mxu0
        %3849 = vmatpush.bf16.msra.mxu0 %v3268
        %3850 = vmatpush.bf16.msra.mxu0 %v3260
        %3851 = vmatpush.bf16.msra.mxu0 %v3252
        %3852 = vmatpush.bf16.msra.mxu0 %v3244
        %3853 = vmatpush.bf16.msra.mxu0 %v3236
        %3854 = vmatpush.bf16.msra.mxu0 %v3228
        %3855 = vmatpush.bf16.msra.mxu0 %v3220
        %3856 = vmatpush.bf16.msra.mxu0 %v3212
        %3857 = vmatmul.bf16.gmra.mxu0 %v966
        %v3858 = vpop.f32.mrf.mxu0
        %v3859 = vadd.f32 %v3845, %v3858
        %v3860 = vpop.f32.mrf.mxu0
        %v3861 = vadd.f32 %v3847, %v3860
        %3862 = vdwg.mxu0
        %3863 = vmatpush.bf16.msra.mxu0 %v3077
        %3864 = vmatpush.bf16.msra.mxu0 %v3069
        %3865 = vmatpush.bf16.msra.mxu0 %v3061
        %3866 = vmatpush.bf16.msra.mxu0 %v3053
        %3867 = vmatpush.bf16.msra.mxu0 %v3045
        %3868 = vmatpush.bf16.msra.mxu0 %v3037
        %3869 = vmatpush.bf16.msra.mxu0 %v3029
        %3870 = vmatpush.bf16.msra.mxu0 %v3021
        %3871 = vmatmul.bf16.gmra.mxu0 %v963
        %v3872 = vpop.f32.mrf.mxu0
        %v3873 = vadd.f32 %v2237, %v3872
        %v3874 = vpop.f32.mrf.mxu0
        %v3875 = vadd.f32 %v2237, %v3874
        %3876 = vdwg.mxu0
        %3877 = vmatpush.bf16.msra.mxu0 %v3141
        %3878 = vmatpush.bf16.msra.mxu0 %v3133
        %3879 = vmatpush.bf16.msra.mxu0 %v3125
        %3880 = vmatpush.bf16.msra.mxu0 %v3117
        %3881 = vmatpush.bf16.msra.mxu0 %v3109
        %3882 = vmatpush.bf16.msra.mxu0 %v3101
        %3883 = vmatpush.bf16.msra.mxu0 %v3093
        %3884 = vmatpush.bf16.msra.mxu0 %v3085
        %3885 = vmatmul.bf16.gmra.mxu0 %v964
        %v3886 = vpop.f32.mrf.mxu0
        %v3887 = vadd.f32 %v3873, %v3886
        %v3888 = vpop.f32.mrf.mxu0
        %v3889 = vadd.f32 %v3875, %v3888
        %3890 = vdwg.mxu0
        %3891 = vmatpush.bf16.msra.mxu0 %v3205
        %3892 = vmatpush.bf16.msra.mxu0 %v3197
        %3893 = vmatpush.bf16.msra.mxu0 %v3189
        %3894 = vmatpush.bf16.msra.mxu0 %v3181
        %3895 = vmatpush.bf16.msra.mxu0 %v3173
        %3896 = vmatpush.bf16.msra.mxu0 %v3165
        %3897 = vmatpush.bf16.msra.mxu0 %v3157
        %3898 = vmatpush.bf16.msra.mxu0 %v3149
        %3899 = vmatmul.bf16.gmra.mxu0 %v965
        %v3900 = vpop.f32.mrf.mxu0
        %v3901 = vadd.f32 %v3887, %v3900
        %v3902 = vpop.f32.mrf.mxu0
        %v3903 = vadd.f32 %v3889, %v3902
        %3904 = vdwg.mxu0
        %3905 = vmatpush.bf16.msra.mxu0 %v3269
        %3906 = vmatpush.bf16.msra.mxu0 %v3261
        %3907 = vmatpush.bf16.msra.mxu0 %v3253
        %3908 = vmatpush.bf16.msra.mxu0 %v3245
        %3909 = vmatpush.bf16.msra.mxu0 %v3237
        %3910 = vmatpush.bf16.msra.mxu0 %v3229
        %3911 = vmatpush.bf16.msra.mxu0 %v3221
        %3912 = vmatpush.bf16.msra.mxu0 %v3213
        %3913 = vmatmul.bf16.gmra.mxu0 %v966
        %v3914 = vpop.f32.mrf.mxu0
        %v3915 = vadd.f32 %v3901, %v3914
        %v3916 = vpop.f32.mrf.mxu0
        %v3917 = vadd.f32 %v3903, %v3916
        %3918 = vdwg.mxu0
        %3919 = vmatpush.bf16.msra.mxu0 %v3078
        %3920 = vmatpush.bf16.msra.mxu0 %v3070
        %3921 = vmatpush.bf16.msra.mxu0 %v3062
        %3922 = vmatpush.bf16.msra.mxu0 %v3054
        %3923 = vmatpush.bf16.msra.mxu0 %v3046
        %3924 = vmatpush.bf16.msra.mxu0 %v3038
        %3925 = vmatpush.bf16.msra.mxu0 %v3030
        %3926 = vmatpush.bf16.msra.mxu0 %v3022
        %3927 = vmatmul.bf16.gmra.mxu0 %v963
        %v3928 = vpop.f32.mrf.mxu0
        %v3929 = vadd.f32 %v2238, %v3928
        %v3930 = vpop.f32.mrf.mxu0
        %v3931 = vadd.f32 %v2238, %v3930
        %3932 = vdwg.mxu0
        %3933 = vmatpush.bf16.msra.mxu0 %v3142
        %3934 = vmatpush.bf16.msra.mxu0 %v3134
        %3935 = vmatpush.bf16.msra.mxu0 %v3126
        %3936 = vmatpush.bf16.msra.mxu0 %v3118
        %3937 = vmatpush.bf16.msra.mxu0 %v3110
        %3938 = vmatpush.bf16.msra.mxu0 %v3102
        %3939 = vmatpush.bf16.msra.mxu0 %v3094
        %3940 = vmatpush.bf16.msra.mxu0 %v3086
        %3941 = vmatmul.bf16.gmra.mxu0 %v964
        %v3942 = vpop.f32.mrf.mxu0
        %v3943 = vadd.f32 %v3929, %v3942
        %v3944 = vpop.f32.mrf.mxu0
        %v3945 = vadd.f32 %v3931, %v3944
        %3946 = vdwg.mxu0
        %3947 = vmatpush.bf16.msra.mxu0 %v3206
        %3948 = vmatpush.bf16.msra.mxu0 %v3198
        %3949 = vmatpush.bf16.msra.mxu0 %v3190
        %3950 = vmatpush.bf16.msra.mxu0 %v3182
        %3951 = vmatpush.bf16.msra.mxu0 %v3174
        %3952 = vmatpush.bf16.msra.mxu0 %v3166
        %3953 = vmatpush.bf16.msra.mxu0 %v3158
        %3954 = vmatpush.bf16.msra.mxu0 %v3150
        %3955 = vmatmul.bf16.gmra.mxu0 %v965
        %v3956 = vpop.f32.mrf.mxu0
        %v3957 = vadd.f32 %v3943, %v3956
        %v3958 = vpop.f32.mrf.mxu0
        %v3959 = vadd.f32 %v3945, %v3958
        %3960 = vdwg.mxu0
        %3961 = vmatpush.bf16.msra.mxu0 %v3270
        %3962 = vmatpush.bf16.msra.mxu0 %v3262
        %3963 = vmatpush.bf16.msra.mxu0 %v3254
        %3964 = vmatpush.bf16.msra.mxu0 %v3246
        %3965 = vmatpush.bf16.msra.mxu0 %v3238
        %3966 = vmatpush.bf16.msra.mxu0 %v3230
        %3967 = vmatpush.bf16.msra.mxu0 %v3222
        %3968 = vmatpush.bf16.msra.mxu0 %v3214
        %3969 = vmatmul.bf16.gmra.mxu0 %v966
        %v3970 = vpop.f32.mrf.mxu0
        %v3971 = vadd.f32 %v3957, %v3970
        %v3972 = vpop.f32.mrf.mxu0
        %v3973 = vadd.f32 %v3959, %v3972
        %3974 = vdwg.mxu0
        %v3975 = vpack.c.bf16 %v3635, %v3579
        %v3976 = vpack.c.bf16 %v3747, %v3691
        %v3977 = vpack.c.bf16 %v3859, %v3803
        %v3978 = vpack.c.bf16 %v3971, %v3915
        %v3979 = vpack.c.bf16 %v3637, %v3581
        %v3980 = vpack.c.bf16 %v3749, %v3693
        %v3981 = vpack.c.bf16 %v3861, %v3805
        %v3982 = vpack.c.bf16 %v3973, %v3917
        %v3985 = vunpack.c.l.b16 %v1969
        %v3986 = vunpack.c.l.b16 %v1971
        %v3987 = vpack.c.b16 %v3986, %v3985
        %v3991 = vunpack.c.l.b16 %v3975
        %v3992 = vunpack.c.l.b16 %v3979
        %v3993 = vpack.c.b16 %v3992, %v3991
        %3995 = vmatpush.bf16.xpose.msra.mxu0 0
        %3996 = vmatpush.bf16.xpose.msra.mxu0 0
        %3997 = vmatpush.bf16.xpose.msra.mxu0 0
        %3998 = vmatpush.bf16.xpose.msra.mxu0 0
        %3999 = vmatpush.bf16.xpose.msra.mxu0 0
        %4000 = vmatpush.bf16.xpose.msra.mxu0 0
        %4001 = vmatpush.bf16.xpose.msra.mxu0 0
        %4002 = vmatpush.bf16.xpose.msra.mxu0 %v3993
        %4003 = vmatmul.bf16.gmra.mxu0 %v3987
        %v4004 = vpop.f32.mrf.mxu0
        %v4005 = vadd.f32 0.0, %v4004
        %v4006 = vpop.f32.mrf.mxu0
        %v4007 = vadd.f32 0.0, %v4006
        %4008 = vdwg.mxu0
        %v4009 = vunpack.c.h.b16 %v1969
        %v4010 = vunpack.c.h.b16 %v1971
        %v4011 = vpack.c.b16 %v4010, %v4009
        %v4013 = vunpack.c.h.b16 %v3975
        %v4014 = vunpack.c.h.b16 %v3979
        %v4015 = vpack.c.b16 %v4014, %v4013
        %4017 = vmatpush.bf16.xpose.msra.mxu0 0
        %4018 = vmatpush.bf16.xpose.msra.mxu0 0
        %4019 = vmatpush.bf16.xpose.msra.mxu0 0
        %4020 = vmatpush.bf16.xpose.msra.mxu0 0
        %4021 = vmatpush.bf16.xpose.msra.mxu0 0
        %4022 = vmatpush.bf16.xpose.msra.mxu0 0
        %4023 = vmatpush.bf16.xpose.msra.mxu0 0
        %4024 = vmatpush.bf16.xpose.msra.mxu0 %v4015
        %4025 = vmatmul.bf16.gmra.mxu0 %v4011
        %v4026 = vpop.f32.mrf.mxu0
        %v4027 = vadd.f32 0.0, %v4026
        %v4028 = vpop.f32.mrf.mxu0
        %v4029 = vadd.f32 0.0, %v4028
        %4030 = vdwg.mxu0
        %v4033 = vunpack.c.l.b16 %v1970
        %v4034 = vunpack.c.l.b16 %v1972
        %v4035 = vpack.c.b16 %v4034, %v4033
        %v4039 = vunpack.c.l.b16 %v3976
        %v4040 = vunpack.c.l.b16 %v3980
        %v4041 = vpack.c.b16 %v4040, %v4039
        %4043 = vmatpush.bf16.xpose.msra.mxu0 0
        %4044 = vmatpush.bf16.xpose.msra.mxu0 0
        %4045 = vmatpush.bf16.xpose.msra.mxu0 0
        %4046 = vmatpush.bf16.xpose.msra.mxu0 0
        %4047 = vmatpush.bf16.xpose.msra.mxu0 0
        %4048 = vmatpush.bf16.xpose.msra.mxu0 0
        %4049 = vmatpush.bf16.xpose.msra.mxu0 0
        %4050 = vmatpush.bf16.xpose.msra.mxu0 %v4041
        %4051 = vmatmul.bf16.gmra.mxu0 %v4035
        %v4052 = vpop.f32.mrf.mxu0
        %v4053 = vadd.f32 0.0, %v4052
        %v4054 = vpop.f32.mrf.mxu0
        %v4055 = vadd.f32 0.0, %v4054
        %4056 = vdwg.mxu0
        %v4057 = vunpack.c.h.b16 %v1970
        %v4058 = vunpack.c.h.b16 %v1972
        %v4059 = vpack.c.b16 %v4058, %v4057
        %v4061 = vunpack.c.h.b16 %v3976
        %v4062 = vunpack.c.h.b16 %v3980
        %v4063 = vpack.c.b16 %v4062, %v4061
        %4065 = vmatpush.bf16.xpose.msra.mxu0 0
        %4066 = vmatpush.bf16.xpose.msra.mxu0 0
        %4067 = vmatpush.bf16.xpose.msra.mxu0 0
        %4068 = vmatpush.bf16.xpose.msra.mxu0 0
        %4069 = vmatpush.bf16.xpose.msra.mxu0 0
        %4070 = vmatpush.bf16.xpose.msra.mxu0 0
        %4071 = vmatpush.bf16.xpose.msra.mxu0 0
        %4072 = vmatpush.bf16.xpose.msra.mxu0 %v4063
        %4073 = vmatmul.bf16.gmra.mxu0 %v4059
        %v4074 = vpop.f32.mrf.mxu0
        %v4075 = vadd.f32 0.0, %v4074
        %v4076 = vpop.f32.mrf.mxu0
        %v4077 = vadd.f32 0.0, %v4076
        %4078 = vdwg.mxu0
        %vm4079 = vcmask 130048
        %v4080 = vsel %vm4079, %v4005, -inf
        %4081 = vmax.xlane.f32.xlu0 %v4080
        %v4082 = vpop.xlane.xlu0 %4081
        %v4083 = vsel %vm4079, %v4007, -inf
        %4084 = vmax.xlane.f32.xlu0 %v4083
        %v4085 = vpop.xlane.xlu0 %4084
        %v4086 = vsel %vm4079, %v4027, -inf
        %4087 = vmax.xlane.f32.xlu0 %v4086
        %v4088 = vpop.xlane.xlu0 %4087
        %v4089 = vsel %vm4079, %v4029, -inf
        %4090 = vmax.xlane.f32.xlu0 %v4089
        %v4091 = vpop.xlane.xlu0 %4090
        %v4092 = vsel %vm4079, %v4053, -inf
        %4093 = vmax.xlane.f32.xlu0 %v4092
        %v4094 = vpop.xlane.xlu0 %4093
        %v4095 = vsel %vm4079, %v4055, -inf
        %4096 = vmax.xlane.f32.xlu0 %v4095
        %v4097 = vpop.xlane.xlu0 %4096
        %v4098 = vsel %vm4079, %v4075, -inf
        %4099 = vmax.xlane.f32.xlu0 %v4098
        %v4100 = vpop.xlane.xlu0 %4099
        %v4101 = vsel %vm4079, %v4077, -inf
        %4102 = vmax.xlane.f32.xlu0 %v4101
        %v4103 = vpop.xlane.xlu0 %4102
        %v4104 = vsub.f32 %v4005, %v4082
        %v4105 = vsub.f32 %v4007, %v4085
        %v4106 = vsub.f32 %v4027, %v4088
        %v4107 = vsub.f32 %v4029, %v4091
        %v4108 = vsub.f32 %v4053, %v4094
        %v4109 = vsub.f32 %v4055, %v4097
        %v4110 = vsub.f32 %v4075, %v4100
        %v4111 = vsub.f32 %v4077, %v4103
        %v4112 = vmul.f32 %v4104, 1.442695
        %v4113 = vpow.pop %v4112
        %v4114 = vmul.f32 %v4105, 1.442695
        %v4115 = vpow.pop %v4114
        %v4116 = vmul.f32 %v4106, 1.442695
        %v4117 = vpow.pop %v4116
        %v4118 = vmul.f32 %v4107, 1.442695
        %v4119 = vpow.pop %v4118
        %v4120 = vmul.f32 %v4108, 1.442695
        %v4121 = vpow.pop %v4120
        %v4122 = vmul.f32 %v4109, 1.442695
        %v4123 = vpow.pop %v4122
        %v4124 = vmul.f32 %v4110, 1.442695
        %v4125 = vpow.pop %v4124
        %v4126 = vmul.f32 %v4111, 1.442695
        %v4127 = vpow.pop %v4126
        %v4128 = vsel %vm4079, %v4113, 0.0
        %4129 = vadd.xlane.f32.xlu0 %v4128
        %v4130 = vpop.xlane.xlu0 %4129
        %v4131 = vsel %vm4079, %v4115, 0.0
        %4132 = vadd.xlane.f32.xlu0 %v4131
        %v4133 = vpop.xlane.xlu0 %4132
        %v4134 = vsel %vm4079, %v4117, 0.0
        %4135 = vadd.xlane.f32.xlu0 %v4134
        %v4136 = vpop.xlane.xlu0 %4135
        %v4137 = vsel %vm4079, %v4119, 0.0
        %4138 = vadd.xlane.f32.xlu0 %v4137
        %v4139 = vpop.xlane.xlu0 %4138
        %v4140 = vsel %vm4079, %v4121, 0.0
        %4141 = vadd.xlane.f32.xlu0 %v4140
        %v4142 = vpop.xlane.xlu0 %4141
        %v4143 = vsel %vm4079, %v4123, 0.0
        %4144 = vadd.xlane.f32.xlu0 %v4143
        %v4145 = vpop.xlane.xlu0 %4144
        %v4146 = vsel %vm4079, %v4125, 0.0
        %4147 = vadd.xlane.f32.xlu0 %v4146
        %v4148 = vpop.xlane.xlu0 %4147
        %v4149 = vsel %vm4079, %v4127, 0.0
        %4150 = vadd.xlane.f32.xlu0 %v4149
        %v4151 = vpop.xlane.xlu0 %4150
        %v4152 = vrcp.pop %v4130
        %v4153 = vrcp.pop %v4133
        %v4154 = vrcp.pop %v4136
        %v4155 = vrcp.pop %v4139
        %v4156 = vrcp.pop %v4142
        %v4157 = vrcp.pop %v4145
        %v4158 = vrcp.pop %v4148
        %v4159 = vrcp.pop %v4151
        %v4160 = vmul.f32 %v4113, %v4152
        %v4161 = vmul.f32 %v4115, %v4153
        %v4162 = vmul.f32 %v4117, %v4154
        %v4163 = vmul.f32 %v4119, %v4155
        %v4164 = vmul.f32 %v4121, %v4156
        %v4165 = vmul.f32 %v4123, %v4157
        %v4166 = vmul.f32 %v4125, %v4158
        %v4167 = vmul.f32 %v4127, %v4159
        %v4168 = vpack.c.bf16 %v4160, %v4160
        %v4169 = vpack.c.bf16 %v4161, %v4161
        %v4170 = vpack.c.bf16 %v4162, %v4162
        %v4171 = vpack.c.bf16 %v4163, %v4163
        %v4172 = vpack.c.bf16 %v4164, %v4164
        %v4173 = vpack.c.bf16 %v4165, %v4165
        %v4174 = vpack.c.bf16 %v4166, %v4166
        %v4175 = vpack.c.bf16 %v4167, %v4167
        %v4178 = vunpack.c.l.b16 %v4168
        %v4179 = vunpack.c.l.b16 %v4169
        %v4180 = vpack.c.b16 %v4179, %v4178
        %v4183 = vunpack.c.l.b16 %v3977
        %v4184 = vunpack.c.l.b16 %v3981
        %v4185 = vpack.c.b16 %v4184, %v4183
        %v4188 = vsel %vm4079, %v4180, 0
        %4190 = vmatpush.bf16.msra.mxu0 0
        %4191 = vmatpush.bf16.msra.mxu0 0
        %4192 = vmatpush.bf16.msra.mxu0 0
        %4193 = vmatpush.bf16.msra.mxu0 0
        %4194 = vmatpush.bf16.msra.mxu0 0
        %4195 = vmatpush.bf16.msra.mxu0 0
        %4196 = vmatpush.bf16.msra.mxu0 0
        %4197 = vmatpush.bf16.msra.mxu0 %v4185
        %4198 = vmatmul.bf16.gmra.mxu0 %v4188
        %v4199 = vpop.f32.mrf.mxu0
        %v4200 = vadd.f32 0.0, %v4199
        %v4201 = vpop.f32.mrf.mxu0
        %v4202 = vadd.f32 0.0, %v4201
        %4203 = vdwg.mxu0
        %v4206 = vunpack.c.l.b16 %v4170
        %v4207 = vunpack.c.l.b16 %v4171
        %v4208 = vpack.c.b16 %v4207, %v4206
        %v4209 = vunpack.c.h.b16 %v3977
        %v4210 = vunpack.c.h.b16 %v3981
        %v4211 = vpack.c.b16 %v4210, %v4209
        %v4214 = vsel %vm4079, %v4208, 0
        %4216 = vmatpush.bf16.msra.mxu0 0
        %4217 = vmatpush.bf16.msra.mxu0 0
        %4218 = vmatpush.bf16.msra.mxu0 0
        %4219 = vmatpush.bf16.msra.mxu0 0
        %4220 = vmatpush.bf16.msra.mxu0 0
        %4221 = vmatpush.bf16.msra.mxu0 0
        %4222 = vmatpush.bf16.msra.mxu0 0
        %4223 = vmatpush.bf16.msra.mxu0 %v4211
        %4224 = vmatmul.bf16.gmra.mxu0 %v4214
        %v4225 = vpop.f32.mrf.mxu0
        %v4226 = vadd.f32 0.0, %v4225
        %v4227 = vpop.f32.mrf.mxu0
        %v4228 = vadd.f32 0.0, %v4227
        %4229 = vdwg.mxu0
        %v4232 = vunpack.c.l.b16 %v4172
        %v4233 = vunpack.c.l.b16 %v4173
        %v4234 = vpack.c.b16 %v4233, %v4232
        %v4237 = vunpack.c.l.b16 %v3978
        %v4238 = vunpack.c.l.b16 %v3982
        %v4239 = vpack.c.b16 %v4238, %v4237
        %v4242 = vsel %vm4079, %v4234, 0
        %4244 = vmatpush.bf16.msra.mxu0 0
        %4245 = vmatpush.bf16.msra.mxu0 0
        %4246 = vmatpush.bf16.msra.mxu0 0
        %4247 = vmatpush.bf16.msra.mxu0 0
        %4248 = vmatpush.bf16.msra.mxu0 0
        %4249 = vmatpush.bf16.msra.mxu0 0
        %4250 = vmatpush.bf16.msra.mxu0 0
        %4251 = vmatpush.bf16.msra.mxu0 %v4239
        %4252 = vmatmul.bf16.gmra.mxu0 %v4242
        %v4253 = vpop.f32.mrf.mxu0
        %v4254 = vadd.f32 0.0, %v4253
        %v4255 = vpop.f32.mrf.mxu0
        %v4256 = vadd.f32 0.0, %v4255
        %4257 = vdwg.mxu0
        %v4260 = vunpack.c.l.b16 %v4174
        %v4261 = vunpack.c.l.b16 %v4175
        %v4262 = vpack.c.b16 %v4261, %v4260
        %v4263 = vunpack.c.h.b16 %v3978
        %v4264 = vunpack.c.h.b16 %v3982
        %v4265 = vpack.c.b16 %v4264, %v4263
        %v4268 = vsel %vm4079, %v4262, 0
        %4270 = vmatpush.bf16.msra.mxu0 0
        %4271 = vmatpush.bf16.msra.mxu0 0
        %4272 = vmatpush.bf16.msra.mxu0 0
        %4273 = vmatpush.bf16.msra.mxu0 0
        %4274 = vmatpush.bf16.msra.mxu0 0
        %4275 = vmatpush.bf16.msra.mxu0 0
        %4276 = vmatpush.bf16.msra.mxu0 0
        %4277 = vmatpush.bf16.msra.mxu0 %v4265
        %4278 = vmatmul.bf16.gmra.mxu0 %v4268
        %v4279 = vpop.f32.mrf.mxu0
        %v4280 = vadd.f32 0.0, %v4279
        %v4281 = vpop.f32.mrf.mxu0
        %v4282 = vadd.f32 0.0, %v4281
        %4283 = vdwg.mxu0
        %v4284 = vpack.c.bf16 %v4202, %v4200
        %v4285 = vpack.c.bf16 %v4228, %v4226
        %v4286 = vpack.c.bf16 %v4256, %v4254
        %v4287 = vpack.c.bf16 %v4282, %v4280
        %v4288 = vld [vmem:[#allocation13] sm:$0xff]
        %v4289 = vld [vmem:[#allocation13 + $0x8] sm:$0xff]
        %v4290 = vld [vmem:[#allocation13 + $0x10] sm:$0xff]
        %v4291 = vld [vmem:[#allocation13 + $0x18] sm:$0xff]
        %v4292 = vld [vmem:[#allocation13 + $0x20] sm:$0xff]
        %v4293 = vld [vmem:[#allocation13 + $0x28] sm:$0xff]
        %v4294 = vld [vmem:[#allocation13 + $0x30] sm:$0xff]
        %v4295 = vld [vmem:[#allocation13 + $0x38] sm:$0xff]
        %v4296 = vld [vmem:[#allocation13 + $0x40] sm:$0xff]
        %v4297 = vld [vmem:[#allocation13 + $0x48] sm:$0xff]
        %v4298 = vld [vmem:[#allocation13 + $0x50] sm:$0xff]
        %v4299 = vld [vmem:[#allocation13 + $0x58] sm:$0xff]
        %v4300 = vld [vmem:[#allocation13 + $0x60] sm:$0xff]
        %v4301 = vld [vmem:[#allocation13 + $0x68] sm:$0xff]
        %v4302 = vld [vmem:[#allocation13 + $0x70] sm:$0xff]
        %v4303 = vld [vmem:[#allocation13 + $0x78] sm:$0xff]
        %v4304 = vld [vmem:[#allocation13 + $0x80] sm:$0xff]
        %v4305 = vld [vmem:[#allocation13 + $0x88] sm:$0xff]
        %v4306 = vld [vmem:[#allocation13 + $0x90] sm:$0xff]
        %v4307 = vld [vmem:[#allocation13 + $0x98] sm:$0xff]
        %v4308 = vld [vmem:[#allocation13 + $0xa0] sm:$0xff]
        %v4309 = vld [vmem:[#allocation13 + $0xa8] sm:$0xff]
        %v4310 = vld [vmem:[#allocation13 + $0xb0] sm:$0xff]
        %v4311 = vld [vmem:[#allocation13 + $0xb8] sm:$0xff]
        %v4312 = vld [vmem:[#allocation13 + $0xc0] sm:$0xff]
        %v4313 = vld [vmem:[#allocation13 + $0xc8] sm:$0xff]
        %v4314 = vld [vmem:[#allocation13 + $0xd0] sm:$0xff]
        %v4315 = vld [vmem:[#allocation13 + $0xd8] sm:$0xff]
        %v4316 = vld [vmem:[#allocation13 + $0xe0] sm:$0xff]
        %v4317 = vld [vmem:[#allocation13 + $0xe8] sm:$0xff]
        %v4318 = vld [vmem:[#allocation13 + $0xf0] sm:$0xff]
        %v4319 = vld [vmem:[#allocation13 + $0xf8] sm:$0xff]
        %v4320 = vld [vmem:[#allocation13 + $0x100] sm:$0xff]
        %v4321 = vld [vmem:[#allocation13 + $0x108] sm:$0xff]
        %v4322 = vld [vmem:[#allocation13 + $0x110] sm:$0xff]
        %v4323 = vld [vmem:[#allocation13 + $0x118] sm:$0xff]
        %v4324 = vld [vmem:[#allocation13 + $0x120] sm:$0xff]
        %v4325 = vld [vmem:[#allocation13 + $0x128] sm:$0xff]
        %v4326 = vld [vmem:[#allocation13 + $0x130] sm:$0xff]
        %v4327 = vld [vmem:[#allocation13 + $0x138] sm:$0xff]
        %v4328 = vld [vmem:[#allocation13 + $0x140] sm:$0xff]
        %v4329 = vld [vmem:[#allocation13 + $0x148] sm:$0xff]
        %v4330 = vld [vmem:[#allocation13 + $0x150] sm:$0xff]
        %v4331 = vld [vmem:[#allocation13 + $0x158] sm:$0xff]
        %v4332 = vld [vmem:[#allocation13 + $0x160] sm:$0xff]
        %v4333 = vld [vmem:[#allocation13 + $0x168] sm:$0xff]
        %v4334 = vld [vmem:[#allocation13 + $0x170] sm:$0xff]
        %v4335 = vld [vmem:[#allocation13 + $0x178] sm:$0xff]
        %v4336 = vld [vmem:[#allocation13 + $0x180] sm:$0xff]
        %v4337 = vld [vmem:[#allocation13 + $0x188] sm:$0xff]
        %v4338 = vld [vmem:[#allocation13 + $0x190] sm:$0xff]
        %v4339 = vld [vmem:[#allocation13 + $0x198] sm:$0xff]
        %v4340 = vld [vmem:[#allocation13 + $0x1a0] sm:$0xff]
        %v4341 = vld [vmem:[#allocation13 + $0x1a8] sm:$0xff]
        %v4342 = vld [vmem:[#allocation13 + $0x1b0] sm:$0xff]
        %v4343 = vld [vmem:[#allocation13 + $0x1b8] sm:$0xff]
        %v4344 = vld [vmem:[#allocation13 + $0x1c0] sm:$0xff]
        %v4345 = vld [vmem:[#allocation13 + $0x1c8] sm:$0xff]
        %v4346 = vld [vmem:[#allocation13 + $0x1d0] sm:$0xff]
        %v4347 = vld [vmem:[#allocation13 + $0x1d8] sm:$0xff]
        %v4348 = vld [vmem:[#allocation13 + $0x1e0] sm:$0xff]
        %v4349 = vld [vmem:[#allocation13 + $0x1e8] sm:$0xff]
        %v4350 = vld [vmem:[#allocation13 + $0x1f0] sm:$0xff]
        %v4351 = vld [vmem:[#allocation13 + $0x1f8] sm:$0xff]
        %v4352 = vld [vmem:[#allocation13 + $0x200] sm:$0xff]
        %v4353 = vld [vmem:[#allocation13 + $0x208] sm:$0xff]
        %v4354 = vld [vmem:[#allocation13 + $0x210] sm:$0xff]
        %v4355 = vld [vmem:[#allocation13 + $0x218] sm:$0xff]
        %v4356 = vld [vmem:[#allocation13 + $0x220] sm:$0xff]
        %v4357 = vld [vmem:[#allocation13 + $0x228] sm:$0xff]
        %v4358 = vld [vmem:[#allocation13 + $0x230] sm:$0xff]
        %v4359 = vld [vmem:[#allocation13 + $0x238] sm:$0xff]
        %v4360 = vld [vmem:[#allocation13 + $0x240] sm:$0xff]
        %v4361 = vld [vmem:[#allocation13 + $0x248] sm:$0xff]
        %v4362 = vld [vmem:[#allocation13 + $0x250] sm:$0xff]
        %v4363 = vld [vmem:[#allocation13 + $0x258] sm:$0xff]
        %v4364 = vld [vmem:[#allocation13 + $0x260] sm:$0xff]
        %v4365 = vld [vmem:[#allocation13 + $0x268] sm:$0xff]
        %v4366 = vld [vmem:[#allocation13 + $0x270] sm:$0xff]
        %v4367 = vld [vmem:[#allocation13 + $0x278] sm:$0xff]
        %v4368 = vld [vmem:[#allocation13 + $0x280] sm:$0xff]
        %v4369 = vld [vmem:[#allocation13 + $0x288] sm:$0xff]
        %v4370 = vld [vmem:[#allocation13 + $0x290] sm:$0xff]
        %v4371 = vld [vmem:[#allocation13 + $0x298] sm:$0xff]
        %v4372 = vld [vmem:[#allocation13 + $0x2a0] sm:$0xff]
        %v4373 = vld [vmem:[#allocation13 + $0x2a8] sm:$0xff]
        %v4374 = vld [vmem:[#allocation13 + $0x2b0] sm:$0xff]
        %v4375 = vld [vmem:[#allocation13 + $0x2b8] sm:$0xff]
        %v4376 = vld [vmem:[#allocation13 + $0x2c0] sm:$0xff]
        %v4377 = vld [vmem:[#allocation13 + $0x2c8] sm:$0xff]
        %v4378 = vld [vmem:[#allocation13 + $0x2d0] sm:$0xff]
        %v4379 = vld [vmem:[#allocation13 + $0x2d8] sm:$0xff]
        %v4380 = vld [vmem:[#allocation13 + $0x2e0] sm:$0xff]
        %v4381 = vld [vmem:[#allocation13 + $0x2e8] sm:$0xff]
        %v4382 = vld [vmem:[#allocation13 + $0x2f0] sm:$0xff]
        %v4383 = vld [vmem:[#allocation13 + $0x2f8] sm:$0xff]
        %v4384 = vld [vmem:[#allocation13 + $0x300] sm:$0xff]
        %v4385 = vld [vmem:[#allocation13 + $0x308] sm:$0xff]
        %v4386 = vld [vmem:[#allocation13 + $0x310] sm:$0xff]
        %v4387 = vld [vmem:[#allocation13 + $0x318] sm:$0xff]
        %v4388 = vld [vmem:[#allocation13 + $0x320] sm:$0xff]
        %v4389 = vld [vmem:[#allocation13 + $0x328] sm:$0xff]
        %v4390 = vld [vmem:[#allocation13 + $0x330] sm:$0xff]
        %v4391 = vld [vmem:[#allocation13 + $0x338] sm:$0xff]
        %v4392 = vld [vmem:[#allocation13 + $0x340] sm:$0xff]
        %v4393 = vld [vmem:[#allocation13 + $0x348] sm:$0xff]
        %v4394 = vld [vmem:[#allocation13 + $0x350] sm:$0xff]
        %v4395 = vld [vmem:[#allocation13 + $0x358] sm:$0xff]
        %v4396 = vld [vmem:[#allocation13 + $0x360] sm:$0xff]
        %v4397 = vld [vmem:[#allocation13 + $0x368] sm:$0xff]
        %v4398 = vld [vmem:[#allocation13 + $0x370] sm:$0xff]
        %v4399 = vld [vmem:[#allocation13 + $0x378] sm:$0xff]
        %v4400 = vld [vmem:[#allocation13 + $0x380] sm:$0xff]
        %v4401 = vld [vmem:[#allocation13 + $0x388] sm:$0xff]
        %v4402 = vld [vmem:[#allocation13 + $0x390] sm:$0xff]
        %v4403 = vld [vmem:[#allocation13 + $0x398] sm:$0xff]
        %v4404 = vld [vmem:[#allocation13 + $0x3a0] sm:$0xff]
        %v4405 = vld [vmem:[#allocation13 + $0x3a8] sm:$0xff]
        %v4406 = vld [vmem:[#allocation13 + $0x3b0] sm:$0xff]
        %v4407 = vld [vmem:[#allocation13 + $0x3b8] sm:$0xff]
        %v4408 = vld [vmem:[#allocation13 + $0x3c0] sm:$0xff]
        %v4409 = vld [vmem:[#allocation13 + $0x3c8] sm:$0xff]
        %v4410 = vld [vmem:[#allocation13 + $0x3d0] sm:$0xff]
        %v4411 = vld [vmem:[#allocation13 + $0x3d8] sm:$0xff]
        %v4412 = vld [vmem:[#allocation13 + $0x3e0] sm:$0xff]
        %v4413 = vld [vmem:[#allocation13 + $0x3e8] sm:$0xff]
        %v4414 = vld [vmem:[#allocation13 + $0x3f0] sm:$0xff]
        %v4415 = vld [vmem:[#allocation13 + $0x3f8] sm:$0xff]
        %v4416 = vld [vmem:[#allocation15] sm:$0xf]
        %v4418 = vperm.slane %v4416, 0
        %v4419 = vperm.slane %v4416, 1
        %v4420 = vperm.slane %v4416, 2
        %v4421 = vperm.slane %v4416, 3
        %v4554 = vunpack.c.l.b16 %v4288
        %v4555 = vunpack.c.h.b16 %v4288
        %v4556 = vunpack.c.l.b16 %v4289
        %v4557 = vunpack.c.h.b16 %v4289
        %v4558 = vunpack.c.l.b16 %v4290
        %v4559 = vunpack.c.h.b16 %v4290
        %v4560 = vunpack.c.l.b16 %v4291
        %v4561 = vunpack.c.h.b16 %v4291
        %v4562 = vunpack.c.l.b16 %v4292
        %v4563 = vunpack.c.h.b16 %v4292
        %v4564 = vunpack.c.l.b16 %v4293
        %v4565 = vunpack.c.h.b16 %v4293
        %v4566 = vunpack.c.l.b16 %v4294
        %v4567 = vunpack.c.h.b16 %v4294
        %v4568 = vunpack.c.l.b16 %v4295
        %v4569 = vunpack.c.h.b16 %v4295
        %v4570 = vunpack.c.l.b16 %v4296
        %v4571 = vunpack.c.h.b16 %v4296
        %v4572 = vunpack.c.l.b16 %v4297
        %v4573 = vunpack.c.h.b16 %v4297
        %v4574 = vunpack.c.l.b16 %v4298
        %v4575 = vunpack.c.h.b16 %v4298
        %v4576 = vunpack.c.l.b16 %v4299
        %v4577 = vunpack.c.h.b16 %v4299
        %v4578 = vunpack.c.l.b16 %v4300
        %v4579 = vunpack.c.h.b16 %v4300
        %v4580 = vunpack.c.l.b16 %v4301
        %v4581 = vunpack.c.h.b16 %v4301
        %v4582 = vunpack.c.l.b16 %v4302
        %v4583 = vunpack.c.h.b16 %v4302
        %v4584 = vunpack.c.l.b16 %v4303
        %v4585 = vunpack.c.h.b16 %v4303
        %v4586 = vunpack.c.l.b16 %v4304
        %v4587 = vunpack.c.h.b16 %v4304
        %v4588 = vunpack.c.l.b16 %v4305
        %v4589 = vunpack.c.h.b16 %v4305
        %v4590 = vunpack.c.l.b16 %v4306
        %v4591 = vunpack.c.h.b16 %v4306
        %v4592 = vunpack.c.l.b16 %v4307
        %v4593 = vunpack.c.h.b16 %v4307
        %v4594 = vunpack.c.l.b16 %v4308
        %v4595 = vunpack.c.h.b16 %v4308
        %v4596 = vunpack.c.l.b16 %v4309
        %v4597 = vunpack.c.h.b16 %v4309
        %v4598 = vunpack.c.l.b16 %v4310
        %v4599 = vunpack.c.h.b16 %v4310
        %v4600 = vunpack.c.l.b16 %v4311
        %v4601 = vunpack.c.h.b16 %v4311
        %v4602 = vunpack.c.l.b16 %v4312
        %v4603 = vunpack.c.h.b16 %v4312
        %v4604 = vunpack.c.l.b16 %v4313
        %v4605 = vunpack.c.h.b16 %v4313
        %v4606 = vunpack.c.l.b16 %v4314
        %v4607 = vunpack.c.h.b16 %v4314
        %v4608 = vunpack.c.l.b16 %v4315
        %v4609 = vunpack.c.h.b16 %v4315
        %v4610 = vunpack.c.l.b16 %v4316
        %v4611 = vunpack.c.h.b16 %v4316
        %v4612 = vunpack.c.l.b16 %v4317
        %v4613 = vunpack.c.h.b16 %v4317
        %v4614 = vunpack.c.l.b16 %v4318
        %v4615 = vunpack.c.h.b16 %v4318
        %v4616 = vunpack.c.l.b16 %v4319
        %v4617 = vunpack.c.h.b16 %v4319
        %v4618 = vunpack.c.l.b16 %v4320
        %v4619 = vunpack.c.h.b16 %v4320
        %v4620 = vunpack.c.l.b16 %v4321
        %v4621 = vunpack.c.h.b16 %v4321
        %v4622 = vunpack.c.l.b16 %v4322
        %v4623 = vunpack.c.h.b16 %v4322
        %v4624 = vunpack.c.l.b16 %v4323
        %v4625 = vunpack.c.h.b16 %v4323
        %v4626 = vunpack.c.l.b16 %v4324
        %v4627 = vunpack.c.h.b16 %v4324
        %v4628 = vunpack.c.l.b16 %v4325
        %v4629 = vunpack.c.h.b16 %v4325
        %v4630 = vunpack.c.l.b16 %v4326
        %v4631 = vunpack.c.h.b16 %v4326
        %v4632 = vunpack.c.l.b16 %v4327
        %v4633 = vunpack.c.h.b16 %v4327
        %v4634 = vunpack.c.l.b16 %v4328
        %v4635 = vunpack.c.h.b16 %v4328
        %v4636 = vunpack.c.l.b16 %v4329
        %v4637 = vunpack.c.h.b16 %v4329
        %v4638 = vunpack.c.l.b16 %v4330
        %v4639 = vunpack.c.h.b16 %v4330
        %v4640 = vunpack.c.l.b16 %v4331
        %v4641 = vunpack.c.h.b16 %v4331
        %v4642 = vunpack.c.l.b16 %v4332
        %v4643 = vunpack.c.h.b16 %v4332
        %v4644 = vunpack.c.l.b16 %v4333
        %v4645 = vunpack.c.h.b16 %v4333
        %v4646 = vunpack.c.l.b16 %v4334
        %v4647 = vunpack.c.h.b16 %v4334
        %v4648 = vunpack.c.l.b16 %v4335
        %v4649 = vunpack.c.h.b16 %v4335
        %v4650 = vunpack.c.l.b16 %v4336
        %v4651 = vunpack.c.h.b16 %v4336
        %v4652 = vunpack.c.l.b16 %v4337
        %v4653 = vunpack.c.h.b16 %v4337
        %v4654 = vunpack.c.l.b16 %v4338
        %v4655 = vunpack.c.h.b16 %v4338
        %v4656 = vunpack.c.l.b16 %v4339
        %v4657 = vunpack.c.h.b16 %v4339
        %v4658 = vunpack.c.l.b16 %v4340
        %v4659 = vunpack.c.h.b16 %v4340
        %v4660 = vunpack.c.l.b16 %v4341
        %v4661 = vunpack.c.h.b16 %v4341
        %v4662 = vunpack.c.l.b16 %v4342
        %v4663 = vunpack.c.h.b16 %v4342
        %v4664 = vunpack.c.l.b16 %v4343
        %v4665 = vunpack.c.h.b16 %v4343
        %v4666 = vunpack.c.l.b16 %v4344
        %v4667 = vunpack.c.h.b16 %v4344
        %v4668 = vunpack.c.l.b16 %v4345
        %v4669 = vunpack.c.h.b16 %v4345
        %v4670 = vunpack.c.l.b16 %v4346
        %v4671 = vunpack.c.h.b16 %v4346
        %v4672 = vunpack.c.l.b16 %v4347
        %v4673 = vunpack.c.h.b16 %v4347
        %v4674 = vunpack.c.l.b16 %v4348
        %v4675 = vunpack.c.h.b16 %v4348
        %v4676 = vunpack.c.l.b16 %v4349
        %v4677 = vunpack.c.h.b16 %v4349
        %v4678 = vunpack.c.l.b16 %v4350
        %v4679 = vunpack.c.h.b16 %v4350
        %v4680 = vunpack.c.l.b16 %v4351
        %v4681 = vunpack.c.h.b16 %v4351
        %v4682 = vunpack.c.l.b16 %v4352
        %v4683 = vunpack.c.h.b16 %v4352
        %v4684 = vunpack.c.l.b16 %v4353
        %v4685 = vunpack.c.h.b16 %v4353
        %v4686 = vunpack.c.l.b16 %v4354
        %v4687 = vunpack.c.h.b16 %v4354
        %v4688 = vunpack.c.l.b16 %v4355
        %v4689 = vunpack.c.h.b16 %v4355
        %v4690 = vunpack.c.l.b16 %v4356
        %v4691 = vunpack.c.h.b16 %v4356
        %v4692 = vunpack.c.l.b16 %v4357
        %v4693 = vunpack.c.h.b16 %v4357
        %v4694 = vunpack.c.l.b16 %v4358
        %v4695 = vunpack.c.h.b16 %v4358
        %v4696 = vunpack.c.l.b16 %v4359
        %v4697 = vunpack.c.h.b16 %v4359
        %v4698 = vunpack.c.l.b16 %v4360
        %v4699 = vunpack.c.h.b16 %v4360
        %v4700 = vunpack.c.l.b16 %v4361
        %v4701 = vunpack.c.h.b16 %v4361
        %v4702 = vunpack.c.l.b16 %v4362
        %v4703 = vunpack.c.h.b16 %v4362
        %v4704 = vunpack.c.l.b16 %v4363
        %v4705 = vunpack.c.h.b16 %v4363
        %v4706 = vunpack.c.l.b16 %v4364
        %v4707 = vunpack.c.h.b16 %v4364
        %v4708 = vunpack.c.l.b16 %v4365
        %v4709 = vunpack.c.h.b16 %v4365
        %v4710 = vunpack.c.l.b16 %v4366
        %v4711 = vunpack.c.h.b16 %v4366
        %v4712 = vunpack.c.l.b16 %v4367
        %v4713 = vunpack.c.h.b16 %v4367
        %v4714 = vunpack.c.l.b16 %v4368
        %v4715 = vunpack.c.h.b16 %v4368
        %v4716 = vunpack.c.l.b16 %v4369
        %v4717 = vunpack.c.h.b16 %v4369
        %v4718 = vunpack.c.l.b16 %v4370
        %v4719 = vunpack.c.h.b16 %v4370
        %v4720 = vunpack.c.l.b16 %v4371
        %v4721 = vunpack.c.h.b16 %v4371
        %v4722 = vunpack.c.l.b16 %v4372
        %v4723 = vunpack.c.h.b16 %v4372
        %v4724 = vunpack.c.l.b16 %v4373
        %v4725 = vunpack.c.h.b16 %v4373
        %v4726 = vunpack.c.l.b16 %v4374
        %v4727 = vunpack.c.h.b16 %v4374
        %v4728 = vunpack.c.l.b16 %v4375
        %v4729 = vunpack.c.h.b16 %v4375
        %v4730 = vunpack.c.l.b16 %v4376
        %v4731 = vunpack.c.h.b16 %v4376
        %v4732 = vunpack.c.l.b16 %v4377
        %v4733 = vunpack.c.h.b16 %v4377
        %v4734 = vunpack.c.l.b16 %v4378
        %v4735 = vunpack.c.h.b16 %v4378
        %v4736 = vunpack.c.l.b16 %v4379
        %v4737 = vunpack.c.h.b16 %v4379
        %v4738 = vunpack.c.l.b16 %v4380
        %v4739 = vunpack.c.h.b16 %v4380
        %v4740 = vunpack.c.l.b16 %v4381
        %v4741 = vunpack.c.h.b16 %v4381
        %v4742 = vunpack.c.l.b16 %v4382
        %v4743 = vunpack.c.h.b16 %v4382
        %v4744 = vunpack.c.l.b16 %v4383
        %v4745 = vunpack.c.h.b16 %v4383
        %v4746 = vunpack.c.l.b16 %v4384
        %v4747 = vunpack.c.h.b16 %v4384
        %v4748 = vunpack.c.l.b16 %v4385
        %v4749 = vunpack.c.h.b16 %v4385
        %v4750 = vunpack.c.l.b16 %v4386
        %v4751 = vunpack.c.h.b16 %v4386
        %v4752 = vunpack.c.l.b16 %v4387
        %v4753 = vunpack.c.h.b16 %v4387
        %v4754 = vunpack.c.l.b16 %v4388
        %v4755 = vunpack.c.h.b16 %v4388
        %v4756 = vunpack.c.l.b16 %v4389
        %v4757 = vunpack.c.h.b16 %v4389
        %v4758 = vunpack.c.l.b16 %v4390
        %v4759 = vunpack.c.h.b16 %v4390
        %v4760 = vunpack.c.l.b16 %v4391
        %v4761 = vunpack.c.h.b16 %v4391
        %v4762 = vunpack.c.l.b16 %v4392
        %v4763 = vunpack.c.h.b16 %v4392
        %v4764 = vunpack.c.l.b16 %v4393
        %v4765 = vunpack.c.h.b16 %v4393
        %v4766 = vunpack.c.l.b16 %v4394
        %v4767 = vunpack.c.h.b16 %v4394
        %v4768 = vunpack.c.l.b16 %v4395
        %v4769 = vunpack.c.h.b16 %v4395
        %v4770 = vunpack.c.l.b16 %v4396
        %v4771 = vunpack.c.h.b16 %v4396
        %v4772 = vunpack.c.l.b16 %v4397
        %v4773 = vunpack.c.h.b16 %v4397
        %v4774 = vunpack.c.l.b16 %v4398
        %v4775 = vunpack.c.h.b16 %v4398
        %v4776 = vunpack.c.l.b16 %v4399
        %v4777 = vunpack.c.h.b16 %v4399
        %v4778 = vunpack.c.l.b16 %v4400
        %v4779 = vunpack.c.h.b16 %v4400
        %v4780 = vunpack.c.l.b16 %v4401
        %v4781 = vunpack.c.h.b16 %v4401
        %v4782 = vunpack.c.l.b16 %v4402
        %v4783 = vunpack.c.h.b16 %v4402
        %v4784 = vunpack.c.l.b16 %v4403
        %v4785 = vunpack.c.h.b16 %v4403
        %v4786 = vunpack.c.l.b16 %v4404
        %v4787 = vunpack.c.h.b16 %v4404
        %v4788 = vunpack.c.l.b16 %v4405
        %v4789 = vunpack.c.h.b16 %v4405
        %v4790 = vunpack.c.l.b16 %v4406
        %v4791 = vunpack.c.h.b16 %v4406
        %v4792 = vunpack.c.l.b16 %v4407
        %v4793 = vunpack.c.h.b16 %v4407
        %v4794 = vunpack.c.l.b16 %v4408
        %v4795 = vunpack.c.h.b16 %v4408
        %v4796 = vunpack.c.l.b16 %v4409
        %v4797 = vunpack.c.h.b16 %v4409
        %v4798 = vunpack.c.l.b16 %v4410
        %v4799 = vunpack.c.h.b16 %v4410
        %v4800 = vunpack.c.l.b16 %v4411
        %v4801 = vunpack.c.h.b16 %v4411
        %v4802 = vunpack.c.l.b16 %v4412
        %v4803 = vunpack.c.h.b16 %v4412
        %v4804 = vunpack.c.l.b16 %v4413
        %v4805 = vunpack.c.h.b16 %v4413
        %v4806 = vunpack.c.l.b16 %v4414
        %v4807 = vunpack.c.h.b16 %v4414
        %v4808 = vunpack.c.l.b16 %v4415
        %v4809 = vunpack.c.h.b16 %v4415
        %v4810 = vpack.c.b16 %v4558, %v4554
        %v4811 = vpack.c.b16 %v4559, %v4555
        %v4812 = vpack.c.b16 %v4560, %v4556
        %v4813 = vpack.c.b16 %v4561, %v4557
        %v4814 = vpack.c.b16 %v4566, %v4562
        %v4815 = vpack.c.b16 %v4567, %v4563
        %v4816 = vpack.c.b16 %v4568, %v4564
        %v4817 = vpack.c.b16 %v4569, %v4565
        %v4818 = vpack.c.b16 %v4574, %v4570
        %v4819 = vpack.c.b16 %v4575, %v4571
        %v4820 = vpack.c.b16 %v4576, %v4572
        %v4821 = vpack.c.b16 %v4577, %v4573
        %v4822 = vpack.c.b16 %v4582, %v4578
        %v4823 = vpack.c.b16 %v4583, %v4579
        %v4824 = vpack.c.b16 %v4584, %v4580
        %v4825 = vpack.c.b16 %v4585, %v4581
        %v4826 = vpack.c.b16 %v4590, %v4586
        %v4827 = vpack.c.b16 %v4591, %v4587
        %v4828 = vpack.c.b16 %v4592, %v4588
        %v4829 = vpack.c.b16 %v4593, %v4589
        %v4830 = vpack.c.b16 %v4598, %v4594
        %v4831 = vpack.c.b16 %v4599, %v4595
        %v4832 = vpack.c.b16 %v4600, %v4596
        %v4833 = vpack.c.b16 %v4601, %v4597
        %v4834 = vpack.c.b16 %v4606, %v4602
        %v4835 = vpack.c.b16 %v4607, %v4603
        %v4836 = vpack.c.b16 %v4608, %v4604
        %v4837 = vpack.c.b16 %v4609, %v4605
        %v4838 = vpack.c.b16 %v4614, %v4610
        %v4839 = vpack.c.b16 %v4615, %v4611
        %v4840 = vpack.c.b16 %v4616, %v4612
        %v4841 = vpack.c.b16 %v4617, %v4613
        %v4842 = vpack.c.b16 %v4622, %v4618
        %v4843 = vpack.c.b16 %v4623, %v4619
        %v4844 = vpack.c.b16 %v4624, %v4620
        %v4845 = vpack.c.b16 %v4625, %v4621
        %v4846 = vpack.c.b16 %v4630, %v4626
        %v4847 = vpack.c.b16 %v4631, %v4627
        %v4848 = vpack.c.b16 %v4632, %v4628
        %v4849 = vpack.c.b16 %v4633, %v4629
        %v4850 = vpack.c.b16 %v4638, %v4634
        %v4851 = vpack.c.b16 %v4639, %v4635
        %v4852 = vpack.c.b16 %v4640, %v4636
        %v4853 = vpack.c.b16 %v4641, %v4637
        %v4854 = vpack.c.b16 %v4646, %v4642
        %v4855 = vpack.c.b16 %v4647, %v4643
        %v4856 = vpack.c.b16 %v4648, %v4644
        %v4857 = vpack.c.b16 %v4649, %v4645
        %v4858 = vpack.c.b16 %v4654, %v4650
        %v4859 = vpack.c.b16 %v4655, %v4651
        %v4860 = vpack.c.b16 %v4656, %v4652
        %v4861 = vpack.c.b16 %v4657, %v4653
        %v4862 = vpack.c.b16 %v4662, %v4658
        %v4863 = vpack.c.b16 %v4663, %v4659
        %v4864 = vpack.c.b16 %v4664, %v4660
        %v4865 = vpack.c.b16 %v4665, %v4661
        %v4866 = vpack.c.b16 %v4670, %v4666
        %v4867 = vpack.c.b16 %v4671, %v4667
        %v4868 = vpack.c.b16 %v4672, %v4668
        %v4869 = vpack.c.b16 %v4673, %v4669
        %v4870 = vpack.c.b16 %v4678, %v4674
        %v4871 = vpack.c.b16 %v4679, %v4675
        %v4872 = vpack.c.b16 %v4680, %v4676
        %v4873 = vpack.c.b16 %v4681, %v4677
        %v4874 = vpack.c.b16 %v4686, %v4682
        %v4875 = vpack.c.b16 %v4687, %v4683
        %v4876 = vpack.c.b16 %v4688, %v4684
        %v4877 = vpack.c.b16 %v4689, %v4685
        %v4878 = vpack.c.b16 %v4694, %v4690
        %v4879 = vpack.c.b16 %v4695, %v4691
        %v4880 = vpack.c.b16 %v4696, %v4692
        %v4881 = vpack.c.b16 %v4697, %v4693
        %v4882 = vpack.c.b16 %v4702, %v4698
        %v4883 = vpack.c.b16 %v4703, %v4699
        %v4884 = vpack.c.b16 %v4704, %v4700
        %v4885 = vpack.c.b16 %v4705, %v4701
        %v4886 = vpack.c.b16 %v4710, %v4706
        %v4887 = vpack.c.b16 %v4711, %v4707
        %v4888 = vpack.c.b16 %v4712, %v4708
        %v4889 = vpack.c.b16 %v4713, %v4709
        %v4890 = vpack.c.b16 %v4718, %v4714
        %v4891 = vpack.c.b16 %v4719, %v4715
        %v4892 = vpack.c.b16 %v4720, %v4716
        %v4893 = vpack.c.b16 %v4721, %v4717
        %v4894 = vpack.c.b16 %v4726, %v4722
        %v4895 = vpack.c.b16 %v4727, %v4723
        %v4896 = vpack.c.b16 %v4728, %v4724
        %v4897 = vpack.c.b16 %v4729, %v4725
        %v4898 = vpack.c.b16 %v4734, %v4730
        %v4899 = vpack.c.b16 %v4735, %v4731
        %v4900 = vpack.c.b16 %v4736, %v4732
        %v4901 = vpack.c.b16 %v4737, %v4733
        %v4902 = vpack.c.b16 %v4742, %v4738
        %v4903 = vpack.c.b16 %v4743, %v4739
        %v4904 = vpack.c.b16 %v4744, %v4740
        %v4905 = vpack.c.b16 %v4745, %v4741
        %v4906 = vpack.c.b16 %v4750, %v4746
        %v4907 = vpack.c.b16 %v4751, %v4747
        %v4908 = vpack.c.b16 %v4752, %v4748
        %v4909 = vpack.c.b16 %v4753, %v4749
        %v4910 = vpack.c.b16 %v4758, %v4754
        %v4911 = vpack.c.b16 %v4759, %v4755
        %v4912 = vpack.c.b16 %v4760, %v4756
        %v4913 = vpack.c.b16 %v4761, %v4757
        %v4914 = vpack.c.b16 %v4766, %v4762
        %v4915 = vpack.c.b16 %v4767, %v4763
        %v4916 = vpack.c.b16 %v4768, %v4764
        %v4917 = vpack.c.b16 %v4769, %v4765
        %v4918 = vpack.c.b16 %v4774, %v4770
        %v4919 = vpack.c.b16 %v4775, %v4771
        %v4920 = vpack.c.b16 %v4776, %v4772
        %v4921 = vpack.c.b16 %v4777, %v4773
        %v4922 = vpack.c.b16 %v4782, %v4778
        %v4923 = vpack.c.b16 %v4783, %v4779
        %v4924 = vpack.c.b16 %v4784, %v4780
        %v4925 = vpack.c.b16 %v4785, %v4781
        %v4926 = vpack.c.b16 %v4790, %v4786
        %v4927 = vpack.c.b16 %v4791, %v4787
        %v4928 = vpack.c.b16 %v4792, %v4788
        %v4929 = vpack.c.b16 %v4793, %v4789
        %v4930 = vpack.c.b16 %v4798, %v4794
        %v4931 = vpack.c.b16 %v4799, %v4795
        %v4932 = vpack.c.b16 %v4800, %v4796
        %v4933 = vpack.c.b16 %v4801, %v4797
        %v4934 = vpack.c.b16 %v4806, %v4802
        %v4935 = vpack.c.b16 %v4807, %v4803
        %v4936 = vpack.c.b16 %v4808, %v4804
        %v4937 = vpack.c.b16 %v4809, %v4805
        %5066 = vmatpush.bf16.msra.mxu0 %v4838
        %5067 = vmatpush.bf16.msra.mxu0 %v4834
        %5068 = vmatpush.bf16.msra.mxu0 %v4830
        %5069 = vmatpush.bf16.msra.mxu0 %v4826
        %5070 = vmatpush.bf16.msra.mxu0 %v4822
        %5071 = vmatpush.bf16.msra.mxu0 %v4818
        %5072 = vmatpush.bf16.msra.mxu0 %v4814
        %5073 = vmatpush.bf16.msra.mxu0 %v4810
        %5074 = vmatmul.bf16.gmra.mxu0 %v4284
        %v5075 = vpop.f32.mrf.mxu0
        %v5076 = vadd.f32 %v4418, %v5075
        %v5077 = vpop.f32.mrf.mxu0
        %v5078 = vadd.f32 %v4418, %v5077
        %5079 = vdwg.mxu0
        %5080 = vmatpush.bf16.msra.mxu0 %v4870
        %5081 = vmatpush.bf16.msra.mxu0 %v4866
        %5082 = vmatpush.bf16.msra.mxu0 %v4862
        %5083 = vmatpush.bf16.msra.mxu0 %v4858
        %5084 = vmatpush.bf16.msra.mxu0 %v4854
        %5085 = vmatpush.bf16.msra.mxu0 %v4850
        %5086 = vmatpush.bf16.msra.mxu0 %v4846
        %5087 = vmatpush.bf16.msra.mxu0 %v4842
        %5088 = vmatmul.bf16.gmra.mxu0 %v4285
        %v5089 = vpop.f32.mrf.mxu0
        %v5090 = vadd.f32 %v5076, %v5089
        %v5091 = vpop.f32.mrf.mxu0
        %v5092 = vadd.f32 %v5078, %v5091
        %5093 = vdwg.mxu0
        %5094 = vmatpush.bf16.msra.mxu0 %v4902
        %5095 = vmatpush.bf16.msra.mxu0 %v4898
        %5096 = vmatpush.bf16.msra.mxu0 %v4894
        %5097 = vmatpush.bf16.msra.mxu0 %v4890
        %5098 = vmatpush.bf16.msra.mxu0 %v4886
        %5099 = vmatpush.bf16.msra.mxu0 %v4882
        %5100 = vmatpush.bf16.msra.mxu0 %v4878
        %5101 = vmatpush.bf16.msra.mxu0 %v4874
        %5102 = vmatmul.bf16.gmra.mxu0 %v4286
        %v5103 = vpop.f32.mrf.mxu0
        %v5104 = vadd.f32 %v5090, %v5103
        %v5105 = vpop.f32.mrf.mxu0
        %v5106 = vadd.f32 %v5092, %v5105
        %5107 = vdwg.mxu0
        %5108 = vmatpush.bf16.msra.mxu0 %v4934
        %5109 = vmatpush.bf16.msra.mxu0 %v4930
        %5110 = vmatpush.bf16.msra.mxu0 %v4926
        %5111 = vmatpush.bf16.msra.mxu0 %v4922
        %5112 = vmatpush.bf16.msra.mxu0 %v4918
        %5113 = vmatpush.bf16.msra.mxu0 %v4914
        %5114 = vmatpush.bf16.msra.mxu0 %v4910
        %5115 = vmatpush.bf16.msra.mxu0 %v4906
        %5116 = vmatmul.bf16.gmra.mxu0 %v4287
        %v5117 = vpop.f32.mrf.mxu0
        %v5118 = vadd.f32 %v5104, %v5117
        %v5119 = vpop.f32.mrf.mxu0
        %v5120 = vadd.f32 %v5106, %v5119
        %5121 = vdwg.mxu0
        %5122 = vmatpush.bf16.msra.mxu0 %v4839
        %5123 = vmatpush.bf16.msra.mxu0 %v4835
        %5124 = vmatpush.bf16.msra.mxu0 %v4831
        %5125 = vmatpush.bf16.msra.mxu0 %v4827
        %5126 = vmatpush.bf16.msra.mxu0 %v4823
        %5127 = vmatpush.bf16.msra.mxu0 %v4819
        %5128 = vmatpush.bf16.msra.mxu0 %v4815
        %5129 = vmatpush.bf16.msra.mxu0 %v4811
        %5130 = vmatmul.bf16.gmra.mxu0 %v4284
        %v5131 = vpop.f32.mrf.mxu0
        %v5132 = vadd.f32 %v4419, %v5131
        %v5133 = vpop.f32.mrf.mxu0
        %v5134 = vadd.f32 %v4419, %v5133
        %5135 = vdwg.mxu0
        %5136 = vmatpush.bf16.msra.mxu0 %v4871
        %5137 = vmatpush.bf16.msra.mxu0 %v4867
        %5138 = vmatpush.bf16.msra.mxu0 %v4863
        %5139 = vmatpush.bf16.msra.mxu0 %v4859
        %5140 = vmatpush.bf16.msra.mxu0 %v4855
        %5141 = vmatpush.bf16.msra.mxu0 %v4851
        %5142 = vmatpush.bf16.msra.mxu0 %v4847
        %5143 = vmatpush.bf16.msra.mxu0 %v4843
        %5144 = vmatmul.bf16.gmra.mxu0 %v4285
        %v5145 = vpop.f32.mrf.mxu0
        %v5146 = vadd.f32 %v5132, %v5145
        %v5147 = vpop.f32.mrf.mxu0
        %v5148 = vadd.f32 %v5134, %v5147
        %5149 = vdwg.mxu0
        %5150 = vmatpush.bf16.msra.mxu0 %v4903
        %5151 = vmatpush.bf16.msra.mxu0 %v4899
        %5152 = vmatpush.bf16.msra.mxu0 %v4895
        %5153 = vmatpush.bf16.msra.mxu0 %v4891
        %5154 = vmatpush.bf16.msra.mxu0 %v4887
        %5155 = vmatpush.bf16.msra.mxu0 %v4883
        %5156 = vmatpush.bf16.msra.mxu0 %v4879
        %5157 = vmatpush.bf16.msra.mxu0 %v4875
        %5158 = vmatmul.bf16.gmra.mxu0 %v4286
        %v5159 = vpop.f32.mrf.mxu0
        %v5160 = vadd.f32 %v5146, %v5159
        %v5161 = vpop.f32.mrf.mxu0
        %v5162 = vadd.f32 %v5148, %v5161
        %5163 = vdwg.mxu0
        %5164 = vmatpush.bf16.msra.mxu0 %v4935
        %5165 = vmatpush.bf16.msra.mxu0 %v4931
        %5166 = vmatpush.bf16.msra.mxu0 %v4927
        %5167 = vmatpush.bf16.msra.mxu0 %v4923
        %5168 = vmatpush.bf16.msra.mxu0 %v4919
        %5169 = vmatpush.bf16.msra.mxu0 %v4915
        %5170 = vmatpush.bf16.msra.mxu0 %v4911
        %5171 = vmatpush.bf16.msra.mxu0 %v4907
        %5172 = vmatmul.bf16.gmra.mxu0 %v4287
        %v5173 = vpop.f32.mrf.mxu0
        %v5174 = vadd.f32 %v5160, %v5173
        %v5175 = vpop.f32.mrf.mxu0
        %v5176 = vadd.f32 %v5162, %v5175
        %5177 = vdwg.mxu0
        %5178 = vmatpush.bf16.msra.mxu0 %v4840
        %5179 = vmatpush.bf16.msra.mxu0 %v4836
        %5180 = vmatpush.bf16.msra.mxu0 %v4832
        %5181 = vmatpush.bf16.msra.mxu0 %v4828
        %5182 = vmatpush.bf16.msra.mxu0 %v4824
        %5183 = vmatpush.bf16.msra.mxu0 %v4820
        %5184 = vmatpush.bf16.msra.mxu0 %v4816
        %5185 = vmatpush.bf16.msra.mxu0 %v4812
        %5186 = vmatmul.bf16.gmra.mxu0 %v4284
        %v5187 = vpop.f32.mrf.mxu0
        %v5188 = vadd.f32 %v4420, %v5187
        %v5189 = vpop.f32.mrf.mxu0
        %v5190 = vadd.f32 %v4420, %v5189
        %5191 = vdwg.mxu0
        %5192 = vmatpush.bf16.msra.mxu0 %v4872
        %5193 = vmatpush.bf16.msra.mxu0 %v4868
        %5194 = vmatpush.bf16.msra.mxu0 %v4864
        %5195 = vmatpush.bf16.msra.mxu0 %v4860
        %5196 = vmatpush.bf16.msra.mxu0 %v4856
        %5197 = vmatpush.bf16.msra.mxu0 %v4852
        %5198 = vmatpush.bf16.msra.mxu0 %v4848
        %5199 = vmatpush.bf16.msra.mxu0 %v4844
        %5200 = vmatmul.bf16.gmra.mxu0 %v4285
        %v5201 = vpop.f32.mrf.mxu0
        %v5202 = vadd.f32 %v5188, %v5201
        %v5203 = vpop.f32.mrf.mxu0
        %v5204 = vadd.f32 %v5190, %v5203
        %5205 = vdwg.mxu0
        %5206 = vmatpush.bf16.msra.mxu0 %v4904
        %5207 = vmatpush.bf16.msra.mxu0 %v4900
        %5208 = vmatpush.bf16.msra.mxu0 %v4896
        %5209 = vmatpush.bf16.msra.mxu0 %v4892
        %5210 = vmatpush.bf16.msra.mxu0 %v4888
        %5211 = vmatpush.bf16.msra.mxu0 %v4884
        %5212 = vmatpush.bf16.msra.mxu0 %v4880
        %5213 = vmatpush.bf16.msra.mxu0 %v4876
        %5214 = vmatmul.bf16.gmra.mxu0 %v4286
        %v5215 = vpop.f32.mrf.mxu0
        %v5216 = vadd.f32 %v5202, %v5215
        %v5217 = vpop.f32.mrf.mxu0
        %v5218 = vadd.f32 %v5204, %v5217
        %5219 = vdwg.mxu0
        %5220 = vmatpush.bf16.msra.mxu0 %v4936
        %5221 = vmatpush.bf16.msra.mxu0 %v4932
        %5222 = vmatpush.bf16.msra.mxu0 %v4928
        %5223 = vmatpush.bf16.msra.mxu0 %v4924
        %5224 = vmatpush.bf16.msra.mxu0 %v4920
        %5225 = vmatpush.bf16.msra.mxu0 %v4916
        %5226 = vmatpush.bf16.msra.mxu0 %v4912
        %5227 = vmatpush.bf16.msra.mxu0 %v4908
        %5228 = vmatmul.bf16.gmra.mxu0 %v4287
        %v5229 = vpop.f32.mrf.mxu0
        %v5230 = vadd.f32 %v5216, %v5229
        %v5231 = vpop.f32.mrf.mxu0
        %v5232 = vadd.f32 %v5218, %v5231
        %5233 = vdwg.mxu0
        %5234 = vmatpush.bf16.msra.mxu0 %v4841
        %5235 = vmatpush.bf16.msra.mxu0 %v4837
        %5236 = vmatpush.bf16.msra.mxu0 %v4833
        %5237 = vmatpush.bf16.msra.mxu0 %v4829
        %5238 = vmatpush.bf16.msra.mxu0 %v4825
        %5239 = vmatpush.bf16.msra.mxu0 %v4821
        %5240 = vmatpush.bf16.msra.mxu0 %v4817
        %5241 = vmatpush.bf16.msra.mxu0 %v4813
        %5242 = vmatmul.bf16.gmra.mxu0 %v4284
        %v5243 = vpop.f32.mrf.mxu0
        %v5244 = vadd.f32 %v4421, %v5243
        %v5245 = vpop.f32.mrf.mxu0
        %v5246 = vadd.f32 %v4421, %v5245
        %5247 = vdwg.mxu0
        %5248 = vmatpush.bf16.msra.mxu0 %v4873
        %5249 = vmatpush.bf16.msra.mxu0 %v4869
        %5250 = vmatpush.bf16.msra.mxu0 %v4865
        %5251 = vmatpush.bf16.msra.mxu0 %v4861
        %5252 = vmatpush.bf16.msra.mxu0 %v4857
        %5253 = vmatpush.bf16.msra.mxu0 %v4853
        %5254 = vmatpush.bf16.msra.mxu0 %v4849
        %5255 = vmatpush.bf16.msra.mxu0 %v4845
        %5256 = vmatmul.bf16.gmra.mxu0 %v4285
        %v5257 = vpop.f32.mrf.mxu0
        %v5258 = vadd.f32 %v5244, %v5257
        %v5259 = vpop.f32.mrf.mxu0
        %v5260 = vadd.f32 %v5246, %v5259
        %5261 = vdwg.mxu0
        %5262 = vmatpush.bf16.msra.mxu0 %v4905
        %5263 = vmatpush.bf16.msra.mxu0 %v4901
        %5264 = vmatpush.bf16.msra.mxu0 %v4897
        %5265 = vmatpush.bf16.msra.mxu0 %v4893
        %5266 = vmatpush.bf16.msra.mxu0 %v4889
        %5267 = vmatpush.bf16.msra.mxu0 %v4885
        %5268 = vmatpush.bf16.msra.mxu0 %v4881
        %5269 = vmatpush.bf16.msra.mxu0 %v4877
        %5270 = vmatmul.bf16.gmra.mxu0 %v4286
        %v5271 = vpop.f32.mrf.mxu0
        %v5272 = vadd.f32 %v5258, %v5271
        %v5273 = vpop.f32.mrf.mxu0
        %v5274 = vadd.f32 %v5260, %v5273
        %5275 = vdwg.mxu0
        %5276 = vmatpush.bf16.msra.mxu0 %v4937
        %5277 = vmatpush.bf16.msra.mxu0 %v4933
        %5278 = vmatpush.bf16.msra.mxu0 %v4929
        %5279 = vmatpush.bf16.msra.mxu0 %v4925
        %5280 = vmatpush.bf16.msra.mxu0 %v4921
        %5281 = vmatpush.bf16.msra.mxu0 %v4917
        %5282 = vmatpush.bf16.msra.mxu0 %v4913
        %5283 = vmatpush.bf16.msra.mxu0 %v4909
        %5284 = vmatmul.bf16.gmra.mxu0 %v4287
        %v5285 = vpop.f32.mrf.mxu0
        %v5286 = vadd.f32 %v5272, %v5285
        %v5287 = vpop.f32.mrf.mxu0
        %v5288 = vadd.f32 %v5274, %v5287
        %5289 = vdwg.mxu0
        %v5290 = vpack.c.bf16 %v5120, %v5118
        %v5291 = vpack.c.bf16 %v5176, %v5174
        %v5292 = vpack.c.bf16 %v5232, %v5230
        %v5293 = vpack.c.bf16 %v5288, %v5286
        %v5294 = vld [vmem:[#allocation16] sm:$0xff]
        %v5295 = vld [vmem:[#allocation16 + $0x8] sm:$0xff]
        %v5296 = vld [vmem:[#allocation16 + $0x10] sm:$0xff]
        %v5297 = vld [vmem:[#allocation16 + $0x18] sm:$0xff]
        %v5298 = vld [vmem:[#allocation16 + $0x20] sm:$0xff]
        %v5299 = vld [vmem:[#allocation16 + $0x28] sm:$0xff]
        %v5300 = vld [vmem:[#allocation16 + $0x30] sm:$0xff]
        %v5301 = vld [vmem:[#allocation16 + $0x38] sm:$0xff]
        %v5302 = vld [vmem:[#allocation16 + $0x40] sm:$0xff]
        %v5303 = vld [vmem:[#allocation16 + $0x48] sm:$0xff]
        %v5304 = vld [vmem:[#allocation16 + $0x50] sm:$0xff]
        %v5305 = vld [vmem:[#allocation16 + $0x58] sm:$0xff]
        %v5306 = vld [vmem:[#allocation16 + $0x60] sm:$0xff]
        %v5307 = vld [vmem:[#allocation16 + $0x68] sm:$0xff]
        %v5308 = vld [vmem:[#allocation16 + $0x70] sm:$0xff]
        %v5309 = vld [vmem:[#allocation16 + $0x78] sm:$0xff]
        %v5310 = vld [vmem:[#allocation16 + $0x80] sm:$0xff]
        %v5311 = vld [vmem:[#allocation16 + $0x88] sm:$0xff]
        %v5312 = vld [vmem:[#allocation16 + $0x90] sm:$0xff]
        %v5313 = vld [vmem:[#allocation16 + $0x98] sm:$0xff]
        %v5314 = vld [vmem:[#allocation16 + $0xa0] sm:$0xff]
        %v5315 = vld [vmem:[#allocation16 + $0xa8] sm:$0xff]
        %v5316 = vld [vmem:[#allocation16 + $0xb0] sm:$0xff]
        %v5317 = vld [vmem:[#allocation16 + $0xb8] sm:$0xff]
        %v5318 = vld [vmem:[#allocation16 + $0xc0] sm:$0xff]
        %v5319 = vld [vmem:[#allocation16 + $0xc8] sm:$0xff]
        %v5320 = vld [vmem:[#allocation16 + $0xd0] sm:$0xff]
        %v5321 = vld [vmem:[#allocation16 + $0xd8] sm:$0xff]
        %v5322 = vld [vmem:[#allocation16 + $0xe0] sm:$0xff]
        %v5323 = vld [vmem:[#allocation16 + $0xe8] sm:$0xff]
        %v5324 = vld [vmem:[#allocation16 + $0xf0] sm:$0xff]
        %v5325 = vld [vmem:[#allocation16 + $0xf8] sm:$0xff]
        %v5326 = vld [vmem:[#allocation16 + $0x100] sm:$0xff]
        %v5327 = vld [vmem:[#allocation16 + $0x108] sm:$0xff]
        %v5328 = vld [vmem:[#allocation16 + $0x110] sm:$0xff]
        %v5329 = vld [vmem:[#allocation16 + $0x118] sm:$0xff]
        %v5330 = vld [vmem:[#allocation16 + $0x120] sm:$0xff]
        %v5331 = vld [vmem:[#allocation16 + $0x128] sm:$0xff]
        %v5332 = vld [vmem:[#allocation16 + $0x130] sm:$0xff]
        %v5333 = vld [vmem:[#allocation16 + $0x138] sm:$0xff]
        %v5334 = vld [vmem:[#allocation16 + $0x140] sm:$0xff]
        %v5335 = vld [vmem:[#allocation16 + $0x148] sm:$0xff]
        %v5336 = vld [vmem:[#allocation16 + $0x150] sm:$0xff]
        %v5337 = vld [vmem:[#allocation16 + $0x158] sm:$0xff]
        %v5338 = vld [vmem:[#allocation16 + $0x160] sm:$0xff]
        %v5339 = vld [vmem:[#allocation16 + $0x168] sm:$0xff]
        %v5340 = vld [vmem:[#allocation16 + $0x170] sm:$0xff]
        %v5341 = vld [vmem:[#allocation16 + $0x178] sm:$0xff]
        %v5342 = vld [vmem:[#allocation16 + $0x180] sm:$0xff]
        %v5343 = vld [vmem:[#allocation16 + $0x188] sm:$0xff]
        %v5344 = vld [vmem:[#allocation16 + $0x190] sm:$0xff]
        %v5345 = vld [vmem:[#allocation16 + $0x198] sm:$0xff]
        %v5346 = vld [vmem:[#allocation16 + $0x1a0] sm:$0xff]
        %v5347 = vld [vmem:[#allocation16 + $0x1a8] sm:$0xff]
        %v5348 = vld [vmem:[#allocation16 + $0x1b0] sm:$0xff]
        %v5349 = vld [vmem:[#allocation16 + $0x1b8] sm:$0xff]
        %v5350 = vld [vmem:[#allocation16 + $0x1c0] sm:$0xff]
        %v5351 = vld [vmem:[#allocation16 + $0x1c8] sm:$0xff]
        %v5352 = vld [vmem:[#allocation16 + $0x1d0] sm:$0xff]
        %v5353 = vld [vmem:[#allocation16 + $0x1d8] sm:$0xff]
        %v5354 = vld [vmem:[#allocation16 + $0x1e0] sm:$0xff]
        %v5355 = vld [vmem:[#allocation16 + $0x1e8] sm:$0xff]
        %v5356 = vld [vmem:[#allocation16 + $0x1f0] sm:$0xff]
        %v5357 = vld [vmem:[#allocation16 + $0x1f8] sm:$0xff]
        %v5358 = vld [vmem:[%s11] sm:$0x3]
        %v5360 = vperm.slane %v5358, 0
        %v5361 = vperm.slane %v5358, 1
        %v5428 = vunpack.c.l.b16 %v5294
        %v5429 = vunpack.c.h.b16 %v5294
        %v5430 = vunpack.c.l.b16 %v5295
        %v5431 = vunpack.c.h.b16 %v5295
        %v5432 = vunpack.c.l.b16 %v5296
        %v5433 = vunpack.c.h.b16 %v5296
        %v5434 = vunpack.c.l.b16 %v5297
        %v5435 = vunpack.c.h.b16 %v5297
        %v5436 = vunpack.c.l.b16 %v5298
        %v5437 = vunpack.c.h.b16 %v5298
        %v5438 = vunpack.c.l.b16 %v5299
        %v5439 = vunpack.c.h.b16 %v5299
        %v5440 = vunpack.c.l.b16 %v5300
        %v5441 = vunpack.c.h.b16 %v5300
        %v5442 = vunpack.c.l.b16 %v5301
        %v5443 = vunpack.c.h.b16 %v5301
        %v5444 = vunpack.c.l.b16 %v5302
        %v5445 = vunpack.c.h.b16 %v5302
        %v5446 = vunpack.c.l.b16 %v5303
        %v5447 = vunpack.c.h.b16 %v5303
        %v5448 = vunpack.c.l.b16 %v5304
        %v5449 = vunpack.c.h.b16 %v5304
        %v5450 = vunpack.c.l.b16 %v5305
        %v5451 = vunpack.c.h.b16 %v5305
        %v5452 = vunpack.c.l.b16 %v5306
        %v5453 = vunpack.c.h.b16 %v5306
        %v5454 = vunpack.c.l.b16 %v5307
        %v5455 = vunpack.c.h.b16 %v5307
        %v5456 = vunpack.c.l.b16 %v5308
        %v5457 = vunpack.c.h.b16 %v5308
        %v5458 = vunpack.c.l.b16 %v5309
        %v5459 = vunpack.c.h.b16 %v5309
        %v5460 = vunpack.c.l.b16 %v5310
        %v5461 = vunpack.c.h.b16 %v5310
        %v5462 = vunpack.c.l.b16 %v5311
        %v5463 = vunpack.c.h.b16 %v5311
        %v5464 = vunpack.c.l.b16 %v5312
        %v5465 = vunpack.c.h.b16 %v5312
        %v5466 = vunpack.c.l.b16 %v5313
        %v5467 = vunpack.c.h.b16 %v5313
        %v5468 = vunpack.c.l.b16 %v5314
        %v5469 = vunpack.c.h.b16 %v5314
        %v5470 = vunpack.c.l.b16 %v5315
        %v5471 = vunpack.c.h.b16 %v5315
        %v5472 = vunpack.c.l.b16 %v5316
        %v5473 = vunpack.c.h.b16 %v5316
        %v5474 = vunpack.c.l.b16 %v5317
        %v5475 = vunpack.c.h.b16 %v5317
        %v5476 = vunpack.c.l.b16 %v5318
        %v5477 = vunpack.c.h.b16 %v5318
        %v5478 = vunpack.c.l.b16 %v5319
        %v5479 = vunpack.c.h.b16 %v5319
        %v5480 = vunpack.c.l.b16 %v5320
        %v5481 = vunpack.c.h.b16 %v5320
        %v5482 = vunpack.c.l.b16 %v5321
        %v5483 = vunpack.c.h.b16 %v5321
        %v5484 = vunpack.c.l.b16 %v5322
        %v5485 = vunpack.c.h.b16 %v5322
        %v5486 = vunpack.c.l.b16 %v5323
        %v5487 = vunpack.c.h.b16 %v5323
        %v5488 = vunpack.c.l.b16 %v5324
        %v5489 = vunpack.c.h.b16 %v5324
        %v5490 = vunpack.c.l.b16 %v5325
        %v5491 = vunpack.c.h.b16 %v5325
        %v5492 = vunpack.c.l.b16 %v5326
        %v5493 = vunpack.c.h.b16 %v5326
        %v5494 = vunpack.c.l.b16 %v5327
        %v5495 = vunpack.c.h.b16 %v5327
        %v5496 = vunpack.c.l.b16 %v5328
        %v5497 = vunpack.c.h.b16 %v5328
        %v5498 = vunpack.c.l.b16 %v5329
        %v5499 = vunpack.c.h.b16 %v5329
        %v5500 = vunpack.c.l.b16 %v5330
        %v5501 = vunpack.c.h.b16 %v5330
        %v5502 = vunpack.c.l.b16 %v5331
        %v5503 = vunpack.c.h.b16 %v5331
        %v5504 = vunpack.c.l.b16 %v5332
        %v5505 = vunpack.c.h.b16 %v5332
        %v5506 = vunpack.c.l.b16 %v5333
        %v5507 = vunpack.c.h.b16 %v5333
        %v5508 = vunpack.c.l.b16 %v5334
        %v5509 = vunpack.c.h.b16 %v5334
        %v5510 = vunpack.c.l.b16 %v5335
        %v5511 = vunpack.c.h.b16 %v5335
        %v5512 = vunpack.c.l.b16 %v5336
        %v5513 = vunpack.c.h.b16 %v5336
        %v5514 = vunpack.c.l.b16 %v5337
        %v5515 = vunpack.c.h.b16 %v5337
        %v5516 = vunpack.c.l.b16 %v5338
        %v5517 = vunpack.c.h.b16 %v5338
        %v5518 = vunpack.c.l.b16 %v5339
        %v5519 = vunpack.c.h.b16 %v5339
        %v5520 = vunpack.c.l.b16 %v5340
        %v5521 = vunpack.c.h.b16 %v5340
        %v5522 = vunpack.c.l.b16 %v5341
        %v5523 = vunpack.c.h.b16 %v5341
        %v5524 = vunpack.c.l.b16 %v5342
        %v5525 = vunpack.c.h.b16 %v5342
        %v5526 = vunpack.c.l.b16 %v5343
        %v5527 = vunpack.c.h.b16 %v5343
        %v5528 = vunpack.c.l.b16 %v5344
        %v5529 = vunpack.c.h.b16 %v5344
        %v5530 = vunpack.c.l.b16 %v5345
        %v5531 = vunpack.c.h.b16 %v5345
        %v5532 = vunpack.c.l.b16 %v5346
        %v5533 = vunpack.c.h.b16 %v5346
        %v5534 = vunpack.c.l.b16 %v5347
        %v5535 = vunpack.c.h.b16 %v5347
        %v5536 = vunpack.c.l.b16 %v5348
        %v5537 = vunpack.c.h.b16 %v5348
        %v5538 = vunpack.c.l.b16 %v5349
        %v5539 = vunpack.c.h.b16 %v5349
        %v5540 = vunpack.c.l.b16 %v5350
        %v5541 = vunpack.c.h.b16 %v5350
        %v5542 = vunpack.c.l.b16 %v5351
        %v5543 = vunpack.c.h.b16 %v5351
        %v5544 = vunpack.c.l.b16 %v5352
        %v5545 = vunpack.c.h.b16 %v5352
        %v5546 = vunpack.c.l.b16 %v5353
        %v5547 = vunpack.c.h.b16 %v5353
        %v5548 = vunpack.c.l.b16 %v5354
        %v5549 = vunpack.c.h.b16 %v5354
        %v5550 = vunpack.c.l.b16 %v5355
        %v5551 = vunpack.c.h.b16 %v5355
        %v5552 = vunpack.c.l.b16 %v5356
        %v5553 = vunpack.c.h.b16 %v5356
        %v5554 = vunpack.c.l.b16 %v5357
        %v5555 = vunpack.c.h.b16 %v5357
        %v5556 = vpack.c.b16 %v5430, %v5428
        %v5557 = vpack.c.b16 %v5431, %v5429
        %v5558 = vpack.c.b16 %v5434, %v5432
        %v5559 = vpack.c.b16 %v5435, %v5433
        %v5560 = vpack.c.b16 %v5438, %v5436
        %v5561 = vpack.c.b16 %v5439, %v5437
        %v5562 = vpack.c.b16 %v5442, %v5440
        %v5563 = vpack.c.b16 %v5443, %v5441
        %v5564 = vpack.c.b16 %v5446, %v5444
        %v5565 = vpack.c.b16 %v5447, %v5445
        %v5566 = vpack.c.b16 %v5450, %v5448
        %v5567 = vpack.c.b16 %v5451, %v5449
        %v5568 = vpack.c.b16 %v5454, %v5452
        %v5569 = vpack.c.b16 %v5455, %v5453
        %v5570 = vpack.c.b16 %v5458, %v5456
        %v5571 = vpack.c.b16 %v5459, %v5457
        %v5572 = vpack.c.b16 %v5462, %v5460
        %v5573 = vpack.c.b16 %v5463, %v5461
        %v5574 = vpack.c.b16 %v5466, %v5464
        %v5575 = vpack.c.b16 %v5467, %v5465
        %v5576 = vpack.c.b16 %v5470, %v5468
        %v5577 = vpack.c.b16 %v5471, %v5469
        %v5578 = vpack.c.b16 %v5474, %v5472
        %v5579 = vpack.c.b16 %v5475, %v5473
        %v5580 = vpack.c.b16 %v5478, %v5476
        %v5581 = vpack.c.b16 %v5479, %v5477
        %v5582 = vpack.c.b16 %v5482, %v5480
        %v5583 = vpack.c.b16 %v5483, %v5481
        %v5584 = vpack.c.b16 %v5486, %v5484
        %v5585 = vpack.c.b16 %v5487, %v5485
        %v5586 = vpack.c.b16 %v5490, %v5488
        %v5587 = vpack.c.b16 %v5491, %v5489
        %v5588 = vpack.c.b16 %v5494, %v5492
        %v5589 = vpack.c.b16 %v5495, %v5493
        %v5590 = vpack.c.b16 %v5498, %v5496
        %v5591 = vpack.c.b16 %v5499, %v5497
        %v5592 = vpack.c.b16 %v5502, %v5500
        %v5593 = vpack.c.b16 %v5503, %v5501
        %v5594 = vpack.c.b16 %v5506, %v5504
        %v5595 = vpack.c.b16 %v5507, %v5505
        %v5596 = vpack.c.b16 %v5510, %v5508
        %v5597 = vpack.c.b16 %v5511, %v5509
        %v5598 = vpack.c.b16 %v5514, %v5512
        %v5599 = vpack.c.b16 %v5515, %v5513
        %v5600 = vpack.c.b16 %v5518, %v5516
        %v5601 = vpack.c.b16 %v5519, %v5517
        %v5602 = vpack.c.b16 %v5522, %v5520
        %v5603 = vpack.c.b16 %v5523, %v5521
        %v5604 = vpack.c.b16 %v5526, %v5524
        %v5605 = vpack.c.b16 %v5527, %v5525
        %v5606 = vpack.c.b16 %v5530, %v5528
        %v5607 = vpack.c.b16 %v5531, %v5529
        %v5608 = vpack.c.b16 %v5534, %v5532
        %v5609 = vpack.c.b16 %v5535, %v5533
        %v5610 = vpack.c.b16 %v5538, %v5536
        %v5611 = vpack.c.b16 %v5539, %v5537
        %v5612 = vpack.c.b16 %v5542, %v5540
        %v5613 = vpack.c.b16 %v5543, %v5541
        %v5614 = vpack.c.b16 %v5546, %v5544
        %v5615 = vpack.c.b16 %v5547, %v5545
        %v5616 = vpack.c.b16 %v5550, %v5548
        %v5617 = vpack.c.b16 %v5551, %v5549
        %v5618 = vpack.c.b16 %v5554, %v5552
        %v5619 = vpack.c.b16 %v5555, %v5553
        %5684 = vmatpush.bf16.msra.mxu0 %v5570
        %5685 = vmatpush.bf16.msra.mxu0 %v5568
        %5686 = vmatpush.bf16.msra.mxu0 %v5566
        %5687 = vmatpush.bf16.msra.mxu0 %v5564
        %5688 = vmatpush.bf16.msra.mxu0 %v5562
        %5689 = vmatpush.bf16.msra.mxu0 %v5560
        %5690 = vmatpush.bf16.msra.mxu0 %v5558
        %5691 = vmatpush.bf16.msra.mxu0 %v5556
        %5692 = vmatmul.bf16.gmra.mxu0 %v5290
        %v5693 = vpop.f32.mrf.mxu0
        %v5694 = vadd.f32 %v5360, %v5693
        %v5695 = vpop.f32.mrf.mxu0
        %v5696 = vadd.f32 %v5360, %v5695
        %5697 = vdwg.mxu0
        %5698 = vmatpush.bf16.msra.mxu0 %v5586
        %5699 = vmatpush.bf16.msra.mxu0 %v5584
        %5700 = vmatpush.bf16.msra.mxu0 %v5582
        %5701 = vmatpush.bf16.msra.mxu0 %v5580
        %5702 = vmatpush.bf16.msra.mxu0 %v5578
        %5703 = vmatpush.bf16.msra.mxu0 %v5576
        %5704 = vmatpush.bf16.msra.mxu0 %v5574
        %5705 = vmatpush.bf16.msra.mxu0 %v5572
        %5706 = vmatmul.bf16.gmra.mxu0 %v5291
        %v5707 = vpop.f32.mrf.mxu0
        %v5708 = vadd.f32 %v5694, %v5707
        %v5709 = vpop.f32.mrf.mxu0
        %v5710 = vadd.f32 %v5696, %v5709
        %5711 = vdwg.mxu0
        %5712 = vmatpush.bf16.msra.mxu0 %v5602
        %5713 = vmatpush.bf16.msra.mxu0 %v5600
        %5714 = vmatpush.bf16.msra.mxu0 %v5598
        %5715 = vmatpush.bf16.msra.mxu0 %v5596
        %5716 = vmatpush.bf16.msra.mxu0 %v5594
        %5717 = vmatpush.bf16.msra.mxu0 %v5592
        %5718 = vmatpush.bf16.msra.mxu0 %v5590
        %5719 = vmatpush.bf16.msra.mxu0 %v5588
        %5720 = vmatmul.bf16.gmra.mxu0 %v5292
        %v5721 = vpop.f32.mrf.mxu0
        %v5722 = vadd.f32 %v5708, %v5721
        %v5723 = vpop.f32.mrf.mxu0
        %v5724 = vadd.f32 %v5710, %v5723
        %5725 = vdwg.mxu0
        %5726 = vmatpush.bf16.msra.mxu0 %v5618
        %5727 = vmatpush.bf16.msra.mxu0 %v5616
        %5728 = vmatpush.bf16.msra.mxu0 %v5614
        %5729 = vmatpush.bf16.msra.mxu0 %v5612
        %5730 = vmatpush.bf16.msra.mxu0 %v5610
        %5731 = vmatpush.bf16.msra.mxu0 %v5608
        %5732 = vmatpush.bf16.msra.mxu0 %v5606
        %5733 = vmatpush.bf16.msra.mxu0 %v5604
        %5734 = vmatmul.bf16.gmra.mxu0 %v5293
        %v5735 = vpop.f32.mrf.mxu0
        %v5736 = vadd.f32 %v5722, %v5735
        %v5737 = vpop.f32.mrf.mxu0
        %v5738 = vadd.f32 %v5724, %v5737
        %5739 = vdwg.mxu0
        %5740 = vmatpush.bf16.msra.mxu0 %v5571
        %5741 = vmatpush.bf16.msra.mxu0 %v5569
        %5742 = vmatpush.bf16.msra.mxu0 %v5567
        %5743 = vmatpush.bf16.msra.mxu0 %v5565
        %5744 = vmatpush.bf16.msra.mxu0 %v5563
        %5745 = vmatpush.bf16.msra.mxu0 %v5561
        %5746 = vmatpush.bf16.msra.mxu0 %v5559
        %5747 = vmatpush.bf16.msra.mxu0 %v5557
        %5748 = vmatmul.bf16.gmra.mxu0 %v5290
        %v5749 = vpop.f32.mrf.mxu0
        %v5750 = vadd.f32 %v5361, %v5749
        %v5751 = vpop.f32.mrf.mxu0
        %v5752 = vadd.f32 %v5361, %v5751
        %5753 = vdwg.mxu0
        %5754 = vmatpush.bf16.msra.mxu0 %v5587
        %5755 = vmatpush.bf16.msra.mxu0 %v5585
        %5756 = vmatpush.bf16.msra.mxu0 %v5583
        %5757 = vmatpush.bf16.msra.mxu0 %v5581
        %5758 = vmatpush.bf16.msra.mxu0 %v5579
        %5759 = vmatpush.bf16.msra.mxu0 %v5577
        %5760 = vmatpush.bf16.msra.mxu0 %v5575
        %5761 = vmatpush.bf16.msra.mxu0 %v5573
        %5762 = vmatmul.bf16.gmra.mxu0 %v5291
        %v5763 = vpop.f32.mrf.mxu0
        %v5764 = vadd.f32 %v5750, %v5763
        %v5765 = vpop.f32.mrf.mxu0
        %v5766 = vadd.f32 %v5752, %v5765
        %5767 = vdwg.mxu0
        %5768 = vmatpush.bf16.msra.mxu0 %v5603
        %5769 = vmatpush.bf16.msra.mxu0 %v5601
        %5770 = vmatpush.bf16.msra.mxu0 %v5599
        %5771 = vmatpush.bf16.msra.mxu0 %v5597
        %5772 = vmatpush.bf16.msra.mxu0 %v5595
        %5773 = vmatpush.bf16.msra.mxu0 %v5593
        %5774 = vmatpush.bf16.msra.mxu0 %v5591
        %5775 = vmatpush.bf16.msra.mxu0 %v5589
        %5776 = vmatmul.bf16.gmra.mxu0 %v5292
        %v5777 = vpop.f32.mrf.mxu0
        %v5778 = vadd.f32 %v5764, %v5777
        %v5779 = vpop.f32.mrf.mxu0
        %v5780 = vadd.f32 %v5766, %v5779
        %5781 = vdwg.mxu0
        %5782 = vmatpush.bf16.msra.mxu0 %v5619
        %5783 = vmatpush.bf16.msra.mxu0 %v5617
        %5784 = vmatpush.bf16.msra.mxu0 %v5615
        %5785 = vmatpush.bf16.msra.mxu0 %v5613
        %5786 = vmatpush.bf16.msra.mxu0 %v5611
        %5787 = vmatpush.bf16.msra.mxu0 %v5609
        %5788 = vmatpush.bf16.msra.mxu0 %v5607
        %5789 = vmatpush.bf16.msra.mxu0 %v5605
        %5790 = vmatmul.bf16.gmra.mxu0 %v5293
        %v5791 = vpop.f32.mrf.mxu0
        %v5792 = vadd.f32 %v5778, %v5791
        %v5793 = vpop.f32.mrf.mxu0
        %v5794 = vadd.f32 %v5780, %v5793
        %5795 = vdwg.mxu0
        %v5796 = vtanh.pop %v5736
        %v5797 = vtanh.pop %v5792
        %v5798 = vtanh.pop %v5738
        %v5799 = vtanh.pop %v5794
        %v5800 = vpack.c.bf16 %v5798, %v5796
        %v5801 = vpack.c.bf16 %v5799, %v5797
        %v5802 = vld [vmem:[#allocation18] sm:$0xf]
        %v5803 = vld [vmem:[#allocation18 + $0x4] sm:$0xf]
        %v5804 = vld [vmem:[#allocation18 + $0x8] sm:$0xf]
        %v5805 = vld [vmem:[#allocation18 + $0xc] sm:$0xf]
        %v5806 = vld [vmem:[#allocation18 + $0x10] sm:$0xf]
        %v5807 = vld [vmem:[#allocation18 + $0x14] sm:$0xf]
        %v5808 = vld [vmem:[#allocation18 + $0x18] sm:$0xf]
        %v5809 = vld [vmem:[#allocation18 + $0x1c] sm:$0xf]
        %v5810 = vld [vmem:[#allocation18 + $0x20] sm:$0xf]
        %v5811 = vld [vmem:[#allocation18 + $0x24] sm:$0xf]
        %v5812 = vld [vmem:[#allocation18 + $0x28] sm:$0xf]
        %v5813 = vld [vmem:[#allocation18 + $0x2c] sm:$0xf]
        %v5814 = vld [vmem:[#allocation18 + $0x30] sm:$0xf]
        %v5815 = vld [vmem:[#allocation18 + $0x34] sm:$0xf]
        %v5816 = vld [vmem:[#allocation18 + $0x38] sm:$0xf]
        %v5817 = vld [vmem:[#allocation18 + $0x3c] sm:$0xf]
        %v5818 = vld [vmem:[#allocation18 + $0x40] sm:$0xf]
        %v5819 = vld [vmem:[#allocation18 + $0x44] sm:$0xf]
        %v5820 = vld [vmem:[#allocation18 + $0x48] sm:$0xf]
        %v5821 = vld [vmem:[#allocation18 + $0x4c] sm:$0xf]
        %v5822 = vld [vmem:[#allocation18 + $0x50] sm:$0xf]
        %v5823 = vld [vmem:[#allocation18 + $0x54] sm:$0xf]
        %v5824 = vld [vmem:[#allocation18 + $0x58] sm:$0xf]
        %v5825 = vld [vmem:[#allocation18 + $0x5c] sm:$0xf]
        %v5826 = vld [vmem:[#allocation18 + $0x60] sm:$0xf]
        %v5827 = vld [vmem:[#allocation18 + $0x64] sm:$0xf]
        %v5828 = vld [vmem:[#allocation18 + $0x68] sm:$0xf]
        %v5829 = vld [vmem:[#allocation18 + $0x6c] sm:$0xf]
        %v5830 = vld [vmem:[#allocation18 + $0x70] sm:$0xf]
        %v5831 = vld [vmem:[#allocation18 + $0x74] sm:$0xf]
        %v5832 = vld [vmem:[#allocation18 + $0x78] sm:$0xf]
        %v5833 = vld [vmem:[#allocation18 + $0x7c] sm:$0xf]
        %v5834 = vld [vmem:[#allocation19] sm:$0x1]
        %v5836 = vperm.slane %v5834, 0
        %v5870 = vunpack.c.l.b16 %v5802
        %v5871 = vunpack.c.l.b16 %v5803
        %v5872 = vunpack.c.l.b16 %v5804
        %v5873 = vunpack.c.l.b16 %v5805
        %v5874 = vunpack.c.l.b16 %v5806
        %v5875 = vunpack.c.l.b16 %v5807
        %v5876 = vunpack.c.l.b16 %v5808
        %v5877 = vunpack.c.l.b16 %v5809
        %v5878 = vunpack.c.l.b16 %v5810
        %v5879 = vunpack.c.l.b16 %v5811
        %v5880 = vunpack.c.l.b16 %v5812
        %v5881 = vunpack.c.l.b16 %v5813
        %v5882 = vunpack.c.l.b16 %v5814
        %v5883 = vunpack.c.l.b16 %v5815
        %v5884 = vunpack.c.l.b16 %v5816
        %v5885 = vunpack.c.l.b16 %v5817
        %v5886 = vunpack.c.l.b16 %v5818
        %v5887 = vunpack.c.l.b16 %v5819
        %v5888 = vunpack.c.l.b16 %v5820
        %v5889 = vunpack.c.l.b16 %v5821
        %v5890 = vunpack.c.l.b16 %v5822
        %v5891 = vunpack.c.l.b16 %v5823
        %v5892 = vunpack.c.l.b16 %v5824
        %v5893 = vunpack.c.l.b16 %v5825
        %v5894 = vunpack.c.l.b16 %v5826
        %v5895 = vunpack.c.l.b16 %v5827
        %v5896 = vunpack.c.l.b16 %v5828
        %v5897 = vunpack.c.l.b16 %v5829
        %v5898 = vunpack.c.l.b16 %v5830
        %v5899 = vunpack.c.l.b16 %v5831
        %v5900 = vunpack.c.l.b16 %v5832
        %v5901 = vunpack.c.l.b16 %v5833
        %v5902 = vpack.c.b16 %v5871, %v5870
        %v5903 = vpack.c.b16 %v5873, %v5872
        %v5904 = vpack.c.b16 %v5875, %v5874
        %v5905 = vpack.c.b16 %v5877, %v5876
        %v5906 = vpack.c.b16 %v5879, %v5878
        %v5907 = vpack.c.b16 %v5881, %v5880
        %v5908 = vpack.c.b16 %v5883, %v5882
        %v5909 = vpack.c.b16 %v5885, %v5884
        %v5910 = vpack.c.b16 %v5887, %v5886
        %v5911 = vpack.c.b16 %v5889, %v5888
        %v5912 = vpack.c.b16 %v5891, %v5890
        %v5913 = vpack.c.b16 %v5893, %v5892
        %v5914 = vpack.c.b16 %v5895, %v5894
        %v5915 = vpack.c.b16 %v5897, %v5896
        %v5916 = vpack.c.b16 %v5899, %v5898
        %v5917 = vpack.c.b16 %v5901, %v5900
        %5934 = vmatpush.bf16.msra.mxu0 %v5909
        %5935 = vmatpush.bf16.msra.mxu0 %v5908
        %5936 = vmatpush.bf16.msra.mxu0 %v5907
        %5937 = vmatpush.bf16.msra.mxu0 %v5906
        %5938 = vmatpush.bf16.msra.mxu0 %v5905
        %5939 = vmatpush.bf16.msra.mxu0 %v5904
        %5940 = vmatpush.bf16.msra.mxu0 %v5903
        %5941 = vmatpush.bf16.msra.mxu0 %v5902
        %5942 = vmatmul.bf16.gmra.mxu0 %v5800
        %v5943 = vpop.f32.mrf.mxu0
        %v5944 = vadd.f32 %v5836, %v5943
        %v5945 = vpop.f32.mrf.mxu0
        %v5946 = vadd.f32 %v5836, %v5945
        %5947 = vdwg.mxu0
        %5948 = vmatpush.bf16.msra.mxu0 %v5917
        %5949 = vmatpush.bf16.msra.mxu0 %v5916
        %5950 = vmatpush.bf16.msra.mxu0 %v5915
        %5951 = vmatpush.bf16.msra.mxu0 %v5914
        %5952 = vmatpush.bf16.msra.mxu0 %v5913
        %5953 = vmatpush.bf16.msra.mxu0 %v5912
        %5954 = vmatpush.bf16.msra.mxu0 %v5911
        %5955 = vmatpush.bf16.msra.mxu0 %v5910
        %5956 = vmatmul.bf16.gmra.mxu0 %v5801
        %v5957 = vpop.f32.mrf.mxu0
        %v5958 = vadd.f32 %v5944, %v5957
        %v5959 = vpop.f32.mrf.mxu0
        %v5960 = vadd.f32 %v5946, %v5959
        %5961 = vdwg.mxu0
        %vm5962 = vcmp.gt.f32.partialorder %v5958, 0.0
        %vm5963 = vcmp.gt.f32.partialorder %v5960, 0.0
        %v5964 = vmul.f32 %v5958, 0.01
        %v5965 = vmul.f32 %v5960, 0.01
        %v5966 = vsel %vm5962, %v5958, %v5964
        %v5967 = vsel %vm5963, %v5960, %v5965
        %5968 = vst [vmem:[%s688] sm:$0xff] %v5966
        %5969 = vst [vmem:[%s688 + $0x8] sm:$0xff] %v5967
        %p5970 = scmp.lt.s32.totalorder %s36, 3
        %s5971 = scalar_select %p5970, %s36, 3
        %s5972 = smul.addr %s5971, 2
        %s5973 = smul.addr %s5972, 8
        %s5974 = scalar_lea.vmem %s14, %s5973
        // Predicated region
        $region125: #{imgwithkg_forward.1} parent=75 // pred_check
          %p5975 = pneg %p358
        $region126: #{imgwithkg_forward.1} parent=75 // pred_check_branch
          %5977 = sbr.rel (%p5975) target = $region128
        $region127: #{imgwithkg_forward.1} parent=75 // pred_region
          _
        $region128: #{imgwithkg_forward.1} parent=75 // pred_fallthru
          _
      $region76: #{imgwithkg_forward.1} parent=5 // pred_fallthru
        _
      %p5978 = scmp.le.s32.totalorder 2, %s31
      // Predicated region
      $region129: #{imgwithkg_forward.1} parent=5 // pred_check
        %p5979 = pneg %p5978
      $region130: #{imgwithkg_forward.1} parent=5 // pred_check_branch
        %5981 = sbr.rel (%p5979) target = $region132
      $region131: #{imgwithkg_forward.1} parent=5 // pred_region
        %s5982 = ssub.s32 %s31, 2
        // Predicated region
        $region133: #{imgwithkg_forward.1} parent=131 // pred_check
          %p5983 = pneg %p364
        $region134: #{imgwithkg_forward.1} parent=131 // pred_check_branch
          %5985 = sbr.rel (%p5983) target = $region136
        $region135: #{imgwithkg_forward.1} parent=131 // pred_region
          %p5986 = scmp.lt.s32.totalorder %s37, 3
          %s5987 = scalar_select %p5986, %s37, 3
          %s5988 = smul.addr %s5987, 2
          %s5989 = smul.addr %s5988, 8
          %s5990 = scalar_lea.vmem %s14, %s5989
        $region136: #{imgwithkg_forward.1} parent=131 // pred_fallthru
          _
      $region132: #{imgwithkg_forward.1} parent=5 // pred_fallthru
        _
    $region6: #{imgwithkg_forward.1} parent=1 // loop_footer
      %s35 = sadd.s32 1, %s31
    $region7: #{imgwithkg_forward.1} parent=1 // loop_footer_branch
      %30 = sbr.rel target = $region3
    $region8: #{imgwithkg_forward.1} parent=1 // loop_exit
      _
    %5991 = vsyncpa [#allocation3], 1
    %s5992 = scalar_lea.sflag [#allocation3], 1
    %5993 = vsyncpa %s5992, 1
    %5994 = vsyncpa [#allocation5], 1
    %s5995 = scalar_lea.sflag [#allocation5], 1
    %5996 = vsyncpa %s5995, 1
    %5997 = vsyncpa [#allocation8], 1
    %5998 = vsyncpa [#allocation11], 1
    %5999 = vsyncpa [#allocation14], 1
    %6000 = vsyncpa [#allocation17], 1
    %6001 = vsyncpa [#allocation20], 1

</llo_original>
